<compile_context>
chip_gen: v7x
topology: tpu7x:2x2x1
jax: 0.10.0
libtpu: 0.0.40
codegen_flags: <defaults>
</compile_context>

<pallas_src>
import math
import functools

import jax
import jax.numpy as jnp
from jax.experimental import pallas as pl
from jax.experimental.pallas import tpu as pltpu


def _net_kernel(x_ref, w1_ref, b1_ref, w2_ref, b2_ref, w3_ref, b3_ref, o_ref):
    # hid1: (TB, 4) @ (4, 10) + (1, 10) -> tanh   (MXU matmul, VPU add, EUP tanh)
    z = jnp.dot(x_ref[...], w1_ref[...], preferred_element_type=jnp.float32)
    z = jnp.tanh(z + b1_ref[...])
    # hid2: (TB, 10) @ (10, 10) + (1, 10) -> tanh
    z = jnp.dot(z, w2_ref[...], preferred_element_type=jnp.float32)
    z = jnp.tanh(z + b2_ref[...])
    # oupt: (TB, 10) @ (10, 3) + (1, 3) -> sigmoid
    z = jnp.dot(z, w3_ref[...], preferred_element_type=jnp.float32) + b3_ref[...]
    o_ref[...] = (1.0 / (1.0 + jnp.exp(-z))).astype(o_ref.dtype)


def net_forward(x, w1, b1, w2, b2, w3, b3, *, tile_b=1024):
    """Forward pass of Net.

    x: (B, 4) f32; w1: (4, 10); b1: (10,); w2: (10, 10); b2: (10,);
    w3: (10, 3); b3: (3,). Returns (B, 3) f32 in [0, 1] (sigmoid outputs).
    """
    B, F = x.shape
    H1 = w1.shape[1]
    H2 = w2.shape[1]
    O = w3.shape[1]

    # Batch tile: multiple of 8 (sublane), capped so the per-step working set
    # stays tiny relative to even v7x's 64 MiB VMEM while amortizing the
    # ~0.35 us/step pipeline overhead.
    tb = min(tile_b, max(8, ((B + 7) // 8) * 8))
    # Pad batch up to a tile multiple; padded rows compute garbage and are sliced off.
    B_pad = ((B + tb - 1) // tb) * tb
    if B_pad != B:
        x = jnp.pad(x, ((0, B_pad - B), (0, 0)))

    b1r = b1.reshape(1, H1)
    b2r = b2.reshape(1, H2)
    b3r = b3.reshape(1, O)

    resident = lambda shape: pl.BlockSpec(shape, lambda i: (0, 0))

    out = pl.pallas_call(
        _net_kernel,
        out_shape=jax.ShapeDtypeStruct((B_pad, O), jnp.float32),
        grid_spec=pl.GridSpec(
            grid=(B_pad // tb,),
            in_specs=[
                pl.BlockSpec((tb, F), lambda i: (i, 0)),  # x: streamed batch tiles
                resident((F, H1)),   # w1 \
                resident((1, H1)),   # b1  \
                resident((H1, H2)),  # w2   > constant block index -> stay
                resident((1, H2)),   # b2  /  VMEM-resident across grid steps
                resident((H2, O)),   # w3 /
                resident((1, O)),    # b3/
            ],
            out_specs=pl.BlockSpec((tb, O), lambda i: (i, 0)),
        ),
        compiler_params=pltpu.CompilerParams(
            # Batch tiles are independent: megacore-shardable on v7x, neutral elsewhere.
            dimension_semantics=("parallel",),
        ),
    )(x, w1, b1r, w2, b2r, w3, b3r)

    return out[:B]


def init_params(key):
    """Deterministic synthetic init mirroring the PyTorch module.

    hid1/hid2 weights: Xavier-uniform; oupt weight and all biases use
    PyTorch-default-style U(-1/sqrt(fan_in), 1/sqrt(fan_in)).
    Weights are stored [in, out] (transposed vs PyTorch's [out, in]).
    """
    k1, k2, k3, k4, k5, k6 = jax.random.split(key, 6)

    def xavier(k, fan_in, fan_out):
        lim = math.sqrt(6.0 / (fan_in + fan_out))
        return jax.random.uniform(k, (fan_in, fan_out), jnp.float32, -lim, lim)

    def default_uniform(k, shape, fan_in):
        lim = 1.0 / math.sqrt(fan_in)
        return jax.random.uniform(k, shape, jnp.float32, -lim, lim)

    w1 = xavier(k1, 4, 10)
    b1 = default_uniform(k2, (10,), 4)
    w2 = xavier(k3, 10, 10)
    b2 = default_uniform(k4, (10,), 10)
    w3 = default_uniform(k5, (10, 3), 10)
    b3 = default_uniform(k6, (3,), 10)
    return w1, b1, w2, b2, w3, b3


if __name__ == "__main__":
    key = jax.random.PRNGKey(0)
    kx, kp = jax.random.split(key)

    # Batch deliberately not a multiple of the tile -> exercises padding + multi-step grid.
    B = 4000
    x = jax.random.normal(kx, (B, 4), jnp.float32)
    params = init_params(kp)

    fwd = jax.jit(functools.partial(net_forward, tile_b=1024))
    out = jax.block_until_ready(fwd(x, *params))

    # Plain-JAX reference of the same forward pass.
    w1, b1, w2, b2, w3, b3 = params
    z = jnp.tanh(x @ w1 + b1)
    z = jnp.tanh(z @ w2 + b2)
    ref = 1.0 / (1.0 + jnp.exp(-(z @ w3 + b3)))

    assert out.shape == (B, 3)
    max_err = float(jnp.max(jnp.abs(out - ref)))
    assert jnp.allclose(out, ref, atol=1e-3, rtol=1e-3), f"max abs err {max_err}"

    print("KERNEL_OK")
</pallas_src>

<mosaic_0001>
module attributes {stable_mosaic.version = 11 : i64} {
  func.func @_net_kernel(%arg0: i32, %arg1: memref<1024x4xf32, #tpu.memory_space<vmem>>, %arg2: memref<4x10xf32, #tpu.memory_space<vmem>>, %arg3: memref<1x10xf32, #tpu.memory_space<vmem>>, %arg4: memref<10x10xf32, #tpu.memory_space<vmem>>, %arg5: memref<1x10xf32, #tpu.memory_space<vmem>>, %arg6: memref<10x3xf32, #tpu.memory_space<vmem>>, %arg7: memref<1x3xf32, #tpu.memory_space<vmem>>, %arg8: memref<1024x3xf32, #tpu.memory_space<vmem>>) attributes {dimension_semantics = [#tpu.dimension_semantics<parallel>], iteration_bounds = array<i64: 4>, scalar_prefetch = 0 : i64, scratch_operands = 0 : i64, tpu.core_type = #tpu.core_type<tc>, window_params = [{transform_indices = @transform_0, window_bounds = array<i64: 1024, 4>}, {pipeline_mode = #tpu.pipeline_mode<synchronous>, transform_indices = @transform_1, window_bounds = array<i64: 4, 10>}, {pipeline_mode = #tpu.pipeline_mode<synchronous>, transform_indices = @transform_2, window_bounds = array<i64: 1, 10>}, {pipeline_mode = #tpu.pipeline_mode<synchronous>, transform_indices = @transform_3, window_bounds = array<i64: 10, 10>}, {pipeline_mode = #tpu.pipeline_mode<synchronous>, transform_indices = @transform_4, window_bounds = array<i64: 1, 10>}, {pipeline_mode = #tpu.pipeline_mode<synchronous>, transform_indices = @transform_5, window_bounds = array<i64: 10, 3>}, {pipeline_mode = #tpu.pipeline_mode<synchronous>, transform_indices = @transform_6, window_bounds = array<i64: 1, 3>}, {transform_indices = @transform_7, window_bounds = array<i64: 1024, 3>}]} {
    %c0 = arith.constant 0 : index
    %c0_0 = arith.constant 0 : index
    %0 = vector.load %arg1[%c0, %c0_0] : memref<1024x4xf32, #tpu.memory_space<vmem>>, vector<1024x4xf32>
    %c0_1 = arith.constant 0 : index
    %c0_2 = arith.constant 0 : index
    %1 = vector.load %arg2[%c0_1, %c0_2] : memref<4x10xf32, #tpu.memory_space<vmem>>, vector<4x10xf32>
    %cst = arith.constant dense<0.000000e+00> : vector<1024x10xf32>
    %2 = tpu.matmul %0, %1, %cst {dimension_numbers = #tpu.dot_dimension_numbers<[1], [0], [0], [1], [0, 0, 1, 1], [], []>} : vector<1024x4xf32>, vector<4x10xf32>, vector<1024x10xf32> -> vector<1024x10xf32>
    %c0_3 = arith.constant 0 : index
    %c0_4 = arith.constant 0 : index
    %3 = vector.load %arg3[%c0_3, %c0_4] : memref<1x10xf32, #tpu.memory_space<vmem>>, vector<1x10xf32>
    %4 = vector.broadcast %3 : vector<1x10xf32> to vector<1024x10xf32>
    %5 = arith.addf %2, %4 : vector<1024x10xf32>
    %6 = math.tanh %5 : vector<1024x10xf32>
    %c0_5 = arith.constant 0 : index
    %c0_6 = arith.constant 0 : index
    %7 = vector.load %arg4[%c0_5, %c0_6] : memref<10x10xf32, #tpu.memory_space<vmem>>, vector<10x10xf32>
    %cst_7 = arith.constant dense<0.000000e+00> : vector<1024x10xf32>
    %8 = tpu.matmul %6, %7, %cst_7 {dimension_numbers = #tpu.dot_dimension_numbers<[1], [0], [0], [1], [0, 0, 1, 1], [], []>} : vector<1024x10xf32>, vector<10x10xf32>, vector<1024x10xf32> -> vector<1024x10xf32>
    %c0_8 = arith.constant 0 : index
    %c0_9 = arith.constant 0 : index
    %9 = vector.load %arg5[%c0_8, %c0_9] : memref<1x10xf32, #tpu.memory_space<vmem>>, vector<1x10xf32>
    %10 = vector.broadcast %9 : vector<1x10xf32> to vector<1024x10xf32>
    %11 = arith.addf %8, %10 : vector<1024x10xf32>
    %12 = math.tanh %11 : vector<1024x10xf32>
    %c0_10 = arith.constant 0 : index
    %c0_11 = arith.constant 0 : index
    %13 = vector.load %arg6[%c0_10, %c0_11] : memref<10x3xf32, #tpu.memory_space<vmem>>, vector<10x3xf32>
    %cst_12 = arith.constant dense<0.000000e+00> : vector<1024x3xf32>
    %14 = tpu.matmul %12, %13, %cst_12 {dimension_numbers = #tpu.dot_dimension_numbers<[1], [0], [0], [1], [0, 0, 1, 1], [], []>} : vector<1024x10xf32>, vector<10x3xf32>, vector<1024x3xf32> -> vector<1024x3xf32>
    %c0_13 = arith.constant 0 : index
    %c0_14 = arith.constant 0 : index
    %15 = vector.load %arg7[%c0_13, %c0_14] : memref<1x3xf32, #tpu.memory_space<vmem>>, vector<1x3xf32>
    %16 = vector.broadcast %15 : vector<1x3xf32> to vector<1024x3xf32>
    %17 = arith.addf %14, %16 : vector<1024x3xf32>
    %cst_15 = arith.constant 0.000000e+00 : f32
    %18 = vector.broadcast %cst_15 : f32 to vector<1024x3xf32>
    %19 = arith.subf %18, %17 : vector<1024x3xf32>
    %20 = math.exp %19 : vector<1024x3xf32>
    %cst_16 = arith.constant 1.000000e+00 : f32
    %21 = vector.broadcast %cst_16 : f32 to vector<1024x3xf32>
    %22 = arith.addf %21, %20 : vector<1024x3xf32>
    %cst_17 = arith.constant 1.000000e+00 : f32
    %23 = vector.broadcast %cst_17 : f32 to vector<1024x3xf32>
    %24 = arith.divf %23, %22 : vector<1024x3xf32>
    %c0_18 = arith.constant 0 : index
    %c0_19 = arith.constant 0 : index
    %25 = vector.load %arg8[%c0_18, %c0_19] : memref<1024x3xf32, #tpu.memory_space<vmem>>, vector<1024x3xf32>
    tpu.vector_store %arg8[%c0_18, %c0_19], %24 {strides = array<i32>} : memref<1024x3xf32, #tpu.memory_space<vmem>>, vector<1024x3xf32>,
    return
  }
  func.func @transform_0(%arg0: i32) -> (i32, i32) {
    %c0_i32 = arith.constant 0 : i32
    %c0_i32_0 = arith.constant 0 : i32
    return %arg0, %c0_i32 : i32, i32
  }
  func.func @transform_1(%arg0: i32) -> (i32, i32) {
    %c0_i32 = arith.constant 0 : i32
    %c0_i32_0 = arith.constant 0 : i32
    %c0_i32_1 = arith.constant 0 : i32
    return %c0_i32, %c0_i32_0 : i32, i32
  }
  func.func @transform_2(%arg0: i32) -> (i32, i32) {
    %c0_i32 = arith.constant 0 : i32
    %c0_i32_0 = arith.constant 0 : i32
    %c0_i32_1 = arith.constant 0 : i32
    return %c0_i32, %c0_i32_0 : i32, i32
  }
  func.func @transform_3(%arg0: i32) -> (i32, i32) {
    %c0_i32 = arith.constant 0 : i32
    %c0_i32_0 = arith.constant 0 : i32
    %c0_i32_1 = arith.constant 0 : i32
    return %c0_i32, %c0_i32_0 : i32, i32
  }
  func.func @transform_4(%arg0: i32) -> (i32, i32) {
    %c0_i32 = arith.constant 0 : i32
    %c0_i32_0 = arith.constant 0 : i32
    %c0_i32_1 = arith.constant 0 : i32
    return %c0_i32, %c0_i32_0 : i32, i32
  }
  func.func @transform_5(%arg0: i32) -> (i32, i32) {
    %c0_i32 = arith.constant 0 : i32
    %c0_i32_0 = arith.constant 0 : i32
    %c0_i32_1 = arith.constant 0 : i32
    return %c0_i32, %c0_i32_0 : i32, i32
  }
  func.func @transform_6(%arg0: i32) -> (i32, i32) {
    %c0_i32 = arith.constant 0 : i32
    %c0_i32_0 = arith.constant 0 : i32
    %c0_i32_1 = arith.constant 0 : i32
    return %c0_i32, %c0_i32_0 : i32, i32
  }
  func.func @transform_7(%arg0: i32) -> (i32, i32) {
    %c0_i32 = arith.constant 0 : i32
    %c0_i32_0 = arith.constant 0 : i32
    return %arg0, %c0_i32 : i32, i32
  }
}

</mosaic_0001>

<llo_original>
// kernel: net_forward.1
$region0: #{net_forward.1}
  #allocation0 [shape = 'u32[]', space=smem, size = 0x4, offset = 0x4, fixed_abs, tag = 'smem constant byte address 0x4 - core index']
  #allocation1 [shape = 'u32[144,128]{1,0:T(1,128)}', space=vmem, size = 0x12000, scoped, tag = 'internal scratch']
  %s0 = inlined_call_operand.vmem [shape: f32[4096,4], index: 0, kind: input, shape index: {}]
  %s1 = inlined_call_operand.vmem [shape: f32[4,10], index: 1, kind: input, shape index: {}]
  %s2 = inlined_call_operand.vmem [shape: f32[1,10], index: 2, kind: input, shape index: {}]
  %s3 = inlined_call_operand.vmem [shape: f32[10,10], index: 3, kind: input, shape index: {}]
  %s4 = inlined_call_operand.vmem [shape: f32[1,10], index: 4, kind: input, shape index: {}]
  %s5 = inlined_call_operand.vmem [shape: f32[10,3], index: 5, kind: input, shape index: {}]
  %s6 = inlined_call_operand.vmem [shape: f32[1,3], index: 6, kind: input, shape index: {}]
  %s7 = inlined_call_operand.vmem [shape: f32[4096,3], index: 7, kind: output, shape index: {}]
  %s8 = sld [smem:[#allocation0]]
  $region61: #{net_forward.1} parent=0
    _
  %s10 = ssub.s32 1, %s8
  %s11 = scalar_select 0, %s10, %s8
  loop: start=0, step=1, limit=6
  $region2: #{net_forward.1} parent=0 // loop_pre_header
    _
  $region3: #{net_forward.1} parent=0 // loop_header
    %s13 = sphi 0, %s17
    %p14 = scmp.ge.s32.totalorder %s13, 6
    %s23 = sphi 0, %s25
    %s26 = sphi 0, %s23
    %s27 = sphi 0, %s26
    %s43 = sphi 0, %s27
    %s47 = sphi 0, %s47
    %s49 = sphi 0, %s47
    %s50 = sphi 0, %s49
    %s64 = sphi 0, %s50
    %s68 = sphi 0, %s68
    %s70 = sphi 0, %s68
    %s71 = sphi 0, %s70
    %s85 = sphi 0, %s71
    %s89 = sphi 0, %s89
    %s91 = sphi 0, %s89
    %s92 = sphi 0, %s91
    %s106 = sphi 0, %s92
    %s110 = sphi 0, %s110
    %s112 = sphi 0, %s110
    %s113 = sphi 0, %s112
    %s127 = sphi 0, %s113
    %s131 = sphi 0, %s131
    %s133 = sphi 0, %s131
    %s134 = sphi 0, %s133
    %s148 = sphi 0, %s134
    %s152 = sphi 0, %s152
    %s154 = sphi 0, %s152
    %s155 = sphi 0, %s154
    %s169 = sphi 0, %s155
    %s175 = sphi 0, %s177
    %s178 = sphi 0, %s175
    %s179 = sphi 0, %s178
    %s195 = sphi 0, %s179
  $region4: #{net_forward.1} parent=0 // loop_header_branch
    %16 = sbr.rel (%p14) target = $region8
  $region5: #{net_forward.1} parent=0 // loop_body
    %s18 = ssub.s32 %s13, 1
    %s19 = ssub.s32 %s13, 2
    %s20 = sadd.s32 %s13, 1
    %s21 = ssub.s32 %s13, %s20
    %p22 = scmp.eq.s32.totalorder %s21, 0
    %s24 = sadd.s32 %s23, 1
    %s25 = scalar_select %p22, %s23, %s24
    %p28 = pneg %p22
    %p29 = scmp.eq.s32.totalorder %s13, 3
    %p30 = por %p28, %p29
    %p31 = scmp.ne.s32.totalorder %s23, %s26
    %p32 = scmp.eq.s32.totalorder %s13, 0
    %p33 = por %p31, %p32
    %p34 = scmp.ne.s32.totalorder %s23, %s26
    %p35 = scmp.eq.s32.totalorder %s18, 3
    %p36 = por %p34, %p35
    %p37 = scmp.ne.s32.totalorder %s26, %s27
    %p38 = scmp.eq.s32.totalorder %s18, 0
    %p39 = por %p37, %p38
    %p40 = scmp.ne.s32.totalorder %s26, %s27
    %p41 = scmp.eq.s32.totalorder %s19, 3
    %p42 = por %p40, %p41
    %p44 = scmp.ne.s32.totalorder %s27, %s43
    %p45 = scmp.eq.s32.totalorder %s19, 0
    %p46 = por %p44, %p45
    %s48 = sadd.s32 %s47, 1
    %p51 = scmp.eq.s32.totalorder %s13, 3
    %p52 = scmp.ne.s32.totalorder %s47, %s49
    %p53 = scmp.eq.s32.totalorder %s13, 0
    %p54 = por %p52, %p53
    %p55 = scmp.ne.s32.totalorder %s47, %s49
    %p56 = scmp.eq.s32.totalorder %s18, 3
    %p57 = por %p55, %p56
    %p58 = scmp.ne.s32.totalorder %s49, %s50
    %p59 = scmp.eq.s32.totalorder %s18, 0
    %p60 = por %p58, %p59
    %p61 = scmp.ne.s32.totalorder %s49, %s50
    %p62 = scmp.eq.s32.totalorder %s19, 3
    %p63 = por %p61, %p62
    %p65 = scmp.ne.s32.totalorder %s50, %s64
    %p66 = scmp.eq.s32.totalorder %s19, 0
    %p67 = por %p65, %p66
    %s69 = sadd.s32 %s68, 1
    %p72 = scmp.eq.s32.totalorder %s13, 3
    %p73 = scmp.ne.s32.totalorder %s68, %s70
    %p74 = scmp.eq.s32.totalorder %s13, 0
    %p75 = por %p73, %p74
    %p76 = scmp.ne.s32.totalorder %s68, %s70
    %p77 = scmp.eq.s32.totalorder %s18, 3
    %p78 = por %p76, %p77
    %p79 = scmp.ne.s32.totalorder %s70, %s71
    %p80 = scmp.eq.s32.totalorder %s18, 0
    %p81 = por %p79, %p80
    %p82 = scmp.ne.s32.totalorder %s70, %s71
    %p83 = scmp.eq.s32.totalorder %s19, 3
    %p84 = por %p82, %p83
    %p86 = scmp.ne.s32.totalorder %s71, %s85
    %p87 = scmp.eq.s32.totalorder %s19, 0
    %p88 = por %p86, %p87
    %s90 = sadd.s32 %s89, 1
    %p93 = scmp.eq.s32.totalorder %s13, 3
    %p94 = scmp.ne.s32.totalorder %s89, %s91
    %p95 = scmp.eq.s32.totalorder %s13, 0
    %p96 = por %p94, %p95
    %p97 = scmp.ne.s32.totalorder %s89, %s91
    %p98 = scmp.eq.s32.totalorder %s18, 3
    %p99 = por %p97, %p98
    %p100 = scmp.ne.s32.totalorder %s91, %s92
    %p101 = scmp.eq.s32.totalorder %s18, 0
    %p102 = por %p100, %p101
    %p103 = scmp.ne.s32.totalorder %s91, %s92
    %p104 = scmp.eq.s32.totalorder %s19, 3
    %p105 = por %p103, %p104
    %p107 = scmp.ne.s32.totalorder %s92, %s106
    %p108 = scmp.eq.s32.totalorder %s19, 0
    %p109 = por %p107, %p108
    %s111 = sadd.s32 %s110, 1
    %p114 = scmp.eq.s32.totalorder %s13, 3
    %p115 = scmp.ne.s32.totalorder %s110, %s112
    %p116 = scmp.eq.s32.totalorder %s13, 0
    %p117 = por %p115, %p116
    %p118 = scmp.ne.s32.totalorder %s110, %s112
    %p119 = scmp.eq.s32.totalorder %s18, 3
    %p120 = por %p118, %p119
    %p121 = scmp.ne.s32.totalorder %s112, %s113
    %p122 = scmp.eq.s32.totalorder %s18, 0
    %p123 = por %p121, %p122
    %p124 = scmp.ne.s32.totalorder %s112, %s113
    %p125 = scmp.eq.s32.totalorder %s19, 3
    %p126 = por %p124, %p125
    %p128 = scmp.ne.s32.totalorder %s113, %s127
    %p129 = scmp.eq.s32.totalorder %s19, 0
    %p130 = por %p128, %p129
    %s132 = sadd.s32 %s131, 1
    %p135 = scmp.eq.s32.totalorder %s13, 3
    %p136 = scmp.ne.s32.totalorder %s131, %s133
    %p137 = scmp.eq.s32.totalorder %s13, 0
    %p138 = por %p136, %p137
    %p139 = scmp.ne.s32.totalorder %s131, %s133
    %p140 = scmp.eq.s32.totalorder %s18, 3
    %p141 = por %p139, %p140
    %p142 = scmp.ne.s32.totalorder %s133, %s134
    %p143 = scmp.eq.s32.totalorder %s18, 0
    %p144 = por %p142, %p143
    %p145 = scmp.ne.s32.totalorder %s133, %s134
    %p146 = scmp.eq.s32.totalorder %s19, 3
    %p147 = por %p145, %p146
    %p149 = scmp.ne.s32.totalorder %s134, %s148
    %p150 = scmp.eq.s32.totalorder %s19, 0
    %p151 = por %p149, %p150
    %s153 = sadd.s32 %s152, 1
    %p156 = scmp.eq.s32.totalorder %s13, 3
    %p157 = scmp.ne.s32.totalorder %s152, %s154
    %p158 = scmp.eq.s32.totalorder %s13, 0
    %p159 = por %p157, %p158
    %p160 = scmp.ne.s32.totalorder %s152, %s154
    %p161 = scmp.eq.s32.totalorder %s18, 3
    %p162 = por %p160, %p161
    %p163 = scmp.ne.s32.totalorder %s154, %s155
    %p164 = scmp.eq.s32.totalorder %s18, 0
    %p165 = por %p163, %p164
    %p166 = scmp.ne.s32.totalorder %s154, %s155
    %p167 = scmp.eq.s32.totalorder %s19, 3
    %p168 = por %p166, %p167
    %p170 = scmp.ne.s32.totalorder %s155, %s169
    %p171 = scmp.eq.s32.totalorder %s19, 0
    %p172 = por %p170, %p171
    %s173 = ssub.s32 %s13, %s20
    %p174 = scmp.eq.s32.totalorder %s173, 0
    %s176 = sadd.s32 %s175, 1
    %s177 = scalar_select %p174, %s175, %s176
    %p180 = pneg %p174
    %p181 = scmp.eq.s32.totalorder %s13, 3
    %p182 = por %p180, %p181
    %p183 = scmp.ne.s32.totalorder %s175, %s178
    %p184 = scmp.eq.s32.totalorder %s13, 0
    %p185 = por %p183, %p184
    %p186 = scmp.ne.s32.totalorder %s175, %s178
    %p187 = scmp.eq.s32.totalorder %s18, 3
    %p188 = por %p186, %p187
    %p189 = scmp.ne.s32.totalorder %s178, %s179
    %p190 = scmp.eq.s32.totalorder %s18, 0
    %p191 = por %p189, %p190
    %p192 = scmp.ne.s32.totalorder %s178, %s179
    %p193 = scmp.eq.s32.totalorder %s19, 3
    %p194 = por %p192, %p193
    %p196 = scmp.ne.s32.totalorder %s179, %s195
    %p197 = scmp.eq.s32.totalorder %s19, 0
    %p198 = por %p196, %p197
    %p199 = scmp.le.s32.totalorder 1, %s13
    %p200 = scmp.lt.s32.totalorder %s13, 5
    %p201 = pnand %p199, %p200
    %p202 = pneg %p201
    // Predicated region
    $region9: #{net_forward.1} parent=5 // pred_check
      _
    $region10: #{net_forward.1} parent=5 // pred_check_branch
      %204 = sbr.rel (%p201) target = $region12
    $region11: #{net_forward.1} parent=5 // pred_region
      %s205 = ssub.s32 %s13, 1
      // Predicated region
      $region13: #{net_forward.1} parent=11 // pred_check
        %p206 = pneg %p60
      $region14: #{net_forward.1} parent=11 // pred_check_branch
        %208 = sbr.rel (%p206) target = $region16
      $region15: #{net_forward.1} parent=11 // pred_region
        _
      $region16: #{net_forward.1} parent=11 // pred_fallthru
        _
      // Predicated region
      $region17: #{net_forward.1} parent=11 // pred_check
        %p209 = pneg %p81
      $region18: #{net_forward.1} parent=11 // pred_check_branch
        %211 = sbr.rel (%p209) target = $region20
      $region19: #{net_forward.1} parent=11 // pred_region
        _
      $region20: #{net_forward.1} parent=11 // pred_fallthru
        _
      // Predicated region
      $region21: #{net_forward.1} parent=11 // pred_check
        %p212 = pneg %p102
      $region22: #{net_forward.1} parent=11 // pred_check_branch
        %214 = sbr.rel (%p212) target = $region24
      $region23: #{net_forward.1} parent=11 // pred_region
        _
      $region24: #{net_forward.1} parent=11 // pred_fallthru
        _
      // Predicated region
      $region25: #{net_forward.1} parent=11 // pred_check
        %p215 = pneg %p123
      $region26: #{net_forward.1} parent=11 // pred_check_branch
        %217 = sbr.rel (%p215) target = $region28
      $region27: #{net_forward.1} parent=11 // pred_region
        _
      $region28: #{net_forward.1} parent=11 // pred_fallthru
        _
      // Predicated region
      $region29: #{net_forward.1} parent=11 // pred_check
        %p218 = pneg %p144
      $region30: #{net_forward.1} parent=11 // pred_check_branch
        %220 = sbr.rel (%p218) target = $region32
      $region31: #{net_forward.1} parent=11 // pred_region
        _
      $region32: #{net_forward.1} parent=11 // pred_fallthru
        _
      // Predicated region
      $region33: #{net_forward.1} parent=11 // pred_check
        %p221 = pneg %p165
      $region34: #{net_forward.1} parent=11 // pred_check_branch
        %223 = sbr.rel (%p221) target = $region36
      $region35: #{net_forward.1} parent=11 // pred_region
        _
      $region36: #{net_forward.1} parent=11 // pred_fallthru
        _
    $region12: #{net_forward.1} parent=5 // pred_fallthru
      _
    %p224 = scmp.lt.s32.totalorder %s13, 4
    // Predicated region
    $region37: #{net_forward.1} parent=5 // pred_check
      %p225 = pneg %p224
    $region38: #{net_forward.1} parent=5 // pred_check_branch
      %227 = sbr.rel (%p225) target = $region40
    $region39: #{net_forward.1} parent=5 // pred_region
      // Predicated region
      $region41: #{net_forward.1} parent=39 // pred_check
        %p228 = pneg %p33
      $region42: #{net_forward.1} parent=39 // pred_check_branch
        %230 = sbr.rel (%p228) target = $region44
      $region43: #{net_forward.1} parent=39 // pred_region
        %s231 = smul.u32 128, %s13
        %p232 = scmp.lt.s32.totalorder %s231, 511
        %s233 = scalar_select %p232, %s231, 511
        %s234 = smul.addr %s233, 8
        %s235 = scalar_lea.vmem %s0, %s234
        %s236 = smul.u32 128, %s13
      $region44: #{net_forward.1} parent=39 // pred_fallthru
        _
    $region40: #{net_forward.1} parent=5 // pred_fallthru
      _
    %p237 = scmp.le.s32.totalorder 1, %s13
    %p238 = scmp.lt.s32.totalorder %s13, 5
    %p239 = pnand %p237, %p238
    %p240 = pneg %p239
    // Predicated region
    $region45: #{net_forward.1} parent=5 // pred_check
      _
    $region46: #{net_forward.1} parent=5 // pred_check_branch
      %242 = sbr.rel (%p239) target = $region48
    $region47: #{net_forward.1} parent=5 // pred_region
      %s243 = ssub.s32 %s13, 1
      %s244 = smul.u32 128, %s18
      %p245 = scmp.lt.s32.totalorder %s244, 511
      %s246 = scalar_select %p245, %s244, 511
      %s247 = smul.addr %s246, 8
      %s248 = scalar_lea.vmem %s0, %s247
      %p249 = pneg %p39
      %p250 = pneg %p36
      %p251 = pneg %p60
      %p252 = pneg %p57
      %p253 = pneg %p81
      %p254 = pneg %p78
      %p255 = pneg %p102
      %p256 = pneg %p99
      %p257 = pneg %p123
      %p258 = pneg %p120
      %p259 = pneg %p144
      %p260 = pneg %p141
      %p261 = pneg %p165
      %p262 = pneg %p162
      %p263 = pneg %p191
      %p264 = pneg %p188
      %s265 = smul.u32 128, %s18
      %p266 = scmp.lt.s32.totalorder %s265, 511
      %s267 = scalar_select %p266, %s265, 511
      %s268 = smul.addr %s267, 8
      %s269 = scalar_lea.vmem %s7, %s268
      %s270 = smul.u32 128, %s18
      %p271 = scmp.lt.s32.totalorder %s270, 511
      %s272 = scalar_select %p271, %s270, 511
      %s273 = smul.addr %s272, 8
      %s274 = scalar_lea.vmem %s0, %s273
      %s275 = smul.u32 128, %s18
      %s276 = smul.u32 128, %s18
      %p277 = scmp.lt.s32.totalorder %s276, 511
      %s278 = scalar_select %p277, %s276, 511
      %s279 = smul.addr %s278, 8
      %s280 = scalar_lea.vmem %s7, %s279
      %s281 = smul.u32 128, %s18
      %v282 = vld [vmem:[%s274] sm:$0xff]
      %v283 = vld [vmem:[%s274 + $0x8] sm:$0xff]
      %v284 = vld [vmem:[%s274 + $0x10] sm:$0xff]
      %v285 = vld [vmem:[%s274 + $0x18] sm:$0xff]
      %v286 = vld [vmem:[%s274 + $0x20] sm:$0xff]
      %v287 = vld [vmem:[%s274 + $0x28] sm:$0xff]
      %v288 = vld [vmem:[%s274 + $0x30] sm:$0xff]
      %v289 = vld [vmem:[%s274 + $0x38] sm:$0xff]
      %v290 = vld [vmem:[%s274 + $0x40] sm:$0xff]
      %v291 = vld [vmem:[%s274 + $0x48] sm:$0xff]
      %v292 = vld [vmem:[%s274 + $0x50] sm:$0xff]
      %v293 = vld [vmem:[%s274 + $0x58] sm:$0xff]
      %v294 = vld [vmem:[%s274 + $0x60] sm:$0xff]
      %v295 = vld [vmem:[%s274 + $0x68] sm:$0xff]
      %v296 = vld [vmem:[%s274 + $0x70] sm:$0xff]
      %v297 = vld [vmem:[%s274 + $0x78] sm:$0xff]
      %v298 = vld [vmem:[%s274 + $0x80] sm:$0xff]
      %v299 = vld [vmem:[%s274 + $0x88] sm:$0xff]
      %v300 = vld [vmem:[%s274 + $0x90] sm:$0xff]
      %v301 = vld [vmem:[%s274 + $0x98] sm:$0xff]
      %v302 = vld [vmem:[%s274 + $0xa0] sm:$0xff]
      %v303 = vld [vmem:[%s274 + $0xa8] sm:$0xff]
      %v304 = vld [vmem:[%s274 + $0xb0] sm:$0xff]
      %v305 = vld [vmem:[%s274 + $0xb8] sm:$0xff]
      %v306 = vld [vmem:[%s274 + $0xc0] sm:$0xff]
      %v307 = vld [vmem:[%s274 + $0xc8] sm:$0xff]
      %v308 = vld [vmem:[%s274 + $0xd0] sm:$0xff]
      %v309 = vld [vmem:[%s274 + $0xd8] sm:$0xff]
      %v310 = vld [vmem:[%s274 + $0xe0] sm:$0xff]
      %v311 = vld [vmem:[%s274 + $0xe8] sm:$0xff]
      %v312 = vld [vmem:[%s274 + $0xf0] sm:$0xff]
      %v313 = vld [vmem:[%s274 + $0xf8] sm:$0xff]
      %v314 = vld [vmem:[%s274 + $0x100] sm:$0xff]
      %v315 = vld [vmem:[%s274 + $0x108] sm:$0xff]
      %v316 = vld [vmem:[%s274 + $0x110] sm:$0xff]
      %v317 = vld [vmem:[%s274 + $0x118] sm:$0xff]
      %v318 = vld [vmem:[%s274 + $0x120] sm:$0xff]
      %v319 = vld [vmem:[%s274 + $0x128] sm:$0xff]
      %v320 = vld [vmem:[%s274 + $0x130] sm:$0xff]
      %v321 = vld [vmem:[%s274 + $0x138] sm:$0xff]
      %v322 = vld [vmem:[%s274 + $0x140] sm:$0xff]
      %v323 = vld [vmem:[%s274 + $0x148] sm:$0xff]
      %v324 = vld [vmem:[%s274 + $0x150] sm:$0xff]
      %v325 = vld [vmem:[%s274 + $0x158] sm:$0xff]
      %v326 = vld [vmem:[%s274 + $0x160] sm:$0xff]
      %v327 = vld [vmem:[%s274 + $0x168] sm:$0xff]
      %v328 = vld [vmem:[%s274 + $0x170] sm:$0xff]
      %v329 = vld [vmem:[%s274 + $0x178] sm:$0xff]
      %v330 = vld [vmem:[%s274 + $0x180] sm:$0xff]
      %v331 = vld [vmem:[%s274 + $0x188] sm:$0xff]
      %v332 = vld [vmem:[%s274 + $0x190] sm:$0xff]
      %v333 = vld [vmem:[%s274 + $0x198] sm:$0xff]
      %v334 = vld [vmem:[%s274 + $0x1a0] sm:$0xff]
      %v335 = vld [vmem:[%s274 + $0x1a8] sm:$0xff]
      %v336 = vld [vmem:[%s274 + $0x1b0] sm:$0xff]
      %v337 = vld [vmem:[%s274 + $0x1b8] sm:$0xff]
      %v338 = vld [vmem:[%s274 + $0x1c0] sm:$0xff]
      %v339 = vld [vmem:[%s274 + $0x1c8] sm:$0xff]
      %v340 = vld [vmem:[%s274 + $0x1d0] sm:$0xff]
      %v341 = vld [vmem:[%s274 + $0x1d8] sm:$0xff]
      %v342 = vld [vmem:[%s274 + $0x1e0] sm:$0xff]
      %v343 = vld [vmem:[%s274 + $0x1e8] sm:$0xff]
      %v344 = vld [vmem:[%s274 + $0x1f0] sm:$0xff]
      %v345 = vld [vmem:[%s274 + $0x1f8] sm:$0xff]
      %v346 = vld [vmem:[%s274 + $0x200] sm:$0xff]
      %v347 = vld [vmem:[%s274 + $0x208] sm:$0xff]
      %v348 = vld [vmem:[%s274 + $0x210] sm:$0xff]
      %v349 = vld [vmem:[%s274 + $0x218] sm:$0xff]
      %v350 = vld [vmem:[%s274 + $0x220] sm:$0xff]
      %v351 = vld [vmem:[%s274 + $0x228] sm:$0xff]
      %v352 = vld [vmem:[%s274 + $0x230] sm:$0xff]
      %v353 = vld [vmem:[%s274 + $0x238] sm:$0xff]
      %v354 = vld [vmem:[%s274 + $0x240] sm:$0xff]
      %v355 = vld [vmem:[%s274 + $0x248] sm:$0xff]
      %v356 = vld [vmem:[%s274 + $0x250] sm:$0xff]
      %v357 = vld [vmem:[%s274 + $0x258] sm:$0xff]
      %v358 = vld [vmem:[%s274 + $0x260] sm:$0xff]
      %v359 = vld [vmem:[%s274 + $0x268] sm:$0xff]
      %v360 = vld [vmem:[%s274 + $0x270] sm:$0xff]
      %v361 = vld [vmem:[%s274 + $0x278] sm:$0xff]
      %v362 = vld [vmem:[%s274 + $0x280] sm:$0xff]
      %v363 = vld [vmem:[%s274 + $0x288] sm:$0xff]
      %v364 = vld [vmem:[%s274 + $0x290] sm:$0xff]
      %v365 = vld [vmem:[%s274 + $0x298] sm:$0xff]
      %v366 = vld [vmem:[%s274 + $0x2a0] sm:$0xff]
      %v367 = vld [vmem:[%s274 + $0x2a8] sm:$0xff]
      %v368 = vld [vmem:[%s274 + $0x2b0] sm:$0xff]
      %v369 = vld [vmem:[%s274 + $0x2b8] sm:$0xff]
      %v370 = vld [vmem:[%s274 + $0x2c0] sm:$0xff]
      %v371 = vld [vmem:[%s274 + $0x2c8] sm:$0xff]
      %v372 = vld [vmem:[%s274 + $0x2d0] sm:$0xff]
      %v373 = vld [vmem:[%s274 + $0x2d8] sm:$0xff]
      %v374 = vld [vmem:[%s274 + $0x2e0] sm:$0xff]
      %v375 = vld [vmem:[%s274 + $0x2e8] sm:$0xff]
      %v376 = vld [vmem:[%s274 + $0x2f0] sm:$0xff]
      %v377 = vld [vmem:[%s274 + $0x2f8] sm:$0xff]
      %v378 = vld [vmem:[%s274 + $0x300] sm:$0xff]
      %v379 = vld [vmem:[%s274 + $0x308] sm:$0xff]
      %v380 = vld [vmem:[%s274 + $0x310] sm:$0xff]
      %v381 = vld [vmem:[%s274 + $0x318] sm:$0xff]
      %v382 = vld [vmem:[%s274 + $0x320] sm:$0xff]
      %v383 = vld [vmem:[%s274 + $0x328] sm:$0xff]
      %v384 = vld [vmem:[%s274 + $0x330] sm:$0xff]
      %v385 = vld [vmem:[%s274 + $0x338] sm:$0xff]
      %v386 = vld [vmem:[%s274 + $0x340] sm:$0xff]
      %v387 = vld [vmem:[%s274 + $0x348] sm:$0xff]
      %v388 = vld [vmem:[%s274 + $0x350] sm:$0xff]
      %v389 = vld [vmem:[%s274 + $0x358] sm:$0xff]
      %v390 = vld [vmem:[%s274 + $0x360] sm:$0xff]
      %v391 = vld [vmem:[%s274 + $0x368] sm:$0xff]
      %v392 = vld [vmem:[%s274 + $0x370] sm:$0xff]
      %v393 = vld [vmem:[%s274 + $0x378] sm:$0xff]
      %v394 = vld [vmem:[%s274 + $0x380] sm:$0xff]
      %v395 = vld [vmem:[%s274 + $0x388] sm:$0xff]
      %v396 = vld [vmem:[%s274 + $0x390] sm:$0xff]
      %v397 = vld [vmem:[%s274 + $0x398] sm:$0xff]
      %v398 = vld [vmem:[%s274 + $0x3a0] sm:$0xff]
      %v399 = vld [vmem:[%s274 + $0x3a8] sm:$0xff]
      %v400 = vld [vmem:[%s274 + $0x3b0] sm:$0xff]
      %v401 = vld [vmem:[%s274 + $0x3b8] sm:$0xff]
      %v402 = vld [vmem:[%s274 + $0x3c0] sm:$0xff]
      %v403 = vld [vmem:[%s274 + $0x3c8] sm:$0xff]
      %v404 = vld [vmem:[%s274 + $0x3d0] sm:$0xff]
      %v405 = vld [vmem:[%s274 + $0x3d8] sm:$0xff]
      %v406 = vld [vmem:[%s274 + $0x3e0] sm:$0xff]
      %v407 = vld [vmem:[%s274 + $0x3e8] sm:$0xff]
      %v408 = vld [vmem:[%s274 + $0x3f0] sm:$0xff]
      %v409 = vld [vmem:[%s274 + $0x3f8] sm:$0xff]
      %v410 = vld [vmem:[%s1] sm:$0xf]
      %v411 = vld [vmem:[%s2] sm:$0x1]
      %v413 = vlaneseq
      %v414 = vshrl.u32 %v413, 7
      %v415 = vsub.s32 0, %v414
      %v416 = vrot.slane %v411, %v415
      %vm418 = vcmask 31744
      %v420 = vsel %vm418, %v282, 0
      %v423 = vsel %vm418, %v283, 0
      %v426 = vsel %vm418, %v284, 0
      %v429 = vsel %vm418, %v285, 0
      %v432 = vsel %vm418, %v286, 0
      %v435 = vsel %vm418, %v287, 0
      %v438 = vsel %vm418, %v288, 0
      %v441 = vsel %vm418, %v289, 0
      %v444 = vsel %vm418, %v290, 0
      %v447 = vsel %vm418, %v291, 0
      %v450 = vsel %vm418, %v292, 0
      %v453 = vsel %vm418, %v293, 0
      %v456 = vsel %vm418, %v294, 0
      %v459 = vsel %vm418, %v295, 0
      %v462 = vsel %vm418, %v296, 0
      %v465 = vsel %vm418, %v297, 0
      %v468 = vsel %vm418, %v298, 0
      %v471 = vsel %vm418, %v299, 0
      %v474 = vsel %vm418, %v300, 0
      %v477 = vsel %vm418, %v301, 0
      %v480 = vsel %vm418, %v302, 0
      %v483 = vsel %vm418, %v303, 0
      %v486 = vsel %vm418, %v304, 0
      %v489 = vsel %vm418, %v305, 0
      %v492 = vsel %vm418, %v306, 0
      %v495 = vsel %vm418, %v307, 0
      %v498 = vsel %vm418, %v308, 0
      %v501 = vsel %vm418, %v309, 0
      %v504 = vsel %vm418, %v310, 0
      %v507 = vsel %vm418, %v311, 0
      %v510 = vsel %vm418, %v312, 0
      %v513 = vsel %vm418, %v313, 0
      %v516 = vsel %vm418, %v314, 0
      %v519 = vsel %vm418, %v315, 0
      %v522 = vsel %vm418, %v316, 0
      %v525 = vsel %vm418, %v317, 0
      %v528 = vsel %vm418, %v318, 0
      %v531 = vsel %vm418, %v319, 0
      %v534 = vsel %vm418, %v320, 0
      %v537 = vsel %vm418, %v321, 0
      %v540 = vsel %vm418, %v322, 0
      %v543 = vsel %vm418, %v323, 0
      %v546 = vsel %vm418, %v324, 0
      %v549 = vsel %vm418, %v325, 0
      %v552 = vsel %vm418, %v326, 0
      %v555 = vsel %vm418, %v327, 0
      %v558 = vsel %vm418, %v328, 0
      %v561 = vsel %vm418, %v329, 0
      %v564 = vsel %vm418, %v330, 0
      %v567 = vsel %vm418, %v331, 0
      %v570 = vsel %vm418, %v332, 0
      %v573 = vsel %vm418, %v333, 0
      %v576 = vsel %vm418, %v334, 0
      %v579 = vsel %vm418, %v335, 0
      %v582 = vsel %vm418, %v336, 0
      %v585 = vsel %vm418, %v337, 0
      %v588 = vsel %vm418, %v338, 0
      %v591 = vsel %vm418, %v339, 0
      %v594 = vsel %vm418, %v340, 0
      %v597 = vsel %vm418, %v341, 0
      %v600 = vsel %vm418, %v342, 0
      %v603 = vsel %vm418, %v343, 0
      %v606 = vsel %vm418, %v344, 0
      %v609 = vsel %vm418, %v345, 0
      %v612 = vsel %vm418, %v346, 0
      %v615 = vsel %vm418, %v347, 0
      %v618 = vsel %vm418, %v348, 0
      %v621 = vsel %vm418, %v349, 0
      %v624 = vsel %vm418, %v350, 0
      %v627 = vsel %vm418, %v351, 0
      %v630 = vsel %vm418, %v352, 0
      %v633 = vsel %vm418, %v353, 0
      %v636 = vsel %vm418, %v354, 0
      %v639 = vsel %vm418, %v355, 0
      %v642 = vsel %vm418, %v356, 0
      %v645 = vsel %vm418, %v357, 0
      %v648 = vsel %vm418, %v358, 0
      %v651 = vsel %vm418, %v359, 0
      %v654 = vsel %vm418, %v360, 0
      %v657 = vsel %vm418, %v361, 0
      %v660 = vsel %vm418, %v362, 0
      %v663 = vsel %vm418, %v363, 0
      %v666 = vsel %vm418, %v364, 0
      %v669 = vsel %vm418, %v365, 0
      %v672 = vsel %vm418, %v366, 0
      %v675 = vsel %vm418, %v367, 0
      %v678 = vsel %vm418, %v368, 0
      %v681 = vsel %vm418, %v369, 0
      %v684 = vsel %vm418, %v370, 0
      %v687 = vsel %vm418, %v371, 0
      %v690 = vsel %vm418, %v372, 0
      %v693 = vsel %vm418, %v373, 0
      %v696 = vsel %vm418, %v374, 0
      %v699 = vsel %vm418, %v375, 0
      %v702 = vsel %vm418, %v376, 0
      %v705 = vsel %vm418, %v377, 0
      %v708 = vsel %vm418, %v378, 0
      %v711 = vsel %vm418, %v379, 0
      %v714 = vsel %vm418, %v380, 0
      %v717 = vsel %vm418, %v381, 0
      %v720 = vsel %vm418, %v382, 0
      %v723 = vsel %vm418, %v383, 0
      %v726 = vsel %vm418, %v384, 0
      %v729 = vsel %vm418, %v385, 0
      %v732 = vsel %vm418, %v386, 0
      %v735 = vsel %vm418, %v387, 0
      %v738 = vsel %vm418, %v388, 0
      %v741 = vsel %vm418, %v389, 0
      %v744 = vsel %vm418, %v390, 0
      %v747 = vsel %vm418, %v391, 0
      %v750 = vsel %vm418, %v392, 0
      %v753 = vsel %vm418, %v393, 0
      %v756 = vsel %vm418, %v394, 0
      %v759 = vsel %vm418, %v395, 0
      %v762 = vsel %vm418, %v396, 0
      %v765 = vsel %vm418, %v397, 0
      %v768 = vsel %vm418, %v398, 0
      %v771 = vsel %vm418, %v399, 0
      %v774 = vsel %vm418, %v400, 0
      %v777 = vsel %vm418, %v401, 0
      %v780 = vsel %vm418, %v402, 0
      %v783 = vsel %vm418, %v403, 0
      %v786 = vsel %vm418, %v404, 0
      %v789 = vsel %vm418, %v405, 0
      %v792 = vsel %vm418, %v406, 0
      %v795 = vsel %vm418, %v407, 0
      %v798 = vsel %vm418, %v408, 0
      %v801 = vsel %vm418, %v409, 0
      %vm803 = vcmask 1043456
      %v805 = vsel %vm803, %v410, 0
      %807 = vmatprep.subr.mxu0 0.0
      %808 = vmatpush1.msra.mxu0 %v805
      %809 = vmatprep.subr.mxu0 0.0
      %810 = vmatpush1.msra.mxu0 0.0
      %811 = vmatprep.subr.mxu0 0.0
      %812 = vmatpush1.msra.mxu0 0.0
      %813 = vmatprep.subr.mxu0 0.0
      %814 = vmatpush1.msra.mxu0 0.0
      %815 = vmatprep.subr.mxu0 0.0
      %816 = vmatpush1.msra.mxu0 0.0
      %817 = vmatprep.subr.mxu0 0.0
      %818 = vmatpush1.msra.mxu0 0.0
      %819 = vmatprep.subr.mxu0 0.0
      %820 = vmatpush1.msra.mxu0 0.0
      %821 = vmatprep.subr.mxu0 0.0
      %822 = vmatpush1.msra.mxu0 0.0
      %823 = vmatprep.subr.mxu0 0.0
      %824 = vmatpush1.msra.mxu0 0.0
      %825 = vmatprep.subr.mxu0 0.0
      %826 = vmatpush1.msra.mxu0 0.0
      %827 = vmatprep.subr.mxu0 0.0
      %828 = vmatpush1.msra.mxu0 0.0
      %829 = vmatprep.subr.mxu0 0.0
      %830 = vmatpush1.msra.mxu0 0.0
      %831 = vmatprep.subr.mxu0 0.0
      %832 = vmatpush1.msra.mxu0 0.0
      %833 = vmatprep.subr.mxu0 0.0
      %834 = vmatpush1.msra.mxu0 0.0
      %835 = vmatprep.subr.mxu0 0.0
      %836 = vmatpush1.msra.mxu0 0.0
      %837 = vmatprep.subr.mxu0 0.0
      %838 = vmatpush1.msra.mxu0 0.0
      %839 = vmatprep.subr.mxu0 0.0
      %840 = vmatpush1.msra.mxu0 0.0
      %841 = vmatprep.subr.mxu0 0.0
      %842 = vmatpush1.msra.mxu0 0.0
      %843 = vmatprep.subr.mxu0 0.0
      %844 = vmatpush1.msra.mxu0 0.0
      %845 = vmatprep.subr.mxu0 0.0
      %846 = vmatpush1.msra.mxu0 0.0
      %847 = vmatprep.subr.mxu0 0.0
      %848 = vmatpush1.msra.mxu0 0.0
      %849 = vmatprep.subr.mxu0 0.0
      %850 = vmatpush1.msra.mxu0 0.0
      %851 = vmatprep.subr.mxu0 0.0
      %852 = vmatpush1.msra.mxu0 0.0
      %853 = vmatprep.subr.mxu0 0.0
      %854 = vmatpush1.msra.mxu0 0.0
      %855 = vmatprep.subr.mxu0 0.0
      %856 = vmatpush1.msra.mxu0 0.0
      %857 = vmatprep.subr.mxu0 0.0
      %858 = vmatpush1.msra.mxu0 0.0
      %859 = vmatprep.subr.mxu0 0.0
      %860 = vmatpush1.msra.mxu0 0.0
      %861 = vmatprep.subr.mxu0 0.0
      %862 = vmatpush1.msra.mxu0 0.0
      %863 = vmatprep.subr.mxu0 0.0
      %864 = vmatpush1.msra.mxu0 0.0
      %865 = vmatprep.subr.mxu0 0.0
      %866 = vmatpush1.msra.mxu0 0.0
      %867 = vmatprep.subr.mxu0 0.0
      %868 = vmatpush1.msra.mxu0 0.0
      %869 = vmatprep.subr.mxu0 0.0
      %870 = vmatpush1.msra.mxu0 0.0
      %871 = vmatprep.mubr.f32.mxu0 0.0
      %872 = vmatmul.mubr.f32.gmra.mrb[0].mxu0 %v420
      %v873 = vpop.f32.mrb[0].mxu0
      %v874 = vadd.f32 %v416, %v873
      %v875 = vpop.f32.mrb[0].mxu0
      %876 = vmatprep.mubr.f32.mxu0 0.0
      %877 = vmatmul.mubr.f32.gmra.mrb[0].mxu0 %v423
      %v878 = vpop.f32.mrb[0].mxu0
      %v879 = vadd.f32 %v416, %v878
      %v880 = vpop.f32.mrb[0].mxu0
      %881 = vmatprep.mubr.f32.mxu0 0.0
      %882 = vmatmul.mubr.f32.gmra.mrb[0].mxu0 %v426
      %v883 = vpop.f32.mrb[0].mxu0
      %v884 = vadd.f32 %v416, %v883
      %v885 = vpop.f32.mrb[0].mxu0
      %886 = vmatprep.mubr.f32.mxu0 0.0
      %887 = vmatmul.mubr.f32.gmra.mrb[0].mxu0 %v429
      %v888 = vpop.f32.mrb[0].mxu0
      %v889 = vadd.f32 %v416, %v888
      %v890 = vpop.f32.mrb[0].mxu0
      %891 = vmatprep.mubr.f32.mxu0 0.0
      %892 = vmatmul.mubr.f32.gmra.mrb[0].mxu0 %v432
      %v893 = vpop.f32.mrb[0].mxu0
      %v894 = vadd.f32 %v416, %v893
      %v895 = vpop.f32.mrb[0].mxu0
      %896 = vmatprep.mubr.f32.mxu0 0.0
      %897 = vmatmul.mubr.f32.gmra.mrb[0].mxu0 %v435
      %v898 = vpop.f32.mrb[0].mxu0
      %v899 = vadd.f32 %v416, %v898
      %v900 = vpop.f32.mrb[0].mxu0
      %901 = vmatprep.mubr.f32.mxu0 0.0
      %902 = vmatmul.mubr.f32.gmra.mrb[0].mxu0 %v438
      %v903 = vpop.f32.mrb[0].mxu0
      %v904 = vadd.f32 %v416, %v903
      %v905 = vpop.f32.mrb[0].mxu0
      %906 = vmatprep.mubr.f32.mxu0 0.0
      %907 = vmatmul.mubr.f32.gmra.mrb[0].mxu0 %v441
      %v908 = vpop.f32.mrb[0].mxu0
      %v909 = vadd.f32 %v416, %v908
      %v910 = vpop.f32.mrb[0].mxu0
      %911 = vmatprep.mubr.f32.mxu0 0.0
      %912 = vmatmul.mubr.f32.gmra.mrb[0].mxu0 %v444
      %v913 = vpop.f32.mrb[0].mxu0
      %v914 = vadd.f32 %v416, %v913
      %v915 = vpop.f32.mrb[0].mxu0
      %916 = vmatprep.mubr.f32.mxu0 0.0
      %917 = vmatmul.mubr.f32.gmra.mrb[0].mxu0 %v447
      %v918 = vpop.f32.mrb[0].mxu0
      %v919 = vadd.f32 %v416, %v918
      %v920 = vpop.f32.mrb[0].mxu0
      %921 = vmatprep.mubr.f32.mxu0 0.0
      %922 = vmatmul.mubr.f32.gmra.mrb[0].mxu0 %v450
      %v923 = vpop.f32.mrb[0].mxu0
      %v924 = vadd.f32 %v416, %v923
      %v925 = vpop.f32.mrb[0].mxu0
      %926 = vmatprep.mubr.f32.mxu0 0.0
      %927 = vmatmul.mubr.f32.gmra.mrb[0].mxu0 %v453
      %v928 = vpop.f32.mrb[0].mxu0
      %v929 = vadd.f32 %v416, %v928
      %v930 = vpop.f32.mrb[0].mxu0
      %931 = vmatprep.mubr.f32.mxu0 0.0
      %932 = vmatmul.mubr.f32.gmra.mrb[0].mxu0 %v456
      %v933 = vpop.f32.mrb[0].mxu0
      %v934 = vadd.f32 %v416, %v933
      %v935 = vpop.f32.mrb[0].mxu0
      %936 = vmatprep.mubr.f32.mxu0 0.0
      %937 = vmatmul.mubr.f32.gmra.mrb[0].mxu0 %v459
      %v938 = vpop.f32.mrb[0].mxu0
      %v939 = vadd.f32 %v416, %v938
      %v940 = vpop.f32.mrb[0].mxu0
      %941 = vmatprep.mubr.f32.mxu0 0.0
      %942 = vmatmul.mubr.f32.gmra.mrb[0].mxu0 %v462
      %v943 = vpop.f32.mrb[0].mxu0
      %v944 = vadd.f32 %v416, %v943
      %v945 = vpop.f32.mrb[0].mxu0
      %946 = vmatprep.mubr.f32.mxu0 0.0
      %947 = vmatmul.mubr.f32.gmra.mrb[0].mxu0 %v465
      %v948 = vpop.f32.mrb[0].mxu0
      %v949 = vadd.f32 %v416, %v948
      %v950 = vpop.f32.mrb[0].mxu0
      %951 = vmatprep.mubr.f32.mxu0 0.0
      %952 = vmatmul.mubr.f32.gmra.mrb[0].mxu0 %v468
      %v953 = vpop.f32.mrb[0].mxu0
      %v954 = vadd.f32 %v416, %v953
      %v955 = vpop.f32.mrb[0].mxu0
      %956 = vmatprep.mubr.f32.mxu0 0.0
      %957 = vmatmul.mubr.f32.gmra.mrb[0].mxu0 %v471
      %v958 = vpop.f32.mrb[0].mxu0
      %v959 = vadd.f32 %v416, %v958
      %v960 = vpop.f32.mrb[0].mxu0
      %961 = vmatprep.mubr.f32.mxu0 0.0
      %962 = vmatmul.mubr.f32.gmra.mrb[0].mxu0 %v474
      %v963 = vpop.f32.mrb[0].mxu0
      %v964 = vadd.f32 %v416, %v963
      %v965 = vpop.f32.mrb[0].mxu0
      %966 = vmatprep.mubr.f32.mxu0 0.0
      %967 = vmatmul.mubr.f32.gmra.mrb[0].mxu0 %v477
      %v968 = vpop.f32.mrb[0].mxu0
      %v969 = vadd.f32 %v416, %v968
      %v970 = vpop.f32.mrb[0].mxu0
      %971 = vmatprep.mubr.f32.mxu0 0.0
      %972 = vmatmul.mubr.f32.gmra.mrb[0].mxu0 %v480
      %v973 = vpop.f32.mrb[0].mxu0
      %v974 = vadd.f32 %v416, %v973
      %v975 = vpop.f32.mrb[0].mxu0
      %976 = vmatprep.mubr.f32.mxu0 0.0
      %977 = vmatmul.mubr.f32.gmra.mrb[0].mxu0 %v483
      %v978 = vpop.f32.mrb[0].mxu0
      %v979 = vadd.f32 %v416, %v978
      %v980 = vpop.f32.mrb[0].mxu0
      %981 = vmatprep.mubr.f32.mxu0 0.0
      %982 = vmatmul.mubr.f32.gmra.mrb[0].mxu0 %v486
      %v983 = vpop.f32.mrb[0].mxu0
      %v984 = vadd.f32 %v416, %v983
      %v985 = vpop.f32.mrb[0].mxu0
      %986 = vmatprep.mubr.f32.mxu0 0.0
      %987 = vmatmul.mubr.f32.gmra.mrb[0].mxu0 %v489
      %v988 = vpop.f32.mrb[0].mxu0
      %v989 = vadd.f32 %v416, %v988
      %v990 = vpop.f32.mrb[0].mxu0
      %991 = vmatprep.mubr.f32.mxu0 0.0
      %992 = vmatmul.mubr.f32.gmra.mrb[0].mxu0 %v492
      %v993 = vpop.f32.mrb[0].mxu0
      %v994 = vadd.f32 %v416, %v993
      %v995 = vpop.f32.mrb[0].mxu0
      %996 = vmatprep.mubr.f32.mxu0 0.0
      %997 = vmatmul.mubr.f32.gmra.mrb[0].mxu0 %v495
      %v998 = vpop.f32.mrb[0].mxu0
      %v999 = vadd.f32 %v416, %v998
      %v1000 = vpop.f32.mrb[0].mxu0
      %1001 = vmatprep.mubr.f32.mxu0 0.0
      %1002 = vmatmul.mubr.f32.gmra.mrb[0].mxu0 %v498
      %v1003 = vpop.f32.mrb[0].mxu0
      %v1004 = vadd.f32 %v416, %v1003
      %v1005 = vpop.f32.mrb[0].mxu0
      %1006 = vmatprep.mubr.f32.mxu0 0.0
      %1007 = vmatmul.mubr.f32.gmra.mrb[0].mxu0 %v501
      %v1008 = vpop.f32.mrb[0].mxu0
      %v1009 = vadd.f32 %v416, %v1008
      %v1010 = vpop.f32.mrb[0].mxu0
      %1011 = vmatprep.mubr.f32.mxu0 0.0
      %1012 = vmatmul.mubr.f32.gmra.mrb[0].mxu0 %v504
      %v1013 = vpop.f32.mrb[0].mxu0
      %v1014 = vadd.f32 %v416, %v1013
      %v1015 = vpop.f32.mrb[0].mxu0
      %1016 = vmatprep.mubr.f32.mxu0 0.0
      %1017 = vmatmul.mubr.f32.gmra.mrb[0].mxu0 %v507
      %v1018 = vpop.f32.mrb[0].mxu0
      %v1019 = vadd.f32 %v416, %v1018
      %v1020 = vpop.f32.mrb[0].mxu0
      %1021 = vmatprep.mubr.f32.mxu0 0.0
      %1022 = vmatmul.mubr.f32.gmra.mrb[0].mxu0 %v510
      %v1023 = vpop.f32.mrb[0].mxu0
      %v1024 = vadd.f32 %v416, %v1023
      %v1025 = vpop.f32.mrb[0].mxu0
      %1026 = vmatprep.mubr.f32.mxu0 0.0
      %1027 = vmatmul.mubr.f32.gmra.mrb[0].mxu0 %v513
      %v1028 = vpop.f32.mrb[0].mxu0
      %v1029 = vadd.f32 %v416, %v1028
      %v1030 = vpop.f32.mrb[0].mxu0
      %1031 = vmatprep.mubr.f32.mxu0 0.0
      %1032 = vmatmul.mubr.f32.gmra.mrb[0].mxu0 %v516
      %v1033 = vpop.f32.mrb[0].mxu0
      %v1034 = vadd.f32 %v416, %v1033
      %v1035 = vpop.f32.mrb[0].mxu0
      %1036 = vmatprep.mubr.f32.mxu0 0.0
      %1037 = vmatmul.mubr.f32.gmra.mrb[0].mxu0 %v519
      %v1038 = vpop.f32.mrb[0].mxu0
      %v1039 = vadd.f32 %v416, %v1038
      %v1040 = vpop.f32.mrb[0].mxu0
      %1041 = vmatprep.mubr.f32.mxu0 0.0
      %1042 = vmatmul.mubr.f32.gmra.mrb[0].mxu0 %v522
      %v1043 = vpop.f32.mrb[0].mxu0
      %v1044 = vadd.f32 %v416, %v1043
      %v1045 = vpop.f32.mrb[0].mxu0
      %1046 = vmatprep.mubr.f32.mxu0 0.0
      %1047 = vmatmul.mubr.f32.gmra.mrb[0].mxu0 %v525
      %v1048 = vpop.f32.mrb[0].mxu0
      %v1049 = vadd.f32 %v416, %v1048
      %v1050 = vpop.f32.mrb[0].mxu0
      %1051 = vmatprep.mubr.f32.mxu0 0.0
      %1052 = vmatmul.mubr.f32.gmra.mrb[0].mxu0 %v528
      %v1053 = vpop.f32.mrb[0].mxu0
      %v1054 = vadd.f32 %v416, %v1053
      %v1055 = vpop.f32.mrb[0].mxu0
      %1056 = vmatprep.mubr.f32.mxu0 0.0
      %1057 = vmatmul.mubr.f32.gmra.mrb[0].mxu0 %v531
      %v1058 = vpop.f32.mrb[0].mxu0
      %v1059 = vadd.f32 %v416, %v1058
      %v1060 = vpop.f32.mrb[0].mxu0
      %1061 = vmatprep.mubr.f32.mxu0 0.0
      %1062 = vmatmul.mubr.f32.gmra.mrb[0].mxu0 %v534
      %v1063 = vpop.f32.mrb[0].mxu0
      %v1064 = vadd.f32 %v416, %v1063
      %v1065 = vpop.f32.mrb[0].mxu0
      %1066 = vmatprep.mubr.f32.mxu0 0.0
      %1067 = vmatmul.mubr.f32.gmra.mrb[0].mxu0 %v537
      %v1068 = vpop.f32.mrb[0].mxu0
      %v1069 = vadd.f32 %v416, %v1068
      %v1070 = vpop.f32.mrb[0].mxu0
      %1071 = vmatprep.mubr.f32.mxu0 0.0
      %1072 = vmatmul.mubr.f32.gmra.mrb[0].mxu0 %v540
      %v1073 = vpop.f32.mrb[0].mxu0
      %v1074 = vadd.f32 %v416, %v1073
      %v1075 = vpop.f32.mrb[0].mxu0
      %1076 = vmatprep.mubr.f32.mxu0 0.0
      %1077 = vmatmul.mubr.f32.gmra.mrb[0].mxu0 %v543
      %v1078 = vpop.f32.mrb[0].mxu0
      %v1079 = vadd.f32 %v416, %v1078
      %v1080 = vpop.f32.mrb[0].mxu0
      %1081 = vmatprep.mubr.f32.mxu0 0.0
      %1082 = vmatmul.mubr.f32.gmra.mrb[0].mxu0 %v546
      %v1083 = vpop.f32.mrb[0].mxu0
      %v1084 = vadd.f32 %v416, %v1083
      %v1085 = vpop.f32.mrb[0].mxu0
      %1086 = vmatprep.mubr.f32.mxu0 0.0
      %1087 = vmatmul.mubr.f32.gmra.mrb[0].mxu0 %v549
      %v1088 = vpop.f32.mrb[0].mxu0
      %v1089 = vadd.f32 %v416, %v1088
      %v1090 = vpop.f32.mrb[0].mxu0
      %1091 = vmatprep.mubr.f32.mxu0 0.0
      %1092 = vmatmul.mubr.f32.gmra.mrb[0].mxu0 %v552
      %v1093 = vpop.f32.mrb[0].mxu0
      %v1094 = vadd.f32 %v416, %v1093
      %v1095 = vpop.f32.mrb[0].mxu0
      %1096 = vmatprep.mubr.f32.mxu0 0.0
      %1097 = vmatmul.mubr.f32.gmra.mrb[0].mxu0 %v555
      %v1098 = vpop.f32.mrb[0].mxu0
      %v1099 = vadd.f32 %v416, %v1098
      %v1100 = vpop.f32.mrb[0].mxu0
      %1101 = vmatprep.mubr.f32.mxu0 0.0
      %1102 = vmatmul.mubr.f32.gmra.mrb[0].mxu0 %v558
      %v1103 = vpop.f32.mrb[0].mxu0
      %v1104 = vadd.f32 %v416, %v1103
      %v1105 = vpop.f32.mrb[0].mxu0
      %1106 = vmatprep.mubr.f32.mxu0 0.0
      %1107 = vmatmul.mubr.f32.gmra.mrb[0].mxu0 %v561
      %v1108 = vpop.f32.mrb[0].mxu0
      %v1109 = vadd.f32 %v416, %v1108
      %v1110 = vpop.f32.mrb[0].mxu0
      %1111 = vmatprep.mubr.f32.mxu0 0.0
      %1112 = vmatmul.mubr.f32.gmra.mrb[0].mxu0 %v564
      %v1113 = vpop.f32.mrb[0].mxu0
      %v1114 = vadd.f32 %v416, %v1113
      %v1115 = vpop.f32.mrb[0].mxu0
      %1116 = vmatprep.mubr.f32.mxu0 0.0
      %1117 = vmatmul.mubr.f32.gmra.mrb[0].mxu0 %v567
      %v1118 = vpop.f32.mrb[0].mxu0
      %v1119 = vadd.f32 %v416, %v1118
      %v1120 = vpop.f32.mrb[0].mxu0
      %1121 = vmatprep.mubr.f32.mxu0 0.0
      %1122 = vmatmul.mubr.f32.gmra.mrb[0].mxu0 %v570
      %v1123 = vpop.f32.mrb[0].mxu0
      %v1124 = vadd.f32 %v416, %v1123
      %v1125 = vpop.f32.mrb[0].mxu0
      %1126 = vmatprep.mubr.f32.mxu0 0.0
      %1127 = vmatmul.mubr.f32.gmra.mrb[0].mxu0 %v573
      %v1128 = vpop.f32.mrb[0].mxu0
      %v1129 = vadd.f32 %v416, %v1128
      %v1130 = vpop.f32.mrb[0].mxu0
      %1131 = vmatprep.mubr.f32.mxu0 0.0
      %1132 = vmatmul.mubr.f32.gmra.mrb[0].mxu0 %v576
      %v1133 = vpop.f32.mrb[0].mxu0
      %v1134 = vadd.f32 %v416, %v1133
      %v1135 = vpop.f32.mrb[0].mxu0
      %1136 = vmatprep.mubr.f32.mxu0 0.0
      %1137 = vmatmul.mubr.f32.gmra.mrb[0].mxu0 %v579
      %v1138 = vpop.f32.mrb[0].mxu0
      %v1139 = vadd.f32 %v416, %v1138
      %v1140 = vpop.f32.mrb[0].mxu0
      %1141 = vmatprep.mubr.f32.mxu0 0.0
      %1142 = vmatmul.mubr.f32.gmra.mrb[0].mxu0 %v582
      %v1143 = vpop.f32.mrb[0].mxu0
      %v1144 = vadd.f32 %v416, %v1143
      %v1145 = vpop.f32.mrb[0].mxu0
      %1146 = vmatprep.mubr.f32.mxu0 0.0
      %1147 = vmatmul.mubr.f32.gmra.mrb[0].mxu0 %v585
      %v1148 = vpop.f32.mrb[0].mxu0
      %v1149 = vadd.f32 %v416, %v1148
      %v1150 = vpop.f32.mrb[0].mxu0
      %1151 = vmatprep.mubr.f32.mxu0 0.0
      %1152 = vmatmul.mubr.f32.gmra.mrb[0].mxu0 %v588
      %v1153 = vpop.f32.mrb[0].mxu0
      %v1154 = vadd.f32 %v416, %v1153
      %v1155 = vpop.f32.mrb[0].mxu0
      %1156 = vmatprep.mubr.f32.mxu0 0.0
      %1157 = vmatmul.mubr.f32.gmra.mrb[0].mxu0 %v591
      %v1158 = vpop.f32.mrb[0].mxu0
      %v1159 = vadd.f32 %v416, %v1158
      %v1160 = vpop.f32.mrb[0].mxu0
      %1161 = vmatprep.mubr.f32.mxu0 0.0
      %1162 = vmatmul.mubr.f32.gmra.mrb[0].mxu0 %v594
      %v1163 = vpop.f32.mrb[0].mxu0
      %v1164 = vadd.f32 %v416, %v1163
      %v1165 = vpop.f32.mrb[0].mxu0
      %1166 = vmatprep.mubr.f32.mxu0 0.0
      %1167 = vmatmul.mubr.f32.gmra.mrb[0].mxu0 %v597
      %v1168 = vpop.f32.mrb[0].mxu0
      %v1169 = vadd.f32 %v416, %v1168
      %v1170 = vpop.f32.mrb[0].mxu0
      %1171 = vmatprep.mubr.f32.mxu0 0.0
      %1172 = vmatmul.mubr.f32.gmra.mrb[0].mxu0 %v600
      %v1173 = vpop.f32.mrb[0].mxu0
      %v1174 = vadd.f32 %v416, %v1173
      %v1175 = vpop.f32.mrb[0].mxu0
      %1176 = vmatprep.mubr.f32.mxu0 0.0
      %1177 = vmatmul.mubr.f32.gmra.mrb[0].mxu0 %v603
      %v1178 = vpop.f32.mrb[0].mxu0
      %v1179 = vadd.f32 %v416, %v1178
      %v1180 = vpop.f32.mrb[0].mxu0
      %1181 = vmatprep.mubr.f32.mxu0 0.0
      %1182 = vmatmul.mubr.f32.gmra.mrb[0].mxu0 %v606
      %v1183 = vpop.f32.mrb[0].mxu0
      %v1184 = vadd.f32 %v416, %v1183
      %v1185 = vpop.f32.mrb[0].mxu0
      %1186 = vmatprep.mubr.f32.mxu0 0.0
      %1187 = vmatmul.mubr.f32.gmra.mrb[0].mxu0 %v609
      %v1188 = vpop.f32.mrb[0].mxu0
      %v1189 = vadd.f32 %v416, %v1188
      %v1190 = vpop.f32.mrb[0].mxu0
      %1191 = vmatprep.mubr.f32.mxu0 0.0
      %1192 = vmatmul.mubr.f32.gmra.mrb[0].mxu0 %v612
      %v1193 = vpop.f32.mrb[0].mxu0
      %v1194 = vadd.f32 %v416, %v1193
      %v1195 = vpop.f32.mrb[0].mxu0
      %1196 = vmatprep.mubr.f32.mxu0 0.0
      %1197 = vmatmul.mubr.f32.gmra.mrb[0].mxu0 %v615
      %v1198 = vpop.f32.mrb[0].mxu0
      %v1199 = vadd.f32 %v416, %v1198
      %v1200 = vpop.f32.mrb[0].mxu0
      %1201 = vmatprep.mubr.f32.mxu0 0.0
      %1202 = vmatmul.mubr.f32.gmra.mrb[0].mxu0 %v618
      %v1203 = vpop.f32.mrb[0].mxu0
      %v1204 = vadd.f32 %v416, %v1203
      %v1205 = vpop.f32.mrb[0].mxu0
      %1206 = vmatprep.mubr.f32.mxu0 0.0
      %1207 = vmatmul.mubr.f32.gmra.mrb[0].mxu0 %v621
      %v1208 = vpop.f32.mrb[0].mxu0
      %v1209 = vadd.f32 %v416, %v1208
      %v1210 = vpop.f32.mrb[0].mxu0
      %1211 = vmatprep.mubr.f32.mxu0 0.0
      %1212 = vmatmul.mubr.f32.gmra.mrb[0].mxu0 %v624
      %v1213 = vpop.f32.mrb[0].mxu0
      %v1214 = vadd.f32 %v416, %v1213
      %v1215 = vpop.f32.mrb[0].mxu0
      %1216 = vmatprep.mubr.f32.mxu0 0.0
      %1217 = vmatmul.mubr.f32.gmra.mrb[0].mxu0 %v627
      %v1218 = vpop.f32.mrb[0].mxu0
      %v1219 = vadd.f32 %v416, %v1218
      %v1220 = vpop.f32.mrb[0].mxu0
      %1221 = vmatprep.mubr.f32.mxu0 0.0
      %1222 = vmatmul.mubr.f32.gmra.mrb[0].mxu0 %v630
      %v1223 = vpop.f32.mrb[0].mxu0
      %v1224 = vadd.f32 %v416, %v1223
      %v1225 = vpop.f32.mrb[0].mxu0
      %1226 = vmatprep.mubr.f32.mxu0 0.0
      %1227 = vmatmul.mubr.f32.gmra.mrb[0].mxu0 %v633
      %v1228 = vpop.f32.mrb[0].mxu0
      %v1229 = vadd.f32 %v416, %v1228
      %v1230 = vpop.f32.mrb[0].mxu0
      %1231 = vmatprep.mubr.f32.mxu0 0.0
      %1232 = vmatmul.mubr.f32.gmra.mrb[0].mxu0 %v636
      %v1233 = vpop.f32.mrb[0].mxu0
      %v1234 = vadd.f32 %v416, %v1233
      %v1235 = vpop.f32.mrb[0].mxu0
      %1236 = vmatprep.mubr.f32.mxu0 0.0
      %1237 = vmatmul.mubr.f32.gmra.mrb[0].mxu0 %v639
      %v1238 = vpop.f32.mrb[0].mxu0
      %v1239 = vadd.f32 %v416, %v1238
      %v1240 = vpop.f32.mrb[0].mxu0
      %1241 = vmatprep.mubr.f32.mxu0 0.0
      %1242 = vmatmul.mubr.f32.gmra.mrb[0].mxu0 %v642
      %v1243 = vpop.f32.mrb[0].mxu0
      %v1244 = vadd.f32 %v416, %v1243
      %v1245 = vpop.f32.mrb[0].mxu0
      %1246 = vmatprep.mubr.f32.mxu0 0.0
      %1247 = vmatmul.mubr.f32.gmra.mrb[0].mxu0 %v645
      %v1248 = vpop.f32.mrb[0].mxu0
      %v1249 = vadd.f32 %v416, %v1248
      %v1250 = vpop.f32.mrb[0].mxu0
      %1251 = vmatprep.mubr.f32.mxu0 0.0
      %1252 = vmatmul.mubr.f32.gmra.mrb[0].mxu0 %v648
      %v1253 = vpop.f32.mrb[0].mxu0
      %v1254 = vadd.f32 %v416, %v1253
      %v1255 = vpop.f32.mrb[0].mxu0
      %1256 = vmatprep.mubr.f32.mxu0 0.0
      %1257 = vmatmul.mubr.f32.gmra.mrb[0].mxu0 %v651
      %v1258 = vpop.f32.mrb[0].mxu0
      %v1259 = vadd.f32 %v416, %v1258
      %v1260 = vpop.f32.mrb[0].mxu0
      %1261 = vmatprep.mubr.f32.mxu0 0.0
      %1262 = vmatmul.mubr.f32.gmra.mrb[0].mxu0 %v654
      %v1263 = vpop.f32.mrb[0].mxu0
      %v1264 = vadd.f32 %v416, %v1263
      %v1265 = vpop.f32.mrb[0].mxu0
      %1266 = vmatprep.mubr.f32.mxu0 0.0
      %1267 = vmatmul.mubr.f32.gmra.mrb[0].mxu0 %v657
      %v1268 = vpop.f32.mrb[0].mxu0
      %v1269 = vadd.f32 %v416, %v1268
      %v1270 = vpop.f32.mrb[0].mxu0
      %1271 = vmatprep.mubr.f32.mxu0 0.0
      %1272 = vmatmul.mubr.f32.gmra.mrb[0].mxu0 %v660
      %v1273 = vpop.f32.mrb[0].mxu0
      %v1274 = vadd.f32 %v416, %v1273
      %v1275 = vpop.f32.mrb[0].mxu0
      %1276 = vmatprep.mubr.f32.mxu0 0.0
      %1277 = vmatmul.mubr.f32.gmra.mrb[0].mxu0 %v663
      %v1278 = vpop.f32.mrb[0].mxu0
      %v1279 = vadd.f32 %v416, %v1278
      %v1280 = vpop.f32.mrb[0].mxu0
      %1281 = vmatprep.mubr.f32.mxu0 0.0
      %1282 = vmatmul.mubr.f32.gmra.mrb[0].mxu0 %v666
      %v1283 = vpop.f32.mrb[0].mxu0
      %v1284 = vadd.f32 %v416, %v1283
      %v1285 = vpop.f32.mrb[0].mxu0
      %1286 = vmatprep.mubr.f32.mxu0 0.0
      %1287 = vmatmul.mubr.f32.gmra.mrb[0].mxu0 %v669
      %v1288 = vpop.f32.mrb[0].mxu0
      %v1289 = vadd.f32 %v416, %v1288
      %v1290 = vpop.f32.mrb[0].mxu0
      %1291 = vmatprep.mubr.f32.mxu0 0.0
      %1292 = vmatmul.mubr.f32.gmra.mrb[0].mxu0 %v672
      %v1293 = vpop.f32.mrb[0].mxu0
      %v1294 = vadd.f32 %v416, %v1293
      %v1295 = vpop.f32.mrb[0].mxu0
      %1296 = vmatprep.mubr.f32.mxu0 0.0
      %1297 = vmatmul.mubr.f32.gmra.mrb[0].mxu0 %v675
      %v1298 = vpop.f32.mrb[0].mxu0
      %v1299 = vadd.f32 %v416, %v1298
      %v1300 = vpop.f32.mrb[0].mxu0
      %1301 = vmatprep.mubr.f32.mxu0 0.0
      %1302 = vmatmul.mubr.f32.gmra.mrb[0].mxu0 %v678
      %v1303 = vpop.f32.mrb[0].mxu0
      %v1304 = vadd.f32 %v416, %v1303
      %v1305 = vpop.f32.mrb[0].mxu0
      %1306 = vmatprep.mubr.f32.mxu0 0.0
      %1307 = vmatmul.mubr.f32.gmra.mrb[0].mxu0 %v681
      %v1308 = vpop.f32.mrb[0].mxu0
      %v1309 = vadd.f32 %v416, %v1308
      %v1310 = vpop.f32.mrb[0].mxu0
      %1311 = vmatprep.mubr.f32.mxu0 0.0
      %1312 = vmatmul.mubr.f32.gmra.mrb[0].mxu0 %v684
      %v1313 = vpop.f32.mrb[0].mxu0
      %v1314 = vadd.f32 %v416, %v1313
      %v1315 = vpop.f32.mrb[0].mxu0
      %1316 = vmatprep.mubr.f32.mxu0 0.0
      %1317 = vmatmul.mubr.f32.gmra.mrb[0].mxu0 %v687
      %v1318 = vpop.f32.mrb[0].mxu0
      %v1319 = vadd.f32 %v416, %v1318
      %v1320 = vpop.f32.mrb[0].mxu0
      %1321 = vmatprep.mubr.f32.mxu0 0.0
      %1322 = vmatmul.mubr.f32.gmra.mrb[0].mxu0 %v690
      %v1323 = vpop.f32.mrb[0].mxu0
      %v1324 = vadd.f32 %v416, %v1323
      %v1325 = vpop.f32.mrb[0].mxu0
      %1326 = vmatprep.mubr.f32.mxu0 0.0
      %1327 = vmatmul.mubr.f32.gmra.mrb[0].mxu0 %v693
      %v1328 = vpop.f32.mrb[0].mxu0
      %v1329 = vadd.f32 %v416, %v1328
      %v1330 = vpop.f32.mrb[0].mxu0
      %1331 = vmatprep.mubr.f32.mxu0 0.0
      %1332 = vmatmul.mubr.f32.gmra.mrb[0].mxu0 %v696
      %v1333 = vpop.f32.mrb[0].mxu0
      %v1334 = vadd.f32 %v416, %v1333
      %v1335 = vpop.f32.mrb[0].mxu0
      %1336 = vmatprep.mubr.f32.mxu0 0.0
      %1337 = vmatmul.mubr.f32.gmra.mrb[0].mxu0 %v699
      %v1338 = vpop.f32.mrb[0].mxu0
      %v1339 = vadd.f32 %v416, %v1338
      %v1340 = vpop.f32.mrb[0].mxu0
      %1341 = vmatprep.mubr.f32.mxu0 0.0
      %1342 = vmatmul.mubr.f32.gmra.mrb[0].mxu0 %v702
      %v1343 = vpop.f32.mrb[0].mxu0
      %v1344 = vadd.f32 %v416, %v1343
      %v1345 = vpop.f32.mrb[0].mxu0
      %1346 = vmatprep.mubr.f32.mxu0 0.0
      %1347 = vmatmul.mubr.f32.gmra.mrb[0].mxu0 %v705
      %v1348 = vpop.f32.mrb[0].mxu0
      %v1349 = vadd.f32 %v416, %v1348
      %v1350 = vpop.f32.mrb[0].mxu0
      %1351 = vmatprep.mubr.f32.mxu0 0.0
      %1352 = vmatmul.mubr.f32.gmra.mrb[0].mxu0 %v708
      %v1353 = vpop.f32.mrb[0].mxu0
      %v1354 = vadd.f32 %v416, %v1353
      %v1355 = vpop.f32.mrb[0].mxu0
      %1356 = vmatprep.mubr.f32.mxu0 0.0
      %1357 = vmatmul.mubr.f32.gmra.mrb[0].mxu0 %v711
      %v1358 = vpop.f32.mrb[0].mxu0
      %v1359 = vadd.f32 %v416, %v1358
      %v1360 = vpop.f32.mrb[0].mxu0
      %1361 = vmatprep.mubr.f32.mxu0 0.0
      %1362 = vmatmul.mubr.f32.gmra.mrb[0].mxu0 %v714
      %v1363 = vpop.f32.mrb[0].mxu0
      %v1364 = vadd.f32 %v416, %v1363
      %v1365 = vpop.f32.mrb[0].mxu0
      %1366 = vmatprep.mubr.f32.mxu0 0.0
      %1367 = vmatmul.mubr.f32.gmra.mrb[0].mxu0 %v717
      %v1368 = vpop.f32.mrb[0].mxu0
      %v1369 = vadd.f32 %v416, %v1368
      %v1370 = vpop.f32.mrb[0].mxu0
      %1371 = vmatprep.mubr.f32.mxu0 0.0
      %1372 = vmatmul.mubr.f32.gmra.mrb[0].mxu0 %v720
      %v1373 = vpop.f32.mrb[0].mxu0
      %v1374 = vadd.f32 %v416, %v1373
      %v1375 = vpop.f32.mrb[0].mxu0
      %1376 = vmatprep.mubr.f32.mxu0 0.0
      %1377 = vmatmul.mubr.f32.gmra.mrb[0].mxu0 %v723
      %v1378 = vpop.f32.mrb[0].mxu0
      %v1379 = vadd.f32 %v416, %v1378
      %v1380 = vpop.f32.mrb[0].mxu0
      %1381 = vmatprep.mubr.f32.mxu0 0.0
      %1382 = vmatmul.mubr.f32.gmra.mrb[0].mxu0 %v726
      %v1383 = vpop.f32.mrb[0].mxu0
      %v1384 = vadd.f32 %v416, %v1383
      %v1385 = vpop.f32.mrb[0].mxu0
      %1386 = vmatprep.mubr.f32.mxu0 0.0
      %1387 = vmatmul.mubr.f32.gmra.mrb[0].mxu0 %v729
      %v1388 = vpop.f32.mrb[0].mxu0
      %v1389 = vadd.f32 %v416, %v1388
      %v1390 = vpop.f32.mrb[0].mxu0
      %1391 = vmatprep.mubr.f32.mxu0 0.0
      %1392 = vmatmul.mubr.f32.gmra.mrb[0].mxu0 %v732
      %v1393 = vpop.f32.mrb[0].mxu0
      %v1394 = vadd.f32 %v416, %v1393
      %v1395 = vpop.f32.mrb[0].mxu0
      %1396 = vmatprep.mubr.f32.mxu0 0.0
      %1397 = vmatmul.mubr.f32.gmra.mrb[0].mxu0 %v735
      %v1398 = vpop.f32.mrb[0].mxu0
      %v1399 = vadd.f32 %v416, %v1398
      %v1400 = vpop.f32.mrb[0].mxu0
      %1401 = vmatprep.mubr.f32.mxu0 0.0
      %1402 = vmatmul.mubr.f32.gmra.mrb[0].mxu0 %v738
      %v1403 = vpop.f32.mrb[0].mxu0
      %v1404 = vadd.f32 %v416, %v1403
      %v1405 = vpop.f32.mrb[0].mxu0
      %1406 = vmatprep.mubr.f32.mxu0 0.0
      %1407 = vmatmul.mubr.f32.gmra.mrb[0].mxu0 %v741
      %v1408 = vpop.f32.mrb[0].mxu0
      %v1409 = vadd.f32 %v416, %v1408
      %v1410 = vpop.f32.mrb[0].mxu0
      %1411 = vmatprep.mubr.f32.mxu0 0.0
      %1412 = vmatmul.mubr.f32.gmra.mrb[0].mxu0 %v744
      %v1413 = vpop.f32.mrb[0].mxu0
      %v1414 = vadd.f32 %v416, %v1413
      %v1415 = vpop.f32.mrb[0].mxu0
      %1416 = vmatprep.mubr.f32.mxu0 0.0
      %1417 = vmatmul.mubr.f32.gmra.mrb[0].mxu0 %v747
      %v1418 = vpop.f32.mrb[0].mxu0
      %v1419 = vadd.f32 %v416, %v1418
      %v1420 = vpop.f32.mrb[0].mxu0
      %1421 = vmatprep.mubr.f32.mxu0 0.0
      %1422 = vmatmul.mubr.f32.gmra.mrb[0].mxu0 %v750
      %v1423 = vpop.f32.mrb[0].mxu0
      %v1424 = vadd.f32 %v416, %v1423
      %v1425 = vpop.f32.mrb[0].mxu0
      %1426 = vmatprep.mubr.f32.mxu0 0.0
      %1427 = vmatmul.mubr.f32.gmra.mrb[0].mxu0 %v753
      %v1428 = vpop.f32.mrb[0].mxu0
      %v1429 = vadd.f32 %v416, %v1428
      %v1430 = vpop.f32.mrb[0].mxu0
      %1431 = vmatprep.mubr.f32.mxu0 0.0
      %1432 = vmatmul.mubr.f32.gmra.mrb[0].mxu0 %v756
      %v1433 = vpop.f32.mrb[0].mxu0
      %v1434 = vadd.f32 %v416, %v1433
      %v1435 = vpop.f32.mrb[0].mxu0
      %1436 = vmatprep.mubr.f32.mxu0 0.0
      %1437 = vmatmul.mubr.f32.gmra.mrb[0].mxu0 %v759
      %v1438 = vpop.f32.mrb[0].mxu0
      %v1439 = vadd.f32 %v416, %v1438
      %v1440 = vpop.f32.mrb[0].mxu0
      %1441 = vmatprep.mubr.f32.mxu0 0.0
      %1442 = vmatmul.mubr.f32.gmra.mrb[0].mxu0 %v762
      %v1443 = vpop.f32.mrb[0].mxu0
      %v1444 = vadd.f32 %v416, %v1443
      %v1445 = vpop.f32.mrb[0].mxu0
      %1446 = vmatprep.mubr.f32.mxu0 0.0
      %1447 = vmatmul.mubr.f32.gmra.mrb[0].mxu0 %v765
      %v1448 = vpop.f32.mrb[0].mxu0
      %v1449 = vadd.f32 %v416, %v1448
      %v1450 = vpop.f32.mrb[0].mxu0
      %1451 = vmatprep.mubr.f32.mxu0 0.0
      %1452 = vmatmul.mubr.f32.gmra.mrb[0].mxu0 %v768
      %v1453 = vpop.f32.mrb[0].mxu0
      %v1454 = vadd.f32 %v416, %v1453
      %v1455 = vpop.f32.mrb[0].mxu0
      %1456 = vmatprep.mubr.f32.mxu0 0.0
      %1457 = vmatmul.mubr.f32.gmra.mrb[0].mxu0 %v771
      %v1458 = vpop.f32.mrb[0].mxu0
      %v1459 = vadd.f32 %v416, %v1458
      %v1460 = vpop.f32.mrb[0].mxu0
      %1461 = vmatprep.mubr.f32.mxu0 0.0
      %1462 = vmatmul.mubr.f32.gmra.mrb[0].mxu0 %v774
      %v1463 = vpop.f32.mrb[0].mxu0
      %v1464 = vadd.f32 %v416, %v1463
      %v1465 = vpop.f32.mrb[0].mxu0
      %1466 = vmatprep.mubr.f32.mxu0 0.0
      %1467 = vmatmul.mubr.f32.gmra.mrb[0].mxu0 %v777
      %v1468 = vpop.f32.mrb[0].mxu0
      %v1469 = vadd.f32 %v416, %v1468
      %v1470 = vpop.f32.mrb[0].mxu0
      %1471 = vmatprep.mubr.f32.mxu0 0.0
      %1472 = vmatmul.mubr.f32.gmra.mrb[0].mxu0 %v780
      %v1473 = vpop.f32.mrb[0].mxu0
      %v1474 = vadd.f32 %v416, %v1473
      %v1475 = vpop.f32.mrb[0].mxu0
      %1476 = vmatprep.mubr.f32.mxu0 0.0
      %1477 = vmatmul.mubr.f32.gmra.mrb[0].mxu0 %v783
      %v1478 = vpop.f32.mrb[0].mxu0
      %v1479 = vadd.f32 %v416, %v1478
      %v1480 = vpop.f32.mrb[0].mxu0
      %1481 = vmatprep.mubr.f32.mxu0 0.0
      %1482 = vmatmul.mubr.f32.gmra.mrb[0].mxu0 %v786
      %v1483 = vpop.f32.mrb[0].mxu0
      %v1484 = vadd.f32 %v416, %v1483
      %v1485 = vpop.f32.mrb[0].mxu0
      %1486 = vmatprep.mubr.f32.mxu0 0.0
      %1487 = vmatmul.mubr.f32.gmra.mrb[0].mxu0 %v789
      %v1488 = vpop.f32.mrb[0].mxu0
      %v1489 = vadd.f32 %v416, %v1488
      %v1490 = vpop.f32.mrb[0].mxu0
      %1491 = vmatprep.mubr.f32.mxu0 0.0
      %1492 = vmatmul.mubr.f32.gmra.mrb[0].mxu0 %v792
      %v1493 = vpop.f32.mrb[0].mxu0
      %v1494 = vadd.f32 %v416, %v1493
      %v1495 = vpop.f32.mrb[0].mxu0
      %1496 = vmatprep.mubr.f32.mxu0 0.0
      %1497 = vmatmul.mubr.f32.gmra.mrb[0].mxu0 %v795
      %v1498 = vpop.f32.mrb[0].mxu0
      %v1499 = vadd.f32 %v416, %v1498
      %v1500 = vpop.f32.mrb[0].mxu0
      %1501 = vmatprep.mubr.f32.mxu0 0.0
      %1502 = vmatmul.mubr.f32.gmra.mrb[0].mxu0 %v798
      %v1503 = vpop.f32.mrb[0].mxu0
      %v1504 = vadd.f32 %v416, %v1503
      %v1505 = vpop.f32.mrb[0].mxu0
      %1506 = vmatprep.mubr.f32.mxu0 0.0
      %1507 = vmatmul.mubr.f32.gmra.mrb[0].mxu0 %v801
      %v1508 = vpop.f32.mrb[0].mxu0
      %v1509 = vadd.f32 %v416, %v1508
      %v1510 = vpop.f32.mrb[0].mxu0
      %1511 = vdwg.mxu0
      %v1512 = vtanh.pop %v874
      %v1513 = vtanh.pop %v879
      %v1514 = vtanh.pop %v884
      %v1515 = vtanh.pop %v889
      %v1516 = vtanh.pop %v894
      %v1517 = vtanh.pop %v899
      %v1518 = vtanh.pop %v904
      %v1519 = vtanh.pop %v909
      %v1520 = vtanh.pop %v914
      %v1521 = vtanh.pop %v919
      %v1522 = vtanh.pop %v924
      %v1523 = vtanh.pop %v929
      %v1524 = vtanh.pop %v934
      %v1525 = vtanh.pop %v939
      %v1526 = vtanh.pop %v944
      %v1527 = vtanh.pop %v949
      %v1528 = vtanh.pop %v954
      %v1529 = vtanh.pop %v959
      %v1530 = vtanh.pop %v964
      %v1531 = vtanh.pop %v969
      %v1532 = vtanh.pop %v974
      %v1533 = vtanh.pop %v979
      %v1534 = vtanh.pop %v984
      %v1535 = vtanh.pop %v989
      %v1536 = vtanh.pop %v994
      %v1537 = vtanh.pop %v999
      %v1538 = vtanh.pop %v1004
      %v1539 = vtanh.pop %v1009
      %v1540 = vtanh.pop %v1014
      %v1541 = vtanh.pop %v1019
      %v1542 = vtanh.pop %v1024
      %v1543 = vtanh.pop %v1029
      %v1544 = vtanh.pop %v1034
      %v1545 = vtanh.pop %v1039
      %v1546 = vtanh.pop %v1044
      %v1547 = vtanh.pop %v1049
      %v1548 = vtanh.pop %v1054
      %v1549 = vtanh.pop %v1059
      %v1550 = vtanh.pop %v1064
      %v1551 = vtanh.pop %v1069
      %v1552 = vtanh.pop %v1074
      %v1553 = vtanh.pop %v1079
      %v1554 = vtanh.pop %v1084
      %v1555 = vtanh.pop %v1089
      %v1556 = vtanh.pop %v1094
      %v1557 = vtanh.pop %v1099
      %v1558 = vtanh.pop %v1104
      %v1559 = vtanh.pop %v1109
      %v1560 = vtanh.pop %v1114
      %v1561 = vtanh.pop %v1119
      %v1562 = vtanh.pop %v1124
      %v1563 = vtanh.pop %v1129
      %v1564 = vtanh.pop %v1134
      %v1565 = vtanh.pop %v1139
      %v1566 = vtanh.pop %v1144
      %v1567 = vtanh.pop %v1149
      %v1568 = vtanh.pop %v1154
      %v1569 = vtanh.pop %v1159
      %v1570 = vtanh.pop %v1164
      %v1571 = vtanh.pop %v1169
      %v1572 = vtanh.pop %v1174
      %v1573 = vtanh.pop %v1179
      %v1574 = vtanh.pop %v1184
      %v1575 = vtanh.pop %v1189
      %v1576 = vtanh.pop %v1194
      %v1577 = vtanh.pop %v1199
      %v1578 = vtanh.pop %v1204
      %v1579 = vtanh.pop %v1209
      %v1580 = vtanh.pop %v1214
      %v1581 = vtanh.pop %v1219
      %v1582 = vtanh.pop %v1224
      %v1583 = vtanh.pop %v1229
      %v1584 = vtanh.pop %v1234
      %v1585 = vtanh.pop %v1239
      %v1586 = vtanh.pop %v1244
      %v1587 = vtanh.pop %v1249
      %v1588 = vtanh.pop %v1254
      %v1589 = vtanh.pop %v1259
      %v1590 = vtanh.pop %v1264
      %v1591 = vtanh.pop %v1269
      %v1592 = vtanh.pop %v1274
      %v1593 = vtanh.pop %v1279
      %v1594 = vtanh.pop %v1284
      %v1595 = vtanh.pop %v1289
      %v1596 = vtanh.pop %v1294
      %v1597 = vtanh.pop %v1299
      %v1598 = vtanh.pop %v1304
      %v1599 = vtanh.pop %v1309
      %v1600 = vtanh.pop %v1314
      %v1601 = vtanh.pop %v1319
      %v1602 = vtanh.pop %v1324
      %v1603 = vtanh.pop %v1329
      %v1604 = vtanh.pop %v1334
      %v1605 = vtanh.pop %v1339
      %v1606 = vtanh.pop %v1344
      %v1607 = vtanh.pop %v1349
      %v1608 = vtanh.pop %v1354
      %v1609 = vtanh.pop %v1359
      %v1610 = vtanh.pop %v1364
      %v1611 = vtanh.pop %v1369
      %v1612 = vtanh.pop %v1374
      %v1613 = vtanh.pop %v1379
      %v1614 = vtanh.pop %v1384
      %v1615 = vtanh.pop %v1389
      %v1616 = vtanh.pop %v1394
      %v1617 = vtanh.pop %v1399
      %v1618 = vtanh.pop %v1404
      %v1619 = vtanh.pop %v1409
      %v1620 = vtanh.pop %v1414
      %v1621 = vtanh.pop %v1419
      %v1622 = vtanh.pop %v1424
      %v1623 = vtanh.pop %v1429
      %v1624 = vtanh.pop %v1434
      %v1625 = vtanh.pop %v1439
      %v1626 = vtanh.pop %v1444
      %v1627 = vtanh.pop %v1449
      %v1628 = vtanh.pop %v1454
      %v1629 = vtanh.pop %v1459
      %v1630 = vtanh.pop %v1464
      %v1631 = vtanh.pop %v1469
      %v1632 = vtanh.pop %v1474
      %v1633 = vtanh.pop %v1479
      %v1634 = vtanh.pop %v1484
      %v1635 = vtanh.pop %v1489
      %v1636 = vtanh.pop %v1494
      %v1637 = vtanh.pop %v1499
      %v1638 = vtanh.pop %v1504
      %v1639 = vtanh.pop %v1509
      %v1640 = vld [vmem:[%s3] sm:$0xff]
      %v1641 = vld [vmem:[%s3 + $0x8] sm:$0x3]
      %v1642 = vld [vmem:[%s4] sm:$0x1]
      %v1644 = vlaneseq
      %v1645 = vshrl.u32 %v1644, 7
      %v1646 = vsub.s32 0, %v1645
      %v1647 = vrot.slane %v1642, %v1646
      %vm1649 = vcmask 80896
      %v1651 = vsel %vm1649, %v1512, 0
      %v1654 = vsel %vm1649, %v1513, 0
      %v1657 = vsel %vm1649, %v1514, 0
      %v1660 = vsel %vm1649, %v1515, 0
      %v1663 = vsel %vm1649, %v1516, 0
      %v1666 = vsel %vm1649, %v1517, 0
      %v1669 = vsel %vm1649, %v1518, 0
      %v1672 = vsel %vm1649, %v1519, 0
      %v1675 = vsel %vm1649, %v1520, 0
      %v1678 = vsel %vm1649, %v1521, 0
      %v1681 = vsel %vm1649, %v1522, 0
      %v1684 = vsel %vm1649, %v1523, 0
      %v1687 = vsel %vm1649, %v1524, 0
      %v1690 = vsel %vm1649, %v1525, 0
      %v1693 = vsel %vm1649, %v1526, 0
      %v1696 = vsel %vm1649, %v1527, 0
      %v1699 = vsel %vm1649, %v1528, 0
      %v1702 = vsel %vm1649, %v1529, 0
      %v1705 = vsel %vm1649, %v1530, 0
      %v1708 = vsel %vm1649, %v1531, 0
      %v1711 = vsel %vm1649, %v1532, 0
      %v1714 = vsel %vm1649, %v1533, 0
      %v1717 = vsel %vm1649, %v1534, 0
      %v1720 = vsel %vm1649, %v1535, 0
      %v1723 = vsel %vm1649, %v1536, 0
      %v1726 = vsel %vm1649, %v1537, 0
      %v1729 = vsel %vm1649, %v1538, 0
      %v1732 = vsel %vm1649, %v1539, 0
      %v1735 = vsel %vm1649, %v1540, 0
      %v1738 = vsel %vm1649, %v1541, 0
      %v1741 = vsel %vm1649, %v1542, 0
      %v1744 = vsel %vm1649, %v1543, 0
      %v1747 = vsel %vm1649, %v1544, 0
      %v1750 = vsel %vm1649, %v1545, 0
      %v1753 = vsel %vm1649, %v1546, 0
      %v1756 = vsel %vm1649, %v1547, 0
      %v1759 = vsel %vm1649, %v1548, 0
      %v1762 = vsel %vm1649, %v1549, 0
      %v1765 = vsel %vm1649, %v1550, 0
      %v1768 = vsel %vm1649, %v1551, 0
      %v1771 = vsel %vm1649, %v1552, 0
      %v1774 = vsel %vm1649, %v1553, 0
      %v1777 = vsel %vm1649, %v1554, 0
      %v1780 = vsel %vm1649, %v1555, 0
      %v1783 = vsel %vm1649, %v1556, 0
      %v1786 = vsel %vm1649, %v1557, 0
      %v1789 = vsel %vm1649, %v1558, 0
      %v1792 = vsel %vm1649, %v1559, 0
      %v1795 = vsel %vm1649, %v1560, 0
      %v1798 = vsel %vm1649, %v1561, 0
      %v1801 = vsel %vm1649, %v1562, 0
      %v1804 = vsel %vm1649, %v1563, 0
      %v1807 = vsel %vm1649, %v1564, 0
      %v1810 = vsel %vm1649, %v1565, 0
      %v1813 = vsel %vm1649, %v1566, 0
      %v1816 = vsel %vm1649, %v1567, 0
      %v1819 = vsel %vm1649, %v1568, 0
      %v1822 = vsel %vm1649, %v1569, 0
      %v1825 = vsel %vm1649, %v1570, 0
      %v1828 = vsel %vm1649, %v1571, 0
      %v1831 = vsel %vm1649, %v1572, 0
      %v1834 = vsel %vm1649, %v1573, 0
      %v1837 = vsel %vm1649, %v1574, 0
      %v1840 = vsel %vm1649, %v1575, 0
      %v1843 = vsel %vm1649, %v1576, 0
      %v1846 = vsel %vm1649, %v1577, 0
      %v1849 = vsel %vm1649, %v1578, 0
      %v1852 = vsel %vm1649, %v1579, 0
      %v1855 = vsel %vm1649, %v1580, 0
      %v1858 = vsel %vm1649, %v1581, 0
      %v1861 = vsel %vm1649, %v1582, 0
      %v1864 = vsel %vm1649, %v1583, 0
      %v1867 = vsel %vm1649, %v1584, 0
      %v1870 = vsel %vm1649, %v1585, 0
      %v1873 = vsel %vm1649, %v1586, 0
      %v1876 = vsel %vm1649, %v1587, 0
      %v1879 = vsel %vm1649, %v1588, 0
      %v1882 = vsel %vm1649, %v1589, 0
      %v1885 = vsel %vm1649, %v1590, 0
      %v1888 = vsel %vm1649, %v1591, 0
      %v1891 = vsel %vm1649, %v1592, 0
      %v1894 = vsel %vm1649, %v1593, 0
      %v1897 = vsel %vm1649, %v1594, 0
      %v1900 = vsel %vm1649, %v1595, 0
      %v1903 = vsel %vm1649, %v1596, 0
      %v1906 = vsel %vm1649, %v1597, 0
      %v1909 = vsel %vm1649, %v1598, 0
      %v1912 = vsel %vm1649, %v1599, 0
      %v1915 = vsel %vm1649, %v1600, 0
      %v1918 = vsel %vm1649, %v1601, 0
      %v1921 = vsel %vm1649, %v1602, 0
      %v1924 = vsel %vm1649, %v1603, 0
      %v1927 = vsel %vm1649, %v1604, 0
      %v1930 = vsel %vm1649, %v1605, 0
      %v1933 = vsel %vm1649, %v1606, 0
      %v1936 = vsel %vm1649, %v1607, 0
      %v1939 = vsel %vm1649, %v1608, 0
      %v1942 = vsel %vm1649, %v1609, 0
      %v1945 = vsel %vm1649, %v1610, 0
      %v1948 = vsel %vm1649, %v1611, 0
      %v1951 = vsel %vm1649, %v1612, 0
      %v1954 = vsel %vm1649, %v1613, 0
      %v1957 = vsel %vm1649, %v1614, 0
      %v1960 = vsel %vm1649, %v1615, 0
      %v1963 = vsel %vm1649, %v1616, 0
      %v1966 = vsel %vm1649, %v1617, 0
      %v1969 = vsel %vm1649, %v1618, 0
      %v1972 = vsel %vm1649, %v1619, 0
      %v1975 = vsel %vm1649, %v1620, 0
      %v1978 = vsel %vm1649, %v1621, 0
      %v1981 = vsel %vm1649, %v1622, 0
      %v1984 = vsel %vm1649, %v1623, 0
      %v1987 = vsel %vm1649, %v1624, 0
      %v1990 = vsel %vm1649, %v1625, 0
      %v1993 = vsel %vm1649, %v1626, 0
      %v1996 = vsel %vm1649, %v1627, 0
      %v1999 = vsel %vm1649, %v1628, 0
      %v2002 = vsel %vm1649, %v1629, 0
      %v2005 = vsel %vm1649, %v1630, 0
      %v2008 = vsel %vm1649, %v1631, 0
      %v2011 = vsel %vm1649, %v1632, 0
      %v2014 = vsel %vm1649, %v1633, 0
      %v2017 = vsel %vm1649, %v1634, 0
      %v2020 = vsel %vm1649, %v1635, 0
      %v2023 = vsel %vm1649, %v1636, 0
      %v2026 = vsel %vm1649, %v1637, 0
      %v2029 = vsel %vm1649, %v1638, 0
      %v2032 = vsel %vm1649, %v1639, 0
      %vm2034 = vcmask 1041408
      %v2036 = vsel %vm2034, %v1641, 0
      %2038 = vmatprep.subr.mxu0 0.0
      %2039 = vmatpush1.msra.mxu0 %v1640
      %2040 = vmatprep.subr.mxu0 0.0
      %2041 = vmatpush1.msra.mxu0 %v2036
      %2042 = vmatprep.subr.mxu0 0.0
      %2043 = vmatpush1.msra.mxu0 0.0
      %2044 = vmatprep.subr.mxu0 0.0
      %2045 = vmatpush1.msra.mxu0 0.0
      %2046 = vmatprep.subr.mxu0 0.0
      %2047 = vmatpush1.msra.mxu0 0.0
      %2048 = vmatprep.subr.mxu0 0.0
      %2049 = vmatpush1.msra.mxu0 0.0
      %2050 = vmatprep.subr.mxu0 0.0
      %2051 = vmatpush1.msra.mxu0 0.0
      %2052 = vmatprep.subr.mxu0 0.0
      %2053 = vmatpush1.msra.mxu0 0.0
      %2054 = vmatprep.subr.mxu0 0.0
      %2055 = vmatpush1.msra.mxu0 0.0
      %2056 = vmatprep.subr.mxu0 0.0
      %2057 = vmatpush1.msra.mxu0 0.0
      %2058 = vmatprep.subr.mxu0 0.0
      %2059 = vmatpush1.msra.mxu0 0.0
      %2060 = vmatprep.subr.mxu0 0.0
      %2061 = vmatpush1.msra.mxu0 0.0
      %2062 = vmatprep.subr.mxu0 0.0
      %2063 = vmatpush1.msra.mxu0 0.0
      %2064 = vmatprep.subr.mxu0 0.0
      %2065 = vmatpush1.msra.mxu0 0.0
      %2066 = vmatprep.subr.mxu0 0.0
      %2067 = vmatpush1.msra.mxu0 0.0
      %2068 = vmatprep.subr.mxu0 0.0
      %2069 = vmatpush1.msra.mxu0 0.0
      %2070 = vmatprep.subr.mxu0 0.0
      %2071 = vmatpush1.msra.mxu0 0.0
      %2072 = vmatprep.subr.mxu0 0.0
      %2073 = vmatpush1.msra.mxu0 0.0
      %2074 = vmatprep.subr.mxu0 0.0
      %2075 = vmatpush1.msra.mxu0 0.0
      %2076 = vmatprep.subr.mxu0 0.0
      %2077 = vmatpush1.msra.mxu0 0.0
      %2078 = vmatprep.subr.mxu0 0.0
      %2079 = vmatpush1.msra.mxu0 0.0
      %2080 = vmatprep.subr.mxu0 0.0
      %2081 = vmatpush1.msra.mxu0 0.0
      %2082 = vmatprep.subr.mxu0 0.0
      %2083 = vmatpush1.msra.mxu0 0.0
      %2084 = vmatprep.subr.mxu0 0.0
      %2085 = vmatpush1.msra.mxu0 0.0
      %2086 = vmatprep.subr.mxu0 0.0
      %2087 = vmatpush1.msra.mxu0 0.0
      %2088 = vmatprep.subr.mxu0 0.0
      %2089 = vmatpush1.msra.mxu0 0.0
      %2090 = vmatprep.subr.mxu0 0.0
      %2091 = vmatpush1.msra.mxu0 0.0
      %2092 = vmatprep.subr.mxu0 0.0
      %2093 = vmatpush1.msra.mxu0 0.0
      %2094 = vmatprep.subr.mxu0 0.0
      %2095 = vmatpush1.msra.mxu0 0.0
      %2096 = vmatprep.subr.mxu0 0.0
      %2097 = vmatpush1.msra.mxu0 0.0
      %2098 = vmatprep.subr.mxu0 0.0
      %2099 = vmatpush1.msra.mxu0 0.0
      %2100 = vmatprep.subr.mxu0 0.0
      %2101 = vmatpush1.msra.mxu0 0.0
      %2102 = vmatprep.mubr.f32.mxu0 0.0
      %2103 = vmatmul.mubr.f32.gmra.mrb[0].mxu0 %v1651
      %v2104 = vpop.f32.mrb[0].mxu0
      %v2105 = vadd.f32 %v1647, %v2104
      %v2106 = vpop.f32.mrb[0].mxu0
      %2107 = vmatprep.mubr.f32.mxu0 0.0
      %2108 = vmatmul.mubr.f32.gmra.mrb[0].mxu0 %v1654
      %v2109 = vpop.f32.mrb[0].mxu0
      %v2110 = vadd.f32 %v1647, %v2109
      %v2111 = vpop.f32.mrb[0].mxu0
      %2112 = vmatprep.mubr.f32.mxu0 0.0
      %2113 = vmatmul.mubr.f32.gmra.mrb[0].mxu0 %v1657
      %v2114 = vpop.f32.mrb[0].mxu0
      %v2115 = vadd.f32 %v1647, %v2114
      %v2116 = vpop.f32.mrb[0].mxu0
      %2117 = vmatprep.mubr.f32.mxu0 0.0
      %2118 = vmatmul.mubr.f32.gmra.mrb[0].mxu0 %v1660
      %v2119 = vpop.f32.mrb[0].mxu0
      %v2120 = vadd.f32 %v1647, %v2119
      %v2121 = vpop.f32.mrb[0].mxu0
      %2122 = vmatprep.mubr.f32.mxu0 0.0
      %2123 = vmatmul.mubr.f32.gmra.mrb[0].mxu0 %v1663
      %v2124 = vpop.f32.mrb[0].mxu0
      %v2125 = vadd.f32 %v1647, %v2124
      %v2126 = vpop.f32.mrb[0].mxu0
      %2127 = vmatprep.mubr.f32.mxu0 0.0
      %2128 = vmatmul.mubr.f32.gmra.mrb[0].mxu0 %v1666
      %v2129 = vpop.f32.mrb[0].mxu0
      %v2130 = vadd.f32 %v1647, %v2129
      %v2131 = vpop.f32.mrb[0].mxu0
      %2132 = vmatprep.mubr.f32.mxu0 0.0
      %2133 = vmatmul.mubr.f32.gmra.mrb[0].mxu0 %v1669
      %v2134 = vpop.f32.mrb[0].mxu0
      %v2135 = vadd.f32 %v1647, %v2134
      %v2136 = vpop.f32.mrb[0].mxu0
      %2137 = vmatprep.mubr.f32.mxu0 0.0
      %2138 = vmatmul.mubr.f32.gmra.mrb[0].mxu0 %v1672
      %v2139 = vpop.f32.mrb[0].mxu0
      %v2140 = vadd.f32 %v1647, %v2139
      %v2141 = vpop.f32.mrb[0].mxu0
      %2142 = vmatprep.mubr.f32.mxu0 0.0
      %2143 = vmatmul.mubr.f32.gmra.mrb[0].mxu0 %v1675
      %v2144 = vpop.f32.mrb[0].mxu0
      %v2145 = vadd.f32 %v1647, %v2144
      %v2146 = vpop.f32.mrb[0].mxu0
      %2147 = vmatprep.mubr.f32.mxu0 0.0
      %2148 = vmatmul.mubr.f32.gmra.mrb[0].mxu0 %v1678
      %v2149 = vpop.f32.mrb[0].mxu0
      %v2150 = vadd.f32 %v1647, %v2149
      %v2151 = vpop.f32.mrb[0].mxu0
      %2152 = vmatprep.mubr.f32.mxu0 0.0
      %2153 = vmatmul.mubr.f32.gmra.mrb[0].mxu0 %v1681
      %v2154 = vpop.f32.mrb[0].mxu0
      %v2155 = vadd.f32 %v1647, %v2154
      %v2156 = vpop.f32.mrb[0].mxu0
      %2157 = vmatprep.mubr.f32.mxu0 0.0
      %2158 = vmatmul.mubr.f32.gmra.mrb[0].mxu0 %v1684
      %v2159 = vpop.f32.mrb[0].mxu0
      %v2160 = vadd.f32 %v1647, %v2159
      %v2161 = vpop.f32.mrb[0].mxu0
      %2162 = vmatprep.mubr.f32.mxu0 0.0
      %2163 = vmatmul.mubr.f32.gmra.mrb[0].mxu0 %v1687
      %v2164 = vpop.f32.mrb[0].mxu0
      %v2165 = vadd.f32 %v1647, %v2164
      %v2166 = vpop.f32.mrb[0].mxu0
      %2167 = vmatprep.mubr.f32.mxu0 0.0
      %2168 = vmatmul.mubr.f32.gmra.mrb[0].mxu0 %v1690
      %v2169 = vpop.f32.mrb[0].mxu0
      %v2170 = vadd.f32 %v1647, %v2169
      %v2171 = vpop.f32.mrb[0].mxu0
      %2172 = vmatprep.mubr.f32.mxu0 0.0
      %2173 = vmatmul.mubr.f32.gmra.mrb[0].mxu0 %v1693
      %v2174 = vpop.f32.mrb[0].mxu0
      %v2175 = vadd.f32 %v1647, %v2174
      %v2176 = vpop.f32.mrb[0].mxu0
      %2177 = vmatprep.mubr.f32.mxu0 0.0
      %2178 = vmatmul.mubr.f32.gmra.mrb[0].mxu0 %v1696
      %v2179 = vpop.f32.mrb[0].mxu0
      %v2180 = vadd.f32 %v1647, %v2179
      %v2181 = vpop.f32.mrb[0].mxu0
      %2182 = vmatprep.mubr.f32.mxu0 0.0
      %2183 = vmatmul.mubr.f32.gmra.mrb[0].mxu0 %v1699
      %v2184 = vpop.f32.mrb[0].mxu0
      %v2185 = vadd.f32 %v1647, %v2184
      %v2186 = vpop.f32.mrb[0].mxu0
      %2187 = vmatprep.mubr.f32.mxu0 0.0
      %2188 = vmatmul.mubr.f32.gmra.mrb[0].mxu0 %v1702
      %v2189 = vpop.f32.mrb[0].mxu0
      %v2190 = vadd.f32 %v1647, %v2189
      %v2191 = vpop.f32.mrb[0].mxu0
      %2192 = vmatprep.mubr.f32.mxu0 0.0
      %2193 = vmatmul.mubr.f32.gmra.mrb[0].mxu0 %v1705
      %v2194 = vpop.f32.mrb[0].mxu0
      %v2195 = vadd.f32 %v1647, %v2194
      %v2196 = vpop.f32.mrb[0].mxu0
      %2197 = vmatprep.mubr.f32.mxu0 0.0
      %2198 = vmatmul.mubr.f32.gmra.mrb[0].mxu0 %v1708
      %v2199 = vpop.f32.mrb[0].mxu0
      %v2200 = vadd.f32 %v1647, %v2199
      %v2201 = vpop.f32.mrb[0].mxu0
      %2202 = vmatprep.mubr.f32.mxu0 0.0
      %2203 = vmatmul.mubr.f32.gmra.mrb[0].mxu0 %v1711
      %v2204 = vpop.f32.mrb[0].mxu0
      %v2205 = vadd.f32 %v1647, %v2204
      %v2206 = vpop.f32.mrb[0].mxu0
      %2207 = vmatprep.mubr.f32.mxu0 0.0
      %2208 = vmatmul.mubr.f32.gmra.mrb[0].mxu0 %v1714
      %v2209 = vpop.f32.mrb[0].mxu0
      %v2210 = vadd.f32 %v1647, %v2209
      %v2211 = vpop.f32.mrb[0].mxu0
      %2212 = vmatprep.mubr.f32.mxu0 0.0
      %2213 = vmatmul.mubr.f32.gmra.mrb[0].mxu0 %v1717
      %v2214 = vpop.f32.mrb[0].mxu0
      %v2215 = vadd.f32 %v1647, %v2214
      %v2216 = vpop.f32.mrb[0].mxu0
      %2217 = vmatprep.mubr.f32.mxu0 0.0
      %2218 = vmatmul.mubr.f32.gmra.mrb[0].mxu0 %v1720
      %v2219 = vpop.f32.mrb[0].mxu0
      %v2220 = vadd.f32 %v1647, %v2219
      %v2221 = vpop.f32.mrb[0].mxu0
      %2222 = vmatprep.mubr.f32.mxu0 0.0
      %2223 = vmatmul.mubr.f32.gmra.mrb[0].mxu0 %v1723
      %v2224 = vpop.f32.mrb[0].mxu0
      %v2225 = vadd.f32 %v1647, %v2224
      %v2226 = vpop.f32.mrb[0].mxu0
      %2227 = vmatprep.mubr.f32.mxu0 0.0
      %2228 = vmatmul.mubr.f32.gmra.mrb[0].mxu0 %v1726
      %v2229 = vpop.f32.mrb[0].mxu0
      %v2230 = vadd.f32 %v1647, %v2229
      %v2231 = vpop.f32.mrb[0].mxu0
      %2232 = vmatprep.mubr.f32.mxu0 0.0
      %2233 = vmatmul.mubr.f32.gmra.mrb[0].mxu0 %v1729
      %v2234 = vpop.f32.mrb[0].mxu0
      %v2235 = vadd.f32 %v1647, %v2234
      %v2236 = vpop.f32.mrb[0].mxu0
      %2237 = vmatprep.mubr.f32.mxu0 0.0
      %2238 = vmatmul.mubr.f32.gmra.mrb[0].mxu0 %v1732
      %v2239 = vpop.f32.mrb[0].mxu0
      %v2240 = vadd.f32 %v1647, %v2239
      %v2241 = vpop.f32.mrb[0].mxu0
      %2242 = vmatprep.mubr.f32.mxu0 0.0
      %2243 = vmatmul.mubr.f32.gmra.mrb[0].mxu0 %v1735
      %v2244 = vpop.f32.mrb[0].mxu0
      %v2245 = vadd.f32 %v1647, %v2244
      %v2246 = vpop.f32.mrb[0].mxu0
      %2247 = vmatprep.mubr.f32.mxu0 0.0
      %2248 = vmatmul.mubr.f32.gmra.mrb[0].mxu0 %v1738
      %v2249 = vpop.f32.mrb[0].mxu0
      %v2250 = vadd.f32 %v1647, %v2249
      %v2251 = vpop.f32.mrb[0].mxu0
      %2252 = vmatprep.mubr.f32.mxu0 0.0
      %2253 = vmatmul.mubr.f32.gmra.mrb[0].mxu0 %v1741
      %v2254 = vpop.f32.mrb[0].mxu0
      %v2255 = vadd.f32 %v1647, %v2254
      %v2256 = vpop.f32.mrb[0].mxu0
      %2257 = vmatprep.mubr.f32.mxu0 0.0
      %2258 = vmatmul.mubr.f32.gmra.mrb[0].mxu0 %v1744
      %v2259 = vpop.f32.mrb[0].mxu0
      %v2260 = vadd.f32 %v1647, %v2259
      %v2261 = vpop.f32.mrb[0].mxu0
      %2262 = vmatprep.mubr.f32.mxu0 0.0
      %2263 = vmatmul.mubr.f32.gmra.mrb[0].mxu0 %v1747
      %v2264 = vpop.f32.mrb[0].mxu0
      %v2265 = vadd.f32 %v1647, %v2264
      %v2266 = vpop.f32.mrb[0].mxu0
      %2267 = vmatprep.mubr.f32.mxu0 0.0
      %2268 = vmatmul.mubr.f32.gmra.mrb[0].mxu0 %v1750
      %v2269 = vpop.f32.mrb[0].mxu0
      %v2270 = vadd.f32 %v1647, %v2269
      %v2271 = vpop.f32.mrb[0].mxu0
      %2272 = vmatprep.mubr.f32.mxu0 0.0
      %2273 = vmatmul.mubr.f32.gmra.mrb[0].mxu0 %v1753
      %v2274 = vpop.f32.mrb[0].mxu0
      %v2275 = vadd.f32 %v1647, %v2274
      %v2276 = vpop.f32.mrb[0].mxu0
      %2277 = vmatprep.mubr.f32.mxu0 0.0
      %2278 = vmatmul.mubr.f32.gmra.mrb[0].mxu0 %v1756
      %v2279 = vpop.f32.mrb[0].mxu0
      %v2280 = vadd.f32 %v1647, %v2279
      %v2281 = vpop.f32.mrb[0].mxu0
      %2282 = vmatprep.mubr.f32.mxu0 0.0
      %2283 = vmatmul.mubr.f32.gmra.mrb[0].mxu0 %v1759
      %v2284 = vpop.f32.mrb[0].mxu0
      %v2285 = vadd.f32 %v1647, %v2284
      %v2286 = vpop.f32.mrb[0].mxu0
      %2287 = vmatprep.mubr.f32.mxu0 0.0
      %2288 = vmatmul.mubr.f32.gmra.mrb[0].mxu0 %v1762
      %v2289 = vpop.f32.mrb[0].mxu0
      %v2290 = vadd.f32 %v1647, %v2289
      %v2291 = vpop.f32.mrb[0].mxu0
      %2292 = vmatprep.mubr.f32.mxu0 0.0
      %2293 = vmatmul.mubr.f32.gmra.mrb[0].mxu0 %v1765
      %v2294 = vpop.f32.mrb[0].mxu0
      %v2295 = vadd.f32 %v1647, %v2294
      %v2296 = vpop.f32.mrb[0].mxu0
      %2297 = vmatprep.mubr.f32.mxu0 0.0
      %2298 = vmatmul.mubr.f32.gmra.mrb[0].mxu0 %v1768
      %v2299 = vpop.f32.mrb[0].mxu0
      %v2300 = vadd.f32 %v1647, %v2299
      %v2301 = vpop.f32.mrb[0].mxu0
      %2302 = vmatprep.mubr.f32.mxu0 0.0
      %2303 = vmatmul.mubr.f32.gmra.mrb[0].mxu0 %v1771
      %v2304 = vpop.f32.mrb[0].mxu0
      %v2305 = vadd.f32 %v1647, %v2304
      %v2306 = vpop.f32.mrb[0].mxu0
      %2307 = vmatprep.mubr.f32.mxu0 0.0
      %2308 = vmatmul.mubr.f32.gmra.mrb[0].mxu0 %v1774
      %v2309 = vpop.f32.mrb[0].mxu0
      %v2310 = vadd.f32 %v1647, %v2309
      %v2311 = vpop.f32.mrb[0].mxu0
      %2312 = vmatprep.mubr.f32.mxu0 0.0
      %2313 = vmatmul.mubr.f32.gmra.mrb[0].mxu0 %v1777
      %v2314 = vpop.f32.mrb[0].mxu0
      %v2315 = vadd.f32 %v1647, %v2314
      %v2316 = vpop.f32.mrb[0].mxu0
      %2317 = vmatprep.mubr.f32.mxu0 0.0
      %2318 = vmatmul.mubr.f32.gmra.mrb[0].mxu0 %v1780
      %v2319 = vpop.f32.mrb[0].mxu0
      %v2320 = vadd.f32 %v1647, %v2319
      %v2321 = vpop.f32.mrb[0].mxu0
      %2322 = vmatprep.mubr.f32.mxu0 0.0
      %2323 = vmatmul.mubr.f32.gmra.mrb[0].mxu0 %v1783
      %v2324 = vpop.f32.mrb[0].mxu0
      %v2325 = vadd.f32 %v1647, %v2324
      %v2326 = vpop.f32.mrb[0].mxu0
      %2327 = vmatprep.mubr.f32.mxu0 0.0
      %2328 = vmatmul.mubr.f32.gmra.mrb[0].mxu0 %v1786
      %v2329 = vpop.f32.mrb[0].mxu0
      %v2330 = vadd.f32 %v1647, %v2329
      %v2331 = vpop.f32.mrb[0].mxu0
      %2332 = vmatprep.mubr.f32.mxu0 0.0
      %2333 = vmatmul.mubr.f32.gmra.mrb[0].mxu0 %v1789
      %v2334 = vpop.f32.mrb[0].mxu0
      %v2335 = vadd.f32 %v1647, %v2334
      %v2336 = vpop.f32.mrb[0].mxu0
      %2337 = vmatprep.mubr.f32.mxu0 0.0
      %2338 = vmatmul.mubr.f32.gmra.mrb[0].mxu0 %v1792
      %v2339 = vpop.f32.mrb[0].mxu0
      %v2340 = vadd.f32 %v1647, %v2339
      %v2341 = vpop.f32.mrb[0].mxu0
      %2342 = vmatprep.mubr.f32.mxu0 0.0
      %2343 = vmatmul.mubr.f32.gmra.mrb[0].mxu0 %v1795
      %v2344 = vpop.f32.mrb[0].mxu0
      %v2345 = vadd.f32 %v1647, %v2344
      %v2346 = vpop.f32.mrb[0].mxu0
      %2347 = vmatprep.mubr.f32.mxu0 0.0
      %2348 = vmatmul.mubr.f32.gmra.mrb[0].mxu0 %v1798
      %v2349 = vpop.f32.mrb[0].mxu0
      %v2350 = vadd.f32 %v1647, %v2349
      %v2351 = vpop.f32.mrb[0].mxu0
      %2352 = vmatprep.mubr.f32.mxu0 0.0
      %2353 = vmatmul.mubr.f32.gmra.mrb[0].mxu0 %v1801
      %v2354 = vpop.f32.mrb[0].mxu0
      %v2355 = vadd.f32 %v1647, %v2354
      %v2356 = vpop.f32.mrb[0].mxu0
      %2357 = vmatprep.mubr.f32.mxu0 0.0
      %2358 = vmatmul.mubr.f32.gmra.mrb[0].mxu0 %v1804
      %v2359 = vpop.f32.mrb[0].mxu0
      %v2360 = vadd.f32 %v1647, %v2359
      %v2361 = vpop.f32.mrb[0].mxu0
      %2362 = vmatprep.mubr.f32.mxu0 0.0
      %2363 = vmatmul.mubr.f32.gmra.mrb[0].mxu0 %v1807
      %v2364 = vpop.f32.mrb[0].mxu0
      %v2365 = vadd.f32 %v1647, %v2364
      %v2366 = vpop.f32.mrb[0].mxu0
      %2367 = vmatprep.mubr.f32.mxu0 0.0
      %2368 = vmatmul.mubr.f32.gmra.mrb[0].mxu0 %v1810
      %v2369 = vpop.f32.mrb[0].mxu0
      %v2370 = vadd.f32 %v1647, %v2369
      %v2371 = vpop.f32.mrb[0].mxu0
      %2372 = vmatprep.mubr.f32.mxu0 0.0
      %2373 = vmatmul.mubr.f32.gmra.mrb[0].mxu0 %v1813
      %v2374 = vpop.f32.mrb[0].mxu0
      %v2375 = vadd.f32 %v1647, %v2374
      %v2376 = vpop.f32.mrb[0].mxu0
      %2377 = vmatprep.mubr.f32.mxu0 0.0
      %2378 = vmatmul.mubr.f32.gmra.mrb[0].mxu0 %v1816
      %v2379 = vpop.f32.mrb[0].mxu0
      %v2380 = vadd.f32 %v1647, %v2379
      %v2381 = vpop.f32.mrb[0].mxu0
      %2382 = vmatprep.mubr.f32.mxu0 0.0
      %2383 = vmatmul.mubr.f32.gmra.mrb[0].mxu0 %v1819
      %v2384 = vpop.f32.mrb[0].mxu0
      %v2385 = vadd.f32 %v1647, %v2384
      %v2386 = vpop.f32.mrb[0].mxu0
      %2387 = vmatprep.mubr.f32.mxu0 0.0
      %2388 = vmatmul.mubr.f32.gmra.mrb[0].mxu0 %v1822
      %v2389 = vpop.f32.mrb[0].mxu0
      %v2390 = vadd.f32 %v1647, %v2389
      %v2391 = vpop.f32.mrb[0].mxu0
      %2392 = vmatprep.mubr.f32.mxu0 0.0
      %2393 = vmatmul.mubr.f32.gmra.mrb[0].mxu0 %v1825
      %v2394 = vpop.f32.mrb[0].mxu0
      %v2395 = vadd.f32 %v1647, %v2394
      %v2396 = vpop.f32.mrb[0].mxu0
      %2397 = vmatprep.mubr.f32.mxu0 0.0
      %2398 = vmatmul.mubr.f32.gmra.mrb[0].mxu0 %v1828
      %v2399 = vpop.f32.mrb[0].mxu0
      %v2400 = vadd.f32 %v1647, %v2399
      %v2401 = vpop.f32.mrb[0].mxu0
      %2402 = vmatprep.mubr.f32.mxu0 0.0
      %2403 = vmatmul.mubr.f32.gmra.mrb[0].mxu0 %v1831
      %v2404 = vpop.f32.mrb[0].mxu0
      %v2405 = vadd.f32 %v1647, %v2404
      %v2406 = vpop.f32.mrb[0].mxu0
      %2407 = vmatprep.mubr.f32.mxu0 0.0
      %2408 = vmatmul.mubr.f32.gmra.mrb[0].mxu0 %v1834
      %v2409 = vpop.f32.mrb[0].mxu0
      %v2410 = vadd.f32 %v1647, %v2409
      %v2411 = vpop.f32.mrb[0].mxu0
      %2412 = vmatprep.mubr.f32.mxu0 0.0
      %2413 = vmatmul.mubr.f32.gmra.mrb[0].mxu0 %v1837
      %v2414 = vpop.f32.mrb[0].mxu0
      %v2415 = vadd.f32 %v1647, %v2414
      %v2416 = vpop.f32.mrb[0].mxu0
      %2417 = vmatprep.mubr.f32.mxu0 0.0
      %2418 = vmatmul.mubr.f32.gmra.mrb[0].mxu0 %v1840
      %v2419 = vpop.f32.mrb[0].mxu0
      %v2420 = vadd.f32 %v1647, %v2419
      %v2421 = vpop.f32.mrb[0].mxu0
      %2422 = vmatprep.mubr.f32.mxu0 0.0
      %2423 = vmatmul.mubr.f32.gmra.mrb[0].mxu0 %v1843
      %v2424 = vpop.f32.mrb[0].mxu0
      %v2425 = vadd.f32 %v1647, %v2424
      %v2426 = vpop.f32.mrb[0].mxu0
      %2427 = vmatprep.mubr.f32.mxu0 0.0
      %2428 = vmatmul.mubr.f32.gmra.mrb[0].mxu0 %v1846
      %v2429 = vpop.f32.mrb[0].mxu0
      %v2430 = vadd.f32 %v1647, %v2429
      %v2431 = vpop.f32.mrb[0].mxu0
      %2432 = vmatprep.mubr.f32.mxu0 0.0
      %2433 = vmatmul.mubr.f32.gmra.mrb[0].mxu0 %v1849
      %v2434 = vpop.f32.mrb[0].mxu0
      %v2435 = vadd.f32 %v1647, %v2434
      %v2436 = vpop.f32.mrb[0].mxu0
      %2437 = vmatprep.mubr.f32.mxu0 0.0
      %2438 = vmatmul.mubr.f32.gmra.mrb[0].mxu0 %v1852
      %v2439 = vpop.f32.mrb[0].mxu0
      %v2440 = vadd.f32 %v1647, %v2439
      %v2441 = vpop.f32.mrb[0].mxu0
      %2442 = vmatprep.mubr.f32.mxu0 0.0
      %2443 = vmatmul.mubr.f32.gmra.mrb[0].mxu0 %v1855
      %v2444 = vpop.f32.mrb[0].mxu0
      %v2445 = vadd.f32 %v1647, %v2444
      %v2446 = vpop.f32.mrb[0].mxu0
      %2447 = vmatprep.mubr.f32.mxu0 0.0
      %2448 = vmatmul.mubr.f32.gmra.mrb[0].mxu0 %v1858
      %v2449 = vpop.f32.mrb[0].mxu0
      %v2450 = vadd.f32 %v1647, %v2449
      %v2451 = vpop.f32.mrb[0].mxu0
      %2452 = vmatprep.mubr.f32.mxu0 0.0
      %2453 = vmatmul.mubr.f32.gmra.mrb[0].mxu0 %v1861
      %v2454 = vpop.f32.mrb[0].mxu0
      %v2455 = vadd.f32 %v1647, %v2454
      %v2456 = vpop.f32.mrb[0].mxu0
      %2457 = vmatprep.mubr.f32.mxu0 0.0
      %2458 = vmatmul.mubr.f32.gmra.mrb[0].mxu0 %v1864
      %v2459 = vpop.f32.mrb[0].mxu0
      %v2460 = vadd.f32 %v1647, %v2459
      %v2461 = vpop.f32.mrb[0].mxu0
      %2462 = vmatprep.mubr.f32.mxu0 0.0
      %2463 = vmatmul.mubr.f32.gmra.mrb[0].mxu0 %v1867
      %v2464 = vpop.f32.mrb[0].mxu0
      %v2465 = vadd.f32 %v1647, %v2464
      %v2466 = vpop.f32.mrb[0].mxu0
      %2467 = vmatprep.mubr.f32.mxu0 0.0
      %2468 = vmatmul.mubr.f32.gmra.mrb[0].mxu0 %v1870
      %v2469 = vpop.f32.mrb[0].mxu0
      %v2470 = vadd.f32 %v1647, %v2469
      %v2471 = vpop.f32.mrb[0].mxu0
      %2472 = vmatprep.mubr.f32.mxu0 0.0
      %2473 = vmatmul.mubr.f32.gmra.mrb[0].mxu0 %v1873
      %v2474 = vpop.f32.mrb[0].mxu0
      %v2475 = vadd.f32 %v1647, %v2474
      %v2476 = vpop.f32.mrb[0].mxu0
      %2477 = vmatprep.mubr.f32.mxu0 0.0
      %2478 = vmatmul.mubr.f32.gmra.mrb[0].mxu0 %v1876
      %v2479 = vpop.f32.mrb[0].mxu0
      %v2480 = vadd.f32 %v1647, %v2479
      %v2481 = vpop.f32.mrb[0].mxu0
      %2482 = vmatprep.mubr.f32.mxu0 0.0
      %2483 = vmatmul.mubr.f32.gmra.mrb[0].mxu0 %v1879
      %v2484 = vpop.f32.mrb[0].mxu0
      %v2485 = vadd.f32 %v1647, %v2484
      %v2486 = vpop.f32.mrb[0].mxu0
      %2487 = vmatprep.mubr.f32.mxu0 0.0
      %2488 = vmatmul.mubr.f32.gmra.mrb[0].mxu0 %v1882
      %v2489 = vpop.f32.mrb[0].mxu0
      %v2490 = vadd.f32 %v1647, %v2489
      %v2491 = vpop.f32.mrb[0].mxu0
      %2492 = vmatprep.mubr.f32.mxu0 0.0
      %2493 = vmatmul.mubr.f32.gmra.mrb[0].mxu0 %v1885
      %v2494 = vpop.f32.mrb[0].mxu0
      %v2495 = vadd.f32 %v1647, %v2494
      %v2496 = vpop.f32.mrb[0].mxu0
      %2497 = vmatprep.mubr.f32.mxu0 0.0
      %2498 = vmatmul.mubr.f32.gmra.mrb[0].mxu0 %v1888
      %v2499 = vpop.f32.mrb[0].mxu0
      %v2500 = vadd.f32 %v1647, %v2499
      %v2501 = vpop.f32.mrb[0].mxu0
      %2502 = vmatprep.mubr.f32.mxu0 0.0
      %2503 = vmatmul.mubr.f32.gmra.mrb[0].mxu0 %v1891
      %v2504 = vpop.f32.mrb[0].mxu0
      %v2505 = vadd.f32 %v1647, %v2504
      %v2506 = vpop.f32.mrb[0].mxu0
      %2507 = vmatprep.mubr.f32.mxu0 0.0
      %2508 = vmatmul.mubr.f32.gmra.mrb[0].mxu0 %v1894
      %v2509 = vpop.f32.mrb[0].mxu0
      %v2510 = vadd.f32 %v1647, %v2509
      %v2511 = vpop.f32.mrb[0].mxu0
      %2512 = vmatprep.mubr.f32.mxu0 0.0
      %2513 = vmatmul.mubr.f32.gmra.mrb[0].mxu0 %v1897
      %v2514 = vpop.f32.mrb[0].mxu0
      %v2515 = vadd.f32 %v1647, %v2514
      %v2516 = vpop.f32.mrb[0].mxu0
      %2517 = vmatprep.mubr.f32.mxu0 0.0
      %2518 = vmatmul.mubr.f32.gmra.mrb[0].mxu0 %v1900
      %v2519 = vpop.f32.mrb[0].mxu0
      %v2520 = vadd.f32 %v1647, %v2519
      %v2521 = vpop.f32.mrb[0].mxu0
      %2522 = vmatprep.mubr.f32.mxu0 0.0
      %2523 = vmatmul.mubr.f32.gmra.mrb[0].mxu0 %v1903
      %v2524 = vpop.f32.mrb[0].mxu0
      %v2525 = vadd.f32 %v1647, %v2524
      %v2526 = vpop.f32.mrb[0].mxu0
      %2527 = vmatprep.mubr.f32.mxu0 0.0
      %2528 = vmatmul.mubr.f32.gmra.mrb[0].mxu0 %v1906
      %v2529 = vpop.f32.mrb[0].mxu0
      %v2530 = vadd.f32 %v1647, %v2529
      %v2531 = vpop.f32.mrb[0].mxu0
      %2532 = vmatprep.mubr.f32.mxu0 0.0
      %2533 = vmatmul.mubr.f32.gmra.mrb[0].mxu0 %v1909
      %v2534 = vpop.f32.mrb[0].mxu0
      %v2535 = vadd.f32 %v1647, %v2534
      %v2536 = vpop.f32.mrb[0].mxu0
      %2537 = vmatprep.mubr.f32.mxu0 0.0
      %2538 = vmatmul.mubr.f32.gmra.mrb[0].mxu0 %v1912
      %v2539 = vpop.f32.mrb[0].mxu0
      %v2540 = vadd.f32 %v1647, %v2539
      %v2541 = vpop.f32.mrb[0].mxu0
      %2542 = vmatprep.mubr.f32.mxu0 0.0
      %2543 = vmatmul.mubr.f32.gmra.mrb[0].mxu0 %v1915
      %v2544 = vpop.f32.mrb[0].mxu0
      %v2545 = vadd.f32 %v1647, %v2544
      %v2546 = vpop.f32.mrb[0].mxu0
      %2547 = vmatprep.mubr.f32.mxu0 0.0
      %2548 = vmatmul.mubr.f32.gmra.mrb[0].mxu0 %v1918
      %v2549 = vpop.f32.mrb[0].mxu0
      %v2550 = vadd.f32 %v1647, %v2549
      %v2551 = vpop.f32.mrb[0].mxu0
      %2552 = vmatprep.mubr.f32.mxu0 0.0
      %2553 = vmatmul.mubr.f32.gmra.mrb[0].mxu0 %v1921
      %v2554 = vpop.f32.mrb[0].mxu0
      %v2555 = vadd.f32 %v1647, %v2554
      %v2556 = vpop.f32.mrb[0].mxu0
      %2557 = vmatprep.mubr.f32.mxu0 0.0
      %2558 = vmatmul.mubr.f32.gmra.mrb[0].mxu0 %v1924
      %v2559 = vpop.f32.mrb[0].mxu0
      %v2560 = vadd.f32 %v1647, %v2559
      %v2561 = vpop.f32.mrb[0].mxu0
      %2562 = vmatprep.mubr.f32.mxu0 0.0
      %2563 = vmatmul.mubr.f32.gmra.mrb[0].mxu0 %v1927
      %v2564 = vpop.f32.mrb[0].mxu0
      %v2565 = vadd.f32 %v1647, %v2564
      %v2566 = vpop.f32.mrb[0].mxu0
      %2567 = vmatprep.mubr.f32.mxu0 0.0
      %2568 = vmatmul.mubr.f32.gmra.mrb[0].mxu0 %v1930
      %v2569 = vpop.f32.mrb[0].mxu0
      %v2570 = vadd.f32 %v1647, %v2569
      %v2571 = vpop.f32.mrb[0].mxu0
      %2572 = vmatprep.mubr.f32.mxu0 0.0
      %2573 = vmatmul.mubr.f32.gmra.mrb[0].mxu0 %v1933
      %v2574 = vpop.f32.mrb[0].mxu0
      %v2575 = vadd.f32 %v1647, %v2574
      %v2576 = vpop.f32.mrb[0].mxu0
      %2577 = vmatprep.mubr.f32.mxu0 0.0
      %2578 = vmatmul.mubr.f32.gmra.mrb[0].mxu0 %v1936
      %v2579 = vpop.f32.mrb[0].mxu0
      %v2580 = vadd.f32 %v1647, %v2579
      %v2581 = vpop.f32.mrb[0].mxu0
      %2582 = vmatprep.mubr.f32.mxu0 0.0
      %2583 = vmatmul.mubr.f32.gmra.mrb[0].mxu0 %v1939
      %v2584 = vpop.f32.mrb[0].mxu0
      %v2585 = vadd.f32 %v1647, %v2584
      %v2586 = vpop.f32.mrb[0].mxu0
      %2587 = vmatprep.mubr.f32.mxu0 0.0
      %2588 = vmatmul.mubr.f32.gmra.mrb[0].mxu0 %v1942
      %v2589 = vpop.f32.mrb[0].mxu0
      %v2590 = vadd.f32 %v1647, %v2589
      %v2591 = vpop.f32.mrb[0].mxu0
      %2592 = vmatprep.mubr.f32.mxu0 0.0
      %2593 = vmatmul.mubr.f32.gmra.mrb[0].mxu0 %v1945
      %v2594 = vpop.f32.mrb[0].mxu0
      %v2595 = vadd.f32 %v1647, %v2594
      %v2596 = vpop.f32.mrb[0].mxu0
      %2597 = vmatprep.mubr.f32.mxu0 0.0
      %2598 = vmatmul.mubr.f32.gmra.mrb[0].mxu0 %v1948
      %v2599 = vpop.f32.mrb[0].mxu0
      %v2600 = vadd.f32 %v1647, %v2599
      %v2601 = vpop.f32.mrb[0].mxu0
      %2602 = vmatprep.mubr.f32.mxu0 0.0
      %2603 = vmatmul.mubr.f32.gmra.mrb[0].mxu0 %v1951
      %v2604 = vpop.f32.mrb[0].mxu0
      %v2605 = vadd.f32 %v1647, %v2604
      %v2606 = vpop.f32.mrb[0].mxu0
      %2607 = vmatprep.mubr.f32.mxu0 0.0
      %2608 = vmatmul.mubr.f32.gmra.mrb[0].mxu0 %v1954
      %v2609 = vpop.f32.mrb[0].mxu0
      %v2610 = vadd.f32 %v1647, %v2609
      %v2611 = vpop.f32.mrb[0].mxu0
      %2612 = vmatprep.mubr.f32.mxu0 0.0
      %2613 = vmatmul.mubr.f32.gmra.mrb[0].mxu0 %v1957
      %v2614 = vpop.f32.mrb[0].mxu0
      %v2615 = vadd.f32 %v1647, %v2614
      %v2616 = vpop.f32.mrb[0].mxu0
      %2617 = vmatprep.mubr.f32.mxu0 0.0
      %2618 = vmatmul.mubr.f32.gmra.mrb[0].mxu0 %v1960
      %v2619 = vpop.f32.mrb[0].mxu0
      %v2620 = vadd.f32 %v1647, %v2619
      %v2621 = vpop.f32.mrb[0].mxu0
      %2622 = vmatprep.mubr.f32.mxu0 0.0
      %2623 = vmatmul.mubr.f32.gmra.mrb[0].mxu0 %v1963
      %v2624 = vpop.f32.mrb[0].mxu0
      %v2625 = vadd.f32 %v1647, %v2624
      %v2626 = vpop.f32.mrb[0].mxu0
      %2627 = vmatprep.mubr.f32.mxu0 0.0
      %2628 = vmatmul.mubr.f32.gmra.mrb[0].mxu0 %v1966
      %v2629 = vpop.f32.mrb[0].mxu0
      %v2630 = vadd.f32 %v1647, %v2629
      %v2631 = vpop.f32.mrb[0].mxu0
      %2632 = vmatprep.mubr.f32.mxu0 0.0
      %2633 = vmatmul.mubr.f32.gmra.mrb[0].mxu0 %v1969
      %v2634 = vpop.f32.mrb[0].mxu0
      %v2635 = vadd.f32 %v1647, %v2634
      %v2636 = vpop.f32.mrb[0].mxu0
      %2637 = vmatprep.mubr.f32.mxu0 0.0
      %2638 = vmatmul.mubr.f32.gmra.mrb[0].mxu0 %v1972
      %v2639 = vpop.f32.mrb[0].mxu0
      %v2640 = vadd.f32 %v1647, %v2639
      %v2641 = vpop.f32.mrb[0].mxu0
      %2642 = vmatprep.mubr.f32.mxu0 0.0
      %2643 = vmatmul.mubr.f32.gmra.mrb[0].mxu0 %v1975
      %v2644 = vpop.f32.mrb[0].mxu0
      %v2645 = vadd.f32 %v1647, %v2644
      %v2646 = vpop.f32.mrb[0].mxu0
      %2647 = vmatprep.mubr.f32.mxu0 0.0
      %2648 = vmatmul.mubr.f32.gmra.mrb[0].mxu0 %v1978
      %v2649 = vpop.f32.mrb[0].mxu0
      %v2650 = vadd.f32 %v1647, %v2649
      %v2651 = vpop.f32.mrb[0].mxu0
      %2652 = vmatprep.mubr.f32.mxu0 0.0
      %2653 = vmatmul.mubr.f32.gmra.mrb[0].mxu0 %v1981
      %v2654 = vpop.f32.mrb[0].mxu0
      %v2655 = vadd.f32 %v1647, %v2654
      %v2656 = vpop.f32.mrb[0].mxu0
      %2657 = vmatprep.mubr.f32.mxu0 0.0
      %2658 = vmatmul.mubr.f32.gmra.mrb[0].mxu0 %v1984
      %v2659 = vpop.f32.mrb[0].mxu0
      %v2660 = vadd.f32 %v1647, %v2659
      %v2661 = vpop.f32.mrb[0].mxu0
      %2662 = vmatprep.mubr.f32.mxu0 0.0
      %2663 = vmatmul.mubr.f32.gmra.mrb[0].mxu0 %v1987
      %v2664 = vpop.f32.mrb[0].mxu0
      %v2665 = vadd.f32 %v1647, %v2664
      %v2666 = vpop.f32.mrb[0].mxu0
      %2667 = vmatprep.mubr.f32.mxu0 0.0
      %2668 = vmatmul.mubr.f32.gmra.mrb[0].mxu0 %v1990
      %v2669 = vpop.f32.mrb[0].mxu0
      %v2670 = vadd.f32 %v1647, %v2669
      %v2671 = vpop.f32.mrb[0].mxu0
      %2672 = vmatprep.mubr.f32.mxu0 0.0
      %2673 = vmatmul.mubr.f32.gmra.mrb[0].mxu0 %v1993
      %v2674 = vpop.f32.mrb[0].mxu0
      %v2675 = vadd.f32 %v1647, %v2674
      %v2676 = vpop.f32.mrb[0].mxu0
      %2677 = vmatprep.mubr.f32.mxu0 0.0
      %2678 = vmatmul.mubr.f32.gmra.mrb[0].mxu0 %v1996
      %v2679 = vpop.f32.mrb[0].mxu0
      %v2680 = vadd.f32 %v1647, %v2679
      %v2681 = vpop.f32.mrb[0].mxu0
      %2682 = vmatprep.mubr.f32.mxu0 0.0
      %2683 = vmatmul.mubr.f32.gmra.mrb[0].mxu0 %v1999
      %v2684 = vpop.f32.mrb[0].mxu0
      %v2685 = vadd.f32 %v1647, %v2684
      %v2686 = vpop.f32.mrb[0].mxu0
      %2687 = vmatprep.mubr.f32.mxu0 0.0
      %2688 = vmatmul.mubr.f32.gmra.mrb[0].mxu0 %v2002
      %v2689 = vpop.f32.mrb[0].mxu0
      %v2690 = vadd.f32 %v1647, %v2689
      %v2691 = vpop.f32.mrb[0].mxu0
      %2692 = vmatprep.mubr.f32.mxu0 0.0
      %2693 = vmatmul.mubr.f32.gmra.mrb[0].mxu0 %v2005
      %v2694 = vpop.f32.mrb[0].mxu0
      %v2695 = vadd.f32 %v1647, %v2694
      %v2696 = vpop.f32.mrb[0].mxu0
      %2697 = vmatprep.mubr.f32.mxu0 0.0
      %2698 = vmatmul.mubr.f32.gmra.mrb[0].mxu0 %v2008
      %v2699 = vpop.f32.mrb[0].mxu0
      %v2700 = vadd.f32 %v1647, %v2699
      %v2701 = vpop.f32.mrb[0].mxu0
      %2702 = vmatprep.mubr.f32.mxu0 0.0
      %2703 = vmatmul.mubr.f32.gmra.mrb[0].mxu0 %v2011
      %v2704 = vpop.f32.mrb[0].mxu0
      %v2705 = vadd.f32 %v1647, %v2704
      %v2706 = vpop.f32.mrb[0].mxu0
      %2707 = vmatprep.mubr.f32.mxu0 0.0
      %2708 = vmatmul.mubr.f32.gmra.mrb[0].mxu0 %v2014
      %v2709 = vpop.f32.mrb[0].mxu0
      %v2710 = vadd.f32 %v1647, %v2709
      %v2711 = vpop.f32.mrb[0].mxu0
      %2712 = vmatprep.mubr.f32.mxu0 0.0
      %2713 = vmatmul.mubr.f32.gmra.mrb[0].mxu0 %v2017
      %v2714 = vpop.f32.mrb[0].mxu0
      %v2715 = vadd.f32 %v1647, %v2714
      %v2716 = vpop.f32.mrb[0].mxu0
      %2717 = vmatprep.mubr.f32.mxu0 0.0
      %2718 = vmatmul.mubr.f32.gmra.mrb[0].mxu0 %v2020
      %v2719 = vpop.f32.mrb[0].mxu0
      %v2720 = vadd.f32 %v1647, %v2719
      %v2721 = vpop.f32.mrb[0].mxu0
      %2722 = vmatprep.mubr.f32.mxu0 0.0
      %2723 = vmatmul.mubr.f32.gmra.mrb[0].mxu0 %v2023
      %v2724 = vpop.f32.mrb[0].mxu0
      %v2725 = vadd.f32 %v1647, %v2724
      %v2726 = vpop.f32.mrb[0].mxu0
      %2727 = vmatprep.mubr.f32.mxu0 0.0
      %2728 = vmatmul.mubr.f32.gmra.mrb[0].mxu0 %v2026
      %v2729 = vpop.f32.mrb[0].mxu0
      %v2730 = vadd.f32 %v1647, %v2729
      %v2731 = vpop.f32.mrb[0].mxu0
      %2732 = vmatprep.mubr.f32.mxu0 0.0
      %2733 = vmatmul.mubr.f32.gmra.mrb[0].mxu0 %v2029
      %v2734 = vpop.f32.mrb[0].mxu0
      %v2735 = vadd.f32 %v1647, %v2734
      %v2736 = vpop.f32.mrb[0].mxu0
      %2737 = vmatprep.mubr.f32.mxu0 0.0
      %2738 = vmatmul.mubr.f32.gmra.mrb[0].mxu0 %v2032
      %v2739 = vpop.f32.mrb[0].mxu0
      %v2740 = vadd.f32 %v1647, %v2739
      %v2741 = vpop.f32.mrb[0].mxu0
      %2742 = vdwg.mxu0
      %v2743 = vtanh.pop %v2105
      %v2744 = vtanh.pop %v2110
      %v2745 = vtanh.pop %v2115
      %v2746 = vtanh.pop %v2120
      %v2747 = vtanh.pop %v2125
      %v2748 = vtanh.pop %v2130
      %v2749 = vtanh.pop %v2135
      %v2750 = vtanh.pop %v2140
      %v2751 = vtanh.pop %v2145
      %v2752 = vtanh.pop %v2150
      %v2753 = vtanh.pop %v2155
      %v2754 = vtanh.pop %v2160
      %v2755 = vtanh.pop %v2165
      %v2756 = vtanh.pop %v2170
      %v2757 = vtanh.pop %v2175
      %v2758 = vtanh.pop %v2180
      %v2759 = vtanh.pop %v2185
      %v2760 = vtanh.pop %v2190
      %v2761 = vtanh.pop %v2195
      %v2762 = vtanh.pop %v2200
      %v2763 = vtanh.pop %v2205
      %v2764 = vtanh.pop %v2210
      %v2765 = vtanh.pop %v2215
      %v2766 = vtanh.pop %v2220
      %v2767 = vtanh.pop %v2225
      %v2768 = vtanh.pop %v2230
      %v2769 = vtanh.pop %v2235
      %v2770 = vtanh.pop %v2240
      %v2771 = vtanh.pop %v2245
      %v2772 = vtanh.pop %v2250
      %v2773 = vtanh.pop %v2255
      %v2774 = vtanh.pop %v2260
      %v2775 = vtanh.pop %v2265
      %v2776 = vtanh.pop %v2270
      %v2777 = vtanh.pop %v2275
      %v2778 = vtanh.pop %v2280
      %v2779 = vtanh.pop %v2285
      %v2780 = vtanh.pop %v2290
      %v2781 = vtanh.pop %v2295
      %v2782 = vtanh.pop %v2300
      %v2783 = vtanh.pop %v2305
      %v2784 = vtanh.pop %v2310
      %v2785 = vtanh.pop %v2315
      %v2786 = vtanh.pop %v2320
      %v2787 = vtanh.pop %v2325
      %v2788 = vtanh.pop %v2330
      %v2789 = vtanh.pop %v2335
      %v2790 = vtanh.pop %v2340
      %v2791 = vtanh.pop %v2345
      %v2792 = vtanh.pop %v2350
      %v2793 = vtanh.pop %v2355
      %v2794 = vtanh.pop %v2360
      %v2795 = vtanh.pop %v2365
      %v2796 = vtanh.pop %v2370
      %v2797 = vtanh.pop %v2375
      %v2798 = vtanh.pop %v2380
      %v2799 = vtanh.pop %v2385
      %v2800 = vtanh.pop %v2390
      %v2801 = vtanh.pop %v2395
      %v2802 = vtanh.pop %v2400
      %v2803 = vtanh.pop %v2405
      %v2804 = vtanh.pop %v2410
      %v2805 = vtanh.pop %v2415
      %v2806 = vtanh.pop %v2420
      %v2807 = vtanh.pop %v2425
      %v2808 = vtanh.pop %v2430
      %v2809 = vtanh.pop %v2435
      %v2810 = vtanh.pop %v2440
      %v2811 = vtanh.pop %v2445
      %v2812 = vtanh.pop %v2450
      %v2813 = vtanh.pop %v2455
      %v2814 = vtanh.pop %v2460
      %v2815 = vtanh.pop %v2465
      %v2816 = vtanh.pop %v2470
      %v2817 = vtanh.pop %v2475
      %v2818 = vtanh.pop %v2480
      %v2819 = vtanh.pop %v2485
      %v2820 = vtanh.pop %v2490
      %v2821 = vtanh.pop %v2495
      %v2822 = vtanh.pop %v2500
      %v2823 = vtanh.pop %v2505
      %v2824 = vtanh.pop %v2510
      %v2825 = vtanh.pop %v2515
      %v2826 = vtanh.pop %v2520
      %v2827 = vtanh.pop %v2525
      %v2828 = vtanh.pop %v2530
      %v2829 = vtanh.pop %v2535
      %v2830 = vtanh.pop %v2540
      %v2831 = vtanh.pop %v2545
      %v2832 = vtanh.pop %v2550
      %v2833 = vtanh.pop %v2555
      %v2834 = vtanh.pop %v2560
      %v2835 = vtanh.pop %v2565
      %v2836 = vtanh.pop %v2570
      %v2837 = vtanh.pop %v2575
      %v2838 = vtanh.pop %v2580
      %v2839 = vtanh.pop %v2585
      %v2840 = vtanh.pop %v2590
      %v2841 = vtanh.pop %v2595
      %v2842 = vtanh.pop %v2600
      %v2843 = vtanh.pop %v2605
      %v2844 = vtanh.pop %v2610
      %v2845 = vtanh.pop %v2615
      %v2846 = vtanh.pop %v2620
      %v2847 = vtanh.pop %v2625
      %v2848 = vtanh.pop %v2630
      %v2849 = vtanh.pop %v2635
      %v2850 = vtanh.pop %v2640
      %v2851 = vtanh.pop %v2645
      %v2852 = vtanh.pop %v2650
      %v2853 = vtanh.pop %v2655
      %v2854 = vtanh.pop %v2660
      %v2855 = vtanh.pop %v2665
      %v2856 = vtanh.pop %v2670
      %v2857 = vtanh.pop %v2675
      %v2858 = vtanh.pop %v2680
      %v2859 = vtanh.pop %v2685
      %v2860 = vtanh.pop %v2690
      %v2861 = vtanh.pop %v2695
      %v2862 = vtanh.pop %v2700
      %v2863 = vtanh.pop %v2705
      %v2864 = vtanh.pop %v2710
      %v2865 = vtanh.pop %v2715
      %v2866 = vtanh.pop %v2720
      %v2867 = vtanh.pop %v2725
      %v2868 = vtanh.pop %v2730
      %v2869 = vtanh.pop %v2735
      %v2870 = vtanh.pop %v2740
      %v2871 = vld [vmem:[%s5] sm:$0xff]
      %v2872 = vld [vmem:[%s5 + $0x8] sm:$0x3]
      %v2873 = vld [vmem:[%s6] sm:$0x1]
      %v2875 = vlaneseq
      %v2876 = vshrl.u32 %v2875, 7
      %v2877 = vsub.s32 0, %v2876
      %v2878 = vrot.slane %v2873, %v2877
      %v2881 = vsel %vm1649, %v2743, 0
      %v2884 = vsel %vm1649, %v2744, 0
      %v2887 = vsel %vm1649, %v2745, 0
      %v2890 = vsel %vm1649, %v2746, 0
      %v2893 = vsel %vm1649, %v2747, 0
      %v2896 = vsel %vm1649, %v2748, 0
      %v2899 = vsel %vm1649, %v2749, 0
      %v2902 = vsel %vm1649, %v2750, 0
      %v2905 = vsel %vm1649, %v2751, 0
      %v2908 = vsel %vm1649, %v2752, 0
      %v2911 = vsel %vm1649, %v2753, 0
      %v2914 = vsel %vm1649, %v2754, 0
      %v2917 = vsel %vm1649, %v2755, 0
      %v2920 = vsel %vm1649, %v2756, 0
      %v2923 = vsel %vm1649, %v2757, 0
      %v2926 = vsel %vm1649, %v2758, 0
      %v2929 = vsel %vm1649, %v2759, 0
      %v2932 = vsel %vm1649, %v2760, 0
      %v2935 = vsel %vm1649, %v2761, 0
      %v2938 = vsel %vm1649, %v2762, 0
      %v2941 = vsel %vm1649, %v2763, 0
      %v2944 = vsel %vm1649, %v2764, 0
      %v2947 = vsel %vm1649, %v2765, 0
      %v2950 = vsel %vm1649, %v2766, 0
      %v2953 = vsel %vm1649, %v2767, 0
      %v2956 = vsel %vm1649, %v2768, 0
      %v2959 = vsel %vm1649, %v2769, 0
      %v2962 = vsel %vm1649, %v2770, 0
      %v2965 = vsel %vm1649, %v2771, 0
      %v2968 = vsel %vm1649, %v2772, 0
      %v2971 = vsel %vm1649, %v2773, 0
      %v2974 = vsel %vm1649, %v2774, 0
      %v2977 = vsel %vm1649, %v2775, 0
      %v2980 = vsel %vm1649, %v2776, 0
      %v2983 = vsel %vm1649, %v2777, 0
      %v2986 = vsel %vm1649, %v2778, 0
      %v2989 = vsel %vm1649, %v2779, 0
      %v2992 = vsel %vm1649, %v2780, 0
      %v2995 = vsel %vm1649, %v2781, 0
      %v2998 = vsel %vm1649, %v2782, 0
      %v3001 = vsel %vm1649, %v2783, 0
      %v3004 = vsel %vm1649, %v2784, 0
      %v3007 = vsel %vm1649, %v2785, 0
      %v3010 = vsel %vm1649, %v2786, 0
      %v3013 = vsel %vm1649, %v2787, 0
      %v3016 = vsel %vm1649, %v2788, 0
      %v3019 = vsel %vm1649, %v2789, 0
      %v3022 = vsel %vm1649, %v2790, 0
      %v3025 = vsel %vm1649, %v2791, 0
      %v3028 = vsel %vm1649, %v2792, 0
      %v3031 = vsel %vm1649, %v2793, 0
      %v3034 = vsel %vm1649, %v2794, 0
      %v3037 = vsel %vm1649, %v2795, 0
      %v3040 = vsel %vm1649, %v2796, 0
      %v3043 = vsel %vm1649, %v2797, 0
      %v3046 = vsel %vm1649, %v2798, 0
      %v3049 = vsel %vm1649, %v2799, 0
      %v3052 = vsel %vm1649, %v2800, 0
      %v3055 = vsel %vm1649, %v2801, 0
      %v3058 = vsel %vm1649, %v2802, 0
      %v3061 = vsel %vm1649, %v2803, 0
      %v3064 = vsel %vm1649, %v2804, 0
      %v3067 = vsel %vm1649, %v2805, 0
      %v3070 = vsel %vm1649, %v2806, 0
      %v3073 = vsel %vm1649, %v2807, 0
      %v3076 = vsel %vm1649, %v2808, 0
      %v3079 = vsel %vm1649, %v2809, 0
      %v3082 = vsel %vm1649, %v2810, 0
      %v3085 = vsel %vm1649, %v2811, 0
      %v3088 = vsel %vm1649, %v2812, 0
      %v3091 = vsel %vm1649, %v2813, 0
      %v3094 = vsel %vm1649, %v2814, 0
      %v3097 = vsel %vm1649, %v2815, 0
      %v3100 = vsel %vm1649, %v2816, 0
      %v3103 = vsel %vm1649, %v2817, 0
      %v3106 = vsel %vm1649, %v2818, 0
      %v3109 = vsel %vm1649, %v2819, 0
      %v3112 = vsel %vm1649, %v2820, 0
      %v3115 = vsel %vm1649, %v2821, 0
      %v3118 = vsel %vm1649, %v2822, 0
      %v3121 = vsel %vm1649, %v2823, 0
      %v3124 = vsel %vm1649, %v2824, 0
      %v3127 = vsel %vm1649, %v2825, 0
      %v3130 = vsel %vm1649, %v2826, 0
      %v3133 = vsel %vm1649, %v2827, 0
      %v3136 = vsel %vm1649, %v2828, 0
      %v3139 = vsel %vm1649, %v2829, 0
      %v3142 = vsel %vm1649, %v2830, 0
      %v3145 = vsel %vm1649, %v2831, 0
      %v3148 = vsel %vm1649, %v2832, 0
      %v3151 = vsel %vm1649, %v2833, 0
      %v3154 = vsel %vm1649, %v2834, 0
      %v3157 = vsel %vm1649, %v2835, 0
      %v3160 = vsel %vm1649, %v2836, 0
      %v3163 = vsel %vm1649, %v2837, 0
      %v3166 = vsel %vm1649, %v2838, 0
      %v3169 = vsel %vm1649, %v2839, 0
      %v3172 = vsel %vm1649, %v2840, 0
      %v3175 = vsel %vm1649, %v2841, 0
      %v3178 = vsel %vm1649, %v2842, 0
      %v3181 = vsel %vm1649, %v2843, 0
      %v3184 = vsel %vm1649, %v2844, 0
      %v3187 = vsel %vm1649, %v2845, 0
      %v3190 = vsel %vm1649, %v2846, 0
      %v3193 = vsel %vm1649, %v2847, 0
      %v3196 = vsel %vm1649, %v2848, 0
      %v3199 = vsel %vm1649, %v2849, 0
      %v3202 = vsel %vm1649, %v2850, 0
      %v3205 = vsel %vm1649, %v2851, 0
      %v3208 = vsel %vm1649, %v2852, 0
      %v3211 = vsel %vm1649, %v2853, 0
      %v3214 = vsel %vm1649, %v2854, 0
      %v3217 = vsel %vm1649, %v2855, 0
      %v3220 = vsel %vm1649, %v2856, 0
      %v3223 = vsel %vm1649, %v2857, 0
      %v3226 = vsel %vm1649, %v2858, 0
      %v3229 = vsel %vm1649, %v2859, 0
      %v3232 = vsel %vm1649, %v2860, 0
      %v3235 = vsel %vm1649, %v2861, 0
      %v3238 = vsel %vm1649, %v2862, 0
      %v3241 = vsel %vm1649, %v2863, 0
      %v3244 = vsel %vm1649, %v2864, 0
      %v3247 = vsel %vm1649, %v2865, 0
      %v3250 = vsel %vm1649, %v2866, 0
      %v3253 = vsel %vm1649, %v2867, 0
      %v3256 = vsel %vm1649, %v2868, 0
      %v3259 = vsel %vm1649, %v2869, 0
      %v3262 = vsel %vm1649, %v2870, 0
      %v3265 = vsel %vm2034, %v2872, 0
      %3267 = vmatprep.subr.mxu0 0.0
      %3268 = vmatpush1.msra.mxu0 %v2871
      %3269 = vmatprep.subr.mxu0 0.0
      %3270 = vmatpush1.msra.mxu0 %v3265
      %3271 = vmatprep.subr.mxu0 0.0
      %3272 = vmatpush1.msra.mxu0 0.0
      %3273 = vmatprep.subr.mxu0 0.0
      %3274 = vmatpush1.msra.mxu0 0.0
      %3275 = vmatprep.subr.mxu0 0.0
      %3276 = vmatpush1.msra.mxu0 0.0
      %3277 = vmatprep.subr.mxu0 0.0
      %3278 = vmatpush1.msra.mxu0 0.0
      %3279 = vmatprep.subr.mxu0 0.0
      %3280 = vmatpush1.msra.mxu0 0.0
      %3281 = vmatprep.subr.mxu0 0.0
      %3282 = vmatpush1.msra.mxu0 0.0
      %3283 = vmatprep.subr.mxu0 0.0
      %3284 = vmatpush1.msra.mxu0 0.0
      %3285 = vmatprep.subr.mxu0 0.0
      %3286 = vmatpush1.msra.mxu0 0.0
      %3287 = vmatprep.subr.mxu0 0.0
      %3288 = vmatpush1.msra.mxu0 0.0
      %3289 = vmatprep.subr.mxu0 0.0
      %3290 = vmatpush1.msra.mxu0 0.0
      %3291 = vmatprep.subr.mxu0 0.0
      %3292 = vmatpush1.msra.mxu0 0.0
      %3293 = vmatprep.subr.mxu0 0.0
      %3294 = vmatpush1.msra.mxu0 0.0
      %3295 = vmatprep.subr.mxu0 0.0
      %3296 = vmatpush1.msra.mxu0 0.0
      %3297 = vmatprep.subr.mxu0 0.0
      %3298 = vmatpush1.msra.mxu0 0.0
      %3299 = vmatprep.subr.mxu0 0.0
      %3300 = vmatpush1.msra.mxu0 0.0
      %3301 = vmatprep.subr.mxu0 0.0
      %3302 = vmatpush1.msra.mxu0 0.0
      %3303 = vmatprep.subr.mxu0 0.0
      %3304 = vmatpush1.msra.mxu0 0.0
      %3305 = vmatprep.subr.mxu0 0.0
      %3306 = vmatpush1.msra.mxu0 0.0
      %3307 = vmatprep.subr.mxu0 0.0
      %3308 = vmatpush1.msra.mxu0 0.0
      %3309 = vmatprep.subr.mxu0 0.0
      %3310 = vmatpush1.msra.mxu0 0.0
      %3311 = vmatprep.subr.mxu0 0.0
      %3312 = vmatpush1.msra.mxu0 0.0
      %3313 = vmatprep.subr.mxu0 0.0
      %3314 = vmatpush1.msra.mxu0 0.0
      %3315 = vmatprep.subr.mxu0 0.0
      %3316 = vmatpush1.msra.mxu0 0.0
      %3317 = vmatprep.subr.mxu0 0.0
      %3318 = vmatpush1.msra.mxu0 0.0
      %3319 = vmatprep.subr.mxu0 0.0
      %3320 = vmatpush1.msra.mxu0 0.0
      %3321 = vmatprep.subr.mxu0 0.0
      %3322 = vmatpush1.msra.mxu0 0.0
      %3323 = vmatprep.subr.mxu0 0.0
      %3324 = vmatpush1.msra.mxu0 0.0
      %3325 = vmatprep.subr.mxu0 0.0
      %3326 = vmatpush1.msra.mxu0 0.0
      %3327 = vmatprep.subr.mxu0 0.0
      %3328 = vmatpush1.msra.mxu0 0.0
      %3329 = vmatprep.subr.mxu0 0.0
      %3330 = vmatpush1.msra.mxu0 0.0
      %3331 = vmatprep.mubr.f32.mxu0 0.0
      %3332 = vmatmul.mubr.f32.gmra.mrb[0].mxu0 %v2881
      %v3333 = vpop.f32.mrb[0].mxu0
      %v3334 = vadd.f32 %v2878, %v3333
      %v3335 = vpop.f32.mrb[0].mxu0
      %3336 = vmatprep.mubr.f32.mxu0 0.0
      %3337 = vmatmul.mubr.f32.gmra.mrb[0].mxu0 %v2884
      %v3338 = vpop.f32.mrb[0].mxu0
      %v3339 = vadd.f32 %v2878, %v3338
      %v3340 = vpop.f32.mrb[0].mxu0
      %3341 = vmatprep.mubr.f32.mxu0 0.0
      %3342 = vmatmul.mubr.f32.gmra.mrb[0].mxu0 %v2887
      %v3343 = vpop.f32.mrb[0].mxu0
      %v3344 = vadd.f32 %v2878, %v3343
      %v3345 = vpop.f32.mrb[0].mxu0
      %3346 = vmatprep.mubr.f32.mxu0 0.0
      %3347 = vmatmul.mubr.f32.gmra.mrb[0].mxu0 %v2890
      %v3348 = vpop.f32.mrb[0].mxu0
      %v3349 = vadd.f32 %v2878, %v3348
      %v3350 = vpop.f32.mrb[0].mxu0
      %3351 = vmatprep.mubr.f32.mxu0 0.0
      %3352 = vmatmul.mubr.f32.gmra.mrb[0].mxu0 %v2893
      %v3353 = vpop.f32.mrb[0].mxu0
      %v3354 = vadd.f32 %v2878, %v3353
      %v3355 = vpop.f32.mrb[0].mxu0
      %3356 = vmatprep.mubr.f32.mxu0 0.0
      %3357 = vmatmul.mubr.f32.gmra.mrb[0].mxu0 %v2896
      %v3358 = vpop.f32.mrb[0].mxu0
      %v3359 = vadd.f32 %v2878, %v3358
      %v3360 = vpop.f32.mrb[0].mxu0
      %3361 = vmatprep.mubr.f32.mxu0 0.0
      %3362 = vmatmul.mubr.f32.gmra.mrb[0].mxu0 %v2899
      %v3363 = vpop.f32.mrb[0].mxu0
      %v3364 = vadd.f32 %v2878, %v3363
      %v3365 = vpop.f32.mrb[0].mxu0
      %3366 = vmatprep.mubr.f32.mxu0 0.0
      %3367 = vmatmul.mubr.f32.gmra.mrb[0].mxu0 %v2902
      %v3368 = vpop.f32.mrb[0].mxu0
      %v3369 = vadd.f32 %v2878, %v3368
      %v3370 = vpop.f32.mrb[0].mxu0
      %3371 = vmatprep.mubr.f32.mxu0 0.0
      %3372 = vmatmul.mubr.f32.gmra.mrb[0].mxu0 %v2905
      %v3373 = vpop.f32.mrb[0].mxu0
      %v3374 = vadd.f32 %v2878, %v3373
      %v3375 = vpop.f32.mrb[0].mxu0
      %3376 = vmatprep.mubr.f32.mxu0 0.0
      %3377 = vmatmul.mubr.f32.gmra.mrb[0].mxu0 %v2908
      %v3378 = vpop.f32.mrb[0].mxu0
      %v3379 = vadd.f32 %v2878, %v3378
      %v3380 = vpop.f32.mrb[0].mxu0
      %3381 = vmatprep.mubr.f32.mxu0 0.0
      %3382 = vmatmul.mubr.f32.gmra.mrb[0].mxu0 %v2911
      %v3383 = vpop.f32.mrb[0].mxu0
      %v3384 = vadd.f32 %v2878, %v3383
      %v3385 = vpop.f32.mrb[0].mxu0
      %3386 = vmatprep.mubr.f32.mxu0 0.0
      %3387 = vmatmul.mubr.f32.gmra.mrb[0].mxu0 %v2914
      %v3388 = vpop.f32.mrb[0].mxu0
      %v3389 = vadd.f32 %v2878, %v3388
      %v3390 = vpop.f32.mrb[0].mxu0
      %3391 = vmatprep.mubr.f32.mxu0 0.0
      %3392 = vmatmul.mubr.f32.gmra.mrb[0].mxu0 %v2917
      %v3393 = vpop.f32.mrb[0].mxu0
      %v3394 = vadd.f32 %v2878, %v3393
      %v3395 = vpop.f32.mrb[0].mxu0
      %3396 = vmatprep.mubr.f32.mxu0 0.0
      %3397 = vmatmul.mubr.f32.gmra.mrb[0].mxu0 %v2920
      %v3398 = vpop.f32.mrb[0].mxu0
      %v3399 = vadd.f32 %v2878, %v3398
      %v3400 = vpop.f32.mrb[0].mxu0
      %3401 = vmatprep.mubr.f32.mxu0 0.0
      %3402 = vmatmul.mubr.f32.gmra.mrb[0].mxu0 %v2923
      %v3403 = vpop.f32.mrb[0].mxu0
      %v3404 = vadd.f32 %v2878, %v3403
      %v3405 = vpop.f32.mrb[0].mxu0
      %3406 = vmatprep.mubr.f32.mxu0 0.0
      %3407 = vmatmul.mubr.f32.gmra.mrb[0].mxu0 %v2926
      %v3408 = vpop.f32.mrb[0].mxu0
      %v3409 = vadd.f32 %v2878, %v3408
      %v3410 = vpop.f32.mrb[0].mxu0
      %3411 = vmatprep.mubr.f32.mxu0 0.0
      %3412 = vmatmul.mubr.f32.gmra.mrb[0].mxu0 %v2929
      %v3413 = vpop.f32.mrb[0].mxu0
      %v3414 = vadd.f32 %v2878, %v3413
      %v3415 = vpop.f32.mrb[0].mxu0
      %3416 = vmatprep.mubr.f32.mxu0 0.0
      %3417 = vmatmul.mubr.f32.gmra.mrb[0].mxu0 %v2932
      %v3418 = vpop.f32.mrb[0].mxu0
      %v3419 = vadd.f32 %v2878, %v3418
      %v3420 = vpop.f32.mrb[0].mxu0
      %3421 = vmatprep.mubr.f32.mxu0 0.0
      %3422 = vmatmul.mubr.f32.gmra.mrb[0].mxu0 %v2935
      %v3423 = vpop.f32.mrb[0].mxu0
      %v3424 = vadd.f32 %v2878, %v3423
      %v3425 = vpop.f32.mrb[0].mxu0
      %3426 = vmatprep.mubr.f32.mxu0 0.0
      %3427 = vmatmul.mubr.f32.gmra.mrb[0].mxu0 %v2938
      %v3428 = vpop.f32.mrb[0].mxu0
      %v3429 = vadd.f32 %v2878, %v3428
      %v3430 = vpop.f32.mrb[0].mxu0
      %3431 = vmatprep.mubr.f32.mxu0 0.0
      %3432 = vmatmul.mubr.f32.gmra.mrb[0].mxu0 %v2941
      %v3433 = vpop.f32.mrb[0].mxu0
      %v3434 = vadd.f32 %v2878, %v3433
      %v3435 = vpop.f32.mrb[0].mxu0
      %3436 = vmatprep.mubr.f32.mxu0 0.0
      %3437 = vmatmul.mubr.f32.gmra.mrb[0].mxu0 %v2944
      %v3438 = vpop.f32.mrb[0].mxu0
      %v3439 = vadd.f32 %v2878, %v3438
      %v3440 = vpop.f32.mrb[0].mxu0
      %3441 = vmatprep.mubr.f32.mxu0 0.0
      %3442 = vmatmul.mubr.f32.gmra.mrb[0].mxu0 %v2947
      %v3443 = vpop.f32.mrb[0].mxu0
      %v3444 = vadd.f32 %v2878, %v3443
      %v3445 = vpop.f32.mrb[0].mxu0
      %3446 = vmatprep.mubr.f32.mxu0 0.0
      %3447 = vmatmul.mubr.f32.gmra.mrb[0].mxu0 %v2950
      %v3448 = vpop.f32.mrb[0].mxu0
      %v3449 = vadd.f32 %v2878, %v3448
      %v3450 = vpop.f32.mrb[0].mxu0
      %3451 = vmatprep.mubr.f32.mxu0 0.0
      %3452 = vmatmul.mubr.f32.gmra.mrb[0].mxu0 %v2953
      %v3453 = vpop.f32.mrb[0].mxu0
      %v3454 = vadd.f32 %v2878, %v3453
      %v3455 = vpop.f32.mrb[0].mxu0
      %3456 = vmatprep.mubr.f32.mxu0 0.0
      %3457 = vmatmul.mubr.f32.gmra.mrb[0].mxu0 %v2956
      %v3458 = vpop.f32.mrb[0].mxu0
      %v3459 = vadd.f32 %v2878, %v3458
      %v3460 = vpop.f32.mrb[0].mxu0
      %3461 = vmatprep.mubr.f32.mxu0 0.0
      %3462 = vmatmul.mubr.f32.gmra.mrb[0].mxu0 %v2959
      %v3463 = vpop.f32.mrb[0].mxu0
      %v3464 = vadd.f32 %v2878, %v3463
      %v3465 = vpop.f32.mrb[0].mxu0
      %3466 = vmatprep.mubr.f32.mxu0 0.0
      %3467 = vmatmul.mubr.f32.gmra.mrb[0].mxu0 %v2962
      %v3468 = vpop.f32.mrb[0].mxu0
      %v3469 = vadd.f32 %v2878, %v3468
      %v3470 = vpop.f32.mrb[0].mxu0
      %3471 = vmatprep.mubr.f32.mxu0 0.0
      %3472 = vmatmul.mubr.f32.gmra.mrb[0].mxu0 %v2965
      %v3473 = vpop.f32.mrb[0].mxu0
      %v3474 = vadd.f32 %v2878, %v3473
      %v3475 = vpop.f32.mrb[0].mxu0
      %3476 = vmatprep.mubr.f32.mxu0 0.0
      %3477 = vmatmul.mubr.f32.gmra.mrb[0].mxu0 %v2968
      %v3478 = vpop.f32.mrb[0].mxu0
      %v3479 = vadd.f32 %v2878, %v3478
      %v3480 = vpop.f32.mrb[0].mxu0
      %3481 = vmatprep.mubr.f32.mxu0 0.0
      %3482 = vmatmul.mubr.f32.gmra.mrb[0].mxu0 %v2971
      %v3483 = vpop.f32.mrb[0].mxu0
      %v3484 = vadd.f32 %v2878, %v3483
      %v3485 = vpop.f32.mrb[0].mxu0
      %3486 = vmatprep.mubr.f32.mxu0 0.0
      %3487 = vmatmul.mubr.f32.gmra.mrb[0].mxu0 %v2974
      %v3488 = vpop.f32.mrb[0].mxu0
      %v3489 = vadd.f32 %v2878, %v3488
      %v3490 = vpop.f32.mrb[0].mxu0
      %3491 = vmatprep.mubr.f32.mxu0 0.0
      %3492 = vmatmul.mubr.f32.gmra.mrb[0].mxu0 %v2977
      %v3493 = vpop.f32.mrb[0].mxu0
      %v3494 = vadd.f32 %v2878, %v3493
      %v3495 = vpop.f32.mrb[0].mxu0
      %3496 = vmatprep.mubr.f32.mxu0 0.0
      %3497 = vmatmul.mubr.f32.gmra.mrb[0].mxu0 %v2980
      %v3498 = vpop.f32.mrb[0].mxu0
      %v3499 = vadd.f32 %v2878, %v3498
      %v3500 = vpop.f32.mrb[0].mxu0
      %3501 = vmatprep.mubr.f32.mxu0 0.0
      %3502 = vmatmul.mubr.f32.gmra.mrb[0].mxu0 %v2983
      %v3503 = vpop.f32.mrb[0].mxu0
      %v3504 = vadd.f32 %v2878, %v3503
      %v3505 = vpop.f32.mrb[0].mxu0
      %3506 = vmatprep.mubr.f32.mxu0 0.0
      %3507 = vmatmul.mubr.f32.gmra.mrb[0].mxu0 %v2986
      %v3508 = vpop.f32.mrb[0].mxu0
      %v3509 = vadd.f32 %v2878, %v3508
      %v3510 = vpop.f32.mrb[0].mxu0
      %3511 = vmatprep.mubr.f32.mxu0 0.0
      %3512 = vmatmul.mubr.f32.gmra.mrb[0].mxu0 %v2989
      %v3513 = vpop.f32.mrb[0].mxu0
      %v3514 = vadd.f32 %v2878, %v3513
      %v3515 = vpop.f32.mrb[0].mxu0
      %3516 = vmatprep.mubr.f32.mxu0 0.0
      %3517 = vmatmul.mubr.f32.gmra.mrb[0].mxu0 %v2992
      %v3518 = vpop.f32.mrb[0].mxu0
      %v3519 = vadd.f32 %v2878, %v3518
      %v3520 = vpop.f32.mrb[0].mxu0
      %3521 = vmatprep.mubr.f32.mxu0 0.0
      %3522 = vmatmul.mubr.f32.gmra.mrb[0].mxu0 %v2995
      %v3523 = vpop.f32.mrb[0].mxu0
      %v3524 = vadd.f32 %v2878, %v3523
      %v3525 = vpop.f32.mrb[0].mxu0
      %3526 = vmatprep.mubr.f32.mxu0 0.0
      %3527 = vmatmul.mubr.f32.gmra.mrb[0].mxu0 %v2998
      %v3528 = vpop.f32.mrb[0].mxu0
      %v3529 = vadd.f32 %v2878, %v3528
      %v3530 = vpop.f32.mrb[0].mxu0
      %3531 = vmatprep.mubr.f32.mxu0 0.0
      %3532 = vmatmul.mubr.f32.gmra.mrb[0].mxu0 %v3001
      %v3533 = vpop.f32.mrb[0].mxu0
      %v3534 = vadd.f32 %v2878, %v3533
      %v3535 = vpop.f32.mrb[0].mxu0
      %3536 = vmatprep.mubr.f32.mxu0 0.0
      %3537 = vmatmul.mubr.f32.gmra.mrb[0].mxu0 %v3004
      %v3538 = vpop.f32.mrb[0].mxu0
      %v3539 = vadd.f32 %v2878, %v3538
      %v3540 = vpop.f32.mrb[0].mxu0
      %3541 = vmatprep.mubr.f32.mxu0 0.0
      %3542 = vmatmul.mubr.f32.gmra.mrb[0].mxu0 %v3007
      %v3543 = vpop.f32.mrb[0].mxu0
      %v3544 = vadd.f32 %v2878, %v3543
      %v3545 = vpop.f32.mrb[0].mxu0
      %3546 = vmatprep.mubr.f32.mxu0 0.0
      %3547 = vmatmul.mubr.f32.gmra.mrb[0].mxu0 %v3010
      %v3548 = vpop.f32.mrb[0].mxu0
      %v3549 = vadd.f32 %v2878, %v3548
      %v3550 = vpop.f32.mrb[0].mxu0
      %3551 = vmatprep.mubr.f32.mxu0 0.0
      %3552 = vmatmul.mubr.f32.gmra.mrb[0].mxu0 %v3013
      %v3553 = vpop.f32.mrb[0].mxu0
      %v3554 = vadd.f32 %v2878, %v3553
      %v3555 = vpop.f32.mrb[0].mxu0
      %3556 = vmatprep.mubr.f32.mxu0 0.0
      %3557 = vmatmul.mubr.f32.gmra.mrb[0].mxu0 %v3016
      %v3558 = vpop.f32.mrb[0].mxu0
      %v3559 = vadd.f32 %v2878, %v3558
      %v3560 = vpop.f32.mrb[0].mxu0
      %3561 = vmatprep.mubr.f32.mxu0 0.0
      %3562 = vmatmul.mubr.f32.gmra.mrb[0].mxu0 %v3019
      %v3563 = vpop.f32.mrb[0].mxu0
      %v3564 = vadd.f32 %v2878, %v3563
      %v3565 = vpop.f32.mrb[0].mxu0
      %3566 = vmatprep.mubr.f32.mxu0 0.0
      %3567 = vmatmul.mubr.f32.gmra.mrb[0].mxu0 %v3022
      %v3568 = vpop.f32.mrb[0].mxu0
      %v3569 = vadd.f32 %v2878, %v3568
      %v3570 = vpop.f32.mrb[0].mxu0
      %3571 = vmatprep.mubr.f32.mxu0 0.0
      %3572 = vmatmul.mubr.f32.gmra.mrb[0].mxu0 %v3025
      %v3573 = vpop.f32.mrb[0].mxu0
      %v3574 = vadd.f32 %v2878, %v3573
      %v3575 = vpop.f32.mrb[0].mxu0
      %3576 = vmatprep.mubr.f32.mxu0 0.0
      %3577 = vmatmul.mubr.f32.gmra.mrb[0].mxu0 %v3028
      %v3578 = vpop.f32.mrb[0].mxu0
      %v3579 = vadd.f32 %v2878, %v3578
      %v3580 = vpop.f32.mrb[0].mxu0
      %3581 = vmatprep.mubr.f32.mxu0 0.0
      %3582 = vmatmul.mubr.f32.gmra.mrb[0].mxu0 %v3031
      %v3583 = vpop.f32.mrb[0].mxu0
      %v3584 = vadd.f32 %v2878, %v3583
      %v3585 = vpop.f32.mrb[0].mxu0
      %3586 = vmatprep.mubr.f32.mxu0 0.0
      %3587 = vmatmul.mubr.f32.gmra.mrb[0].mxu0 %v3034
      %v3588 = vpop.f32.mrb[0].mxu0
      %v3589 = vadd.f32 %v2878, %v3588
      %v3590 = vpop.f32.mrb[0].mxu0
      %3591 = vmatprep.mubr.f32.mxu0 0.0
      %3592 = vmatmul.mubr.f32.gmra.mrb[0].mxu0 %v3037
      %v3593 = vpop.f32.mrb[0].mxu0
      %v3594 = vadd.f32 %v2878, %v3593
      %v3595 = vpop.f32.mrb[0].mxu0
      %3596 = vmatprep.mubr.f32.mxu0 0.0
      %3597 = vmatmul.mubr.f32.gmra.mrb[0].mxu0 %v3040
      %v3598 = vpop.f32.mrb[0].mxu0
      %v3599 = vadd.f32 %v2878, %v3598
      %v3600 = vpop.f32.mrb[0].mxu0
      %3601 = vmatprep.mubr.f32.mxu0 0.0
      %3602 = vmatmul.mubr.f32.gmra.mrb[0].mxu0 %v3043
      %v3603 = vpop.f32.mrb[0].mxu0
      %v3604 = vadd.f32 %v2878, %v3603
      %v3605 = vpop.f32.mrb[0].mxu0
      %3606 = vmatprep.mubr.f32.mxu0 0.0
      %3607 = vmatmul.mubr.f32.gmra.mrb[0].mxu0 %v3046
      %v3608 = vpop.f32.mrb[0].mxu0
      %v3609 = vadd.f32 %v2878, %v3608
      %v3610 = vpop.f32.mrb[0].mxu0
      %3611 = vmatprep.mubr.f32.mxu0 0.0
      %3612 = vmatmul.mubr.f32.gmra.mrb[0].mxu0 %v3049
      %v3613 = vpop.f32.mrb[0].mxu0
      %v3614 = vadd.f32 %v2878, %v3613
      %v3615 = vpop.f32.mrb[0].mxu0
      %3616 = vmatprep.mubr.f32.mxu0 0.0
      %3617 = vmatmul.mubr.f32.gmra.mrb[0].mxu0 %v3052
      %v3618 = vpop.f32.mrb[0].mxu0
      %v3619 = vadd.f32 %v2878, %v3618
      %v3620 = vpop.f32.mrb[0].mxu0
      %3621 = vmatprep.mubr.f32.mxu0 0.0
      %3622 = vmatmul.mubr.f32.gmra.mrb[0].mxu0 %v3055
      %v3623 = vpop.f32.mrb[0].mxu0
      %v3624 = vadd.f32 %v2878, %v3623
      %v3625 = vpop.f32.mrb[0].mxu0
      %3626 = vmatprep.mubr.f32.mxu0 0.0
      %3627 = vmatmul.mubr.f32.gmra.mrb[0].mxu0 %v3058
      %v3628 = vpop.f32.mrb[0].mxu0
      %v3629 = vadd.f32 %v2878, %v3628
      %v3630 = vpop.f32.mrb[0].mxu0
      %3631 = vmatprep.mubr.f32.mxu0 0.0
      %3632 = vmatmul.mubr.f32.gmra.mrb[0].mxu0 %v3061
      %v3633 = vpop.f32.mrb[0].mxu0
      %v3634 = vadd.f32 %v2878, %v3633
      %v3635 = vpop.f32.mrb[0].mxu0
      %3636 = vmatprep.mubr.f32.mxu0 0.0
      %3637 = vmatmul.mubr.f32.gmra.mrb[0].mxu0 %v3064
      %v3638 = vpop.f32.mrb[0].mxu0
      %v3639 = vadd.f32 %v2878, %v3638
      %v3640 = vpop.f32.mrb[0].mxu0
      %3641 = vmatprep.mubr.f32.mxu0 0.0
      %3642 = vmatmul.mubr.f32.gmra.mrb[0].mxu0 %v3067
      %v3643 = vpop.f32.mrb[0].mxu0
      %v3644 = vadd.f32 %v2878, %v3643
      %v3645 = vpop.f32.mrb[0].mxu0
      %3646 = vmatprep.mubr.f32.mxu0 0.0
      %3647 = vmatmul.mubr.f32.gmra.mrb[0].mxu0 %v3070
      %v3648 = vpop.f32.mrb[0].mxu0
      %v3649 = vadd.f32 %v2878, %v3648
      %v3650 = vpop.f32.mrb[0].mxu0
      %3651 = vmatprep.mubr.f32.mxu0 0.0
      %3652 = vmatmul.mubr.f32.gmra.mrb[0].mxu0 %v3073
      %v3653 = vpop.f32.mrb[0].mxu0
      %v3654 = vadd.f32 %v2878, %v3653
      %v3655 = vpop.f32.mrb[0].mxu0
      %3656 = vmatprep.mubr.f32.mxu0 0.0
      %3657 = vmatmul.mubr.f32.gmra.mrb[0].mxu0 %v3076
      %v3658 = vpop.f32.mrb[0].mxu0
      %v3659 = vadd.f32 %v2878, %v3658
      %v3660 = vpop.f32.mrb[0].mxu0
      %3661 = vmatprep.mubr.f32.mxu0 0.0
      %3662 = vmatmul.mubr.f32.gmra.mrb[0].mxu0 %v3079
      %v3663 = vpop.f32.mrb[0].mxu0
      %v3664 = vadd.f32 %v2878, %v3663
      %v3665 = vpop.f32.mrb[0].mxu0
      %3666 = vmatprep.mubr.f32.mxu0 0.0
      %3667 = vmatmul.mubr.f32.gmra.mrb[0].mxu0 %v3082
      %v3668 = vpop.f32.mrb[0].mxu0
      %v3669 = vadd.f32 %v2878, %v3668
      %v3670 = vpop.f32.mrb[0].mxu0
      %3671 = vmatprep.mubr.f32.mxu0 0.0
      %3672 = vmatmul.mubr.f32.gmra.mrb[0].mxu0 %v3085
      %v3673 = vpop.f32.mrb[0].mxu0
      %v3674 = vadd.f32 %v2878, %v3673
      %v3675 = vpop.f32.mrb[0].mxu0
      %3676 = vmatprep.mubr.f32.mxu0 0.0
      %3677 = vmatmul.mubr.f32.gmra.mrb[0].mxu0 %v3088
      %v3678 = vpop.f32.mrb[0].mxu0
      %v3679 = vadd.f32 %v2878, %v3678
      %v3680 = vpop.f32.mrb[0].mxu0
      %3681 = vmatprep.mubr.f32.mxu0 0.0
      %3682 = vmatmul.mubr.f32.gmra.mrb[0].mxu0 %v3091
      %v3683 = vpop.f32.mrb[0].mxu0
      %v3684 = vadd.f32 %v2878, %v3683
      %v3685 = vpop.f32.mrb[0].mxu0
      %3686 = vmatprep.mubr.f32.mxu0 0.0
      %3687 = vmatmul.mubr.f32.gmra.mrb[0].mxu0 %v3094
      %v3688 = vpop.f32.mrb[0].mxu0
      %v3689 = vadd.f32 %v2878, %v3688
      %v3690 = vpop.f32.mrb[0].mxu0
      %3691 = vmatprep.mubr.f32.mxu0 0.0
      %3692 = vmatmul.mubr.f32.gmra.mrb[0].mxu0 %v3097
      %v3693 = vpop.f32.mrb[0].mxu0
      %v3694 = vadd.f32 %v2878, %v3693
      %v3695 = vpop.f32.mrb[0].mxu0
      %3696 = vmatprep.mubr.f32.mxu0 0.0
      %3697 = vmatmul.mubr.f32.gmra.mrb[0].mxu0 %v3100
      %v3698 = vpop.f32.mrb[0].mxu0
      %v3699 = vadd.f32 %v2878, %v3698
      %v3700 = vpop.f32.mrb[0].mxu0
      %3701 = vmatprep.mubr.f32.mxu0 0.0
      %3702 = vmatmul.mubr.f32.gmra.mrb[0].mxu0 %v3103
      %v3703 = vpop.f32.mrb[0].mxu0
      %v3704 = vadd.f32 %v2878, %v3703
      %v3705 = vpop.f32.mrb[0].mxu0
      %3706 = vmatprep.mubr.f32.mxu0 0.0
      %3707 = vmatmul.mubr.f32.gmra.mrb[0].mxu0 %v3106
      %v3708 = vpop.f32.mrb[0].mxu0
      %v3709 = vadd.f32 %v2878, %v3708
      %v3710 = vpop.f32.mrb[0].mxu0
      %3711 = vmatprep.mubr.f32.mxu0 0.0
      %3712 = vmatmul.mubr.f32.gmra.mrb[0].mxu0 %v3109
      %v3713 = vpop.f32.mrb[0].mxu0
      %v3714 = vadd.f32 %v2878, %v3713
      %v3715 = vpop.f32.mrb[0].mxu0
      %3716 = vmatprep.mubr.f32.mxu0 0.0
      %3717 = vmatmul.mubr.f32.gmra.mrb[0].mxu0 %v3112
      %v3718 = vpop.f32.mrb[0].mxu0
      %v3719 = vadd.f32 %v2878, %v3718
      %v3720 = vpop.f32.mrb[0].mxu0
      %3721 = vmatprep.mubr.f32.mxu0 0.0
      %3722 = vmatmul.mubr.f32.gmra.mrb[0].mxu0 %v3115
      %v3723 = vpop.f32.mrb[0].mxu0
      %v3724 = vadd.f32 %v2878, %v3723
      %v3725 = vpop.f32.mrb[0].mxu0
      %3726 = vmatprep.mubr.f32.mxu0 0.0
      %3727 = vmatmul.mubr.f32.gmra.mrb[0].mxu0 %v3118
      %v3728 = vpop.f32.mrb[0].mxu0
      %v3729 = vadd.f32 %v2878, %v3728
      %v3730 = vpop.f32.mrb[0].mxu0
      %3731 = vmatprep.mubr.f32.mxu0 0.0
      %3732 = vmatmul.mubr.f32.gmra.mrb[0].mxu0 %v3121
      %v3733 = vpop.f32.mrb[0].mxu0
      %v3734 = vadd.f32 %v2878, %v3733
      %v3735 = vpop.f32.mrb[0].mxu0
      %3736 = vmatprep.mubr.f32.mxu0 0.0
      %3737 = vmatmul.mubr.f32.gmra.mrb[0].mxu0 %v3124
      %v3738 = vpop.f32.mrb[0].mxu0
      %v3739 = vadd.f32 %v2878, %v3738
      %v3740 = vpop.f32.mrb[0].mxu0
      %3741 = vmatprep.mubr.f32.mxu0 0.0
      %3742 = vmatmul.mubr.f32.gmra.mrb[0].mxu0 %v3127
      %v3743 = vpop.f32.mrb[0].mxu0
      %v3744 = vadd.f32 %v2878, %v3743
      %v3745 = vpop.f32.mrb[0].mxu0
      %3746 = vmatprep.mubr.f32.mxu0 0.0
      %3747 = vmatmul.mubr.f32.gmra.mrb[0].mxu0 %v3130
      %v3748 = vpop.f32.mrb[0].mxu0
      %v3749 = vadd.f32 %v2878, %v3748
      %v3750 = vpop.f32.mrb[0].mxu0
      %3751 = vmatprep.mubr.f32.mxu0 0.0
      %3752 = vmatmul.mubr.f32.gmra.mrb[0].mxu0 %v3133
      %v3753 = vpop.f32.mrb[0].mxu0
      %v3754 = vadd.f32 %v2878, %v3753
      %v3755 = vpop.f32.mrb[0].mxu0
      %3756 = vmatprep.mubr.f32.mxu0 0.0
      %3757 = vmatmul.mubr.f32.gmra.mrb[0].mxu0 %v3136
      %v3758 = vpop.f32.mrb[0].mxu0
      %v3759 = vadd.f32 %v2878, %v3758
      %v3760 = vpop.f32.mrb[0].mxu0
      %3761 = vmatprep.mubr.f32.mxu0 0.0
      %3762 = vmatmul.mubr.f32.gmra.mrb[0].mxu0 %v3139
      %v3763 = vpop.f32.mrb[0].mxu0
      %v3764 = vadd.f32 %v2878, %v3763
      %v3765 = vpop.f32.mrb[0].mxu0
      %3766 = vmatprep.mubr.f32.mxu0 0.0
      %3767 = vmatmul.mubr.f32.gmra.mrb[0].mxu0 %v3142
      %v3768 = vpop.f32.mrb[0].mxu0
      %v3769 = vadd.f32 %v2878, %v3768
      %v3770 = vpop.f32.mrb[0].mxu0
      %3771 = vmatprep.mubr.f32.mxu0 0.0
      %3772 = vmatmul.mubr.f32.gmra.mrb[0].mxu0 %v3145
      %v3773 = vpop.f32.mrb[0].mxu0
      %v3774 = vadd.f32 %v2878, %v3773
      %v3775 = vpop.f32.mrb[0].mxu0
      %3776 = vmatprep.mubr.f32.mxu0 0.0
      %3777 = vmatmul.mubr.f32.gmra.mrb[0].mxu0 %v3148
      %v3778 = vpop.f32.mrb[0].mxu0
      %v3779 = vadd.f32 %v2878, %v3778
      %v3780 = vpop.f32.mrb[0].mxu0
      %3781 = vmatprep.mubr.f32.mxu0 0.0
      %3782 = vmatmul.mubr.f32.gmra.mrb[0].mxu0 %v3151
      %v3783 = vpop.f32.mrb[0].mxu0
      %v3784 = vadd.f32 %v2878, %v3783
      %v3785 = vpop.f32.mrb[0].mxu0
      %3786 = vmatprep.mubr.f32.mxu0 0.0
      %3787 = vmatmul.mubr.f32.gmra.mrb[0].mxu0 %v3154
      %v3788 = vpop.f32.mrb[0].mxu0
      %v3789 = vadd.f32 %v2878, %v3788
      %v3790 = vpop.f32.mrb[0].mxu0
      %3791 = vmatprep.mubr.f32.mxu0 0.0
      %3792 = vmatmul.mubr.f32.gmra.mrb[0].mxu0 %v3157
      %v3793 = vpop.f32.mrb[0].mxu0
      %v3794 = vadd.f32 %v2878, %v3793
      %v3795 = vpop.f32.mrb[0].mxu0
      %3796 = vmatprep.mubr.f32.mxu0 0.0
      %3797 = vmatmul.mubr.f32.gmra.mrb[0].mxu0 %v3160
      %v3798 = vpop.f32.mrb[0].mxu0
      %v3799 = vadd.f32 %v2878, %v3798
      %v3800 = vpop.f32.mrb[0].mxu0
      %3801 = vmatprep.mubr.f32.mxu0 0.0
      %3802 = vmatmul.mubr.f32.gmra.mrb[0].mxu0 %v3163
      %v3803 = vpop.f32.mrb[0].mxu0
      %v3804 = vadd.f32 %v2878, %v3803
      %v3805 = vpop.f32.mrb[0].mxu0
      %3806 = vmatprep.mubr.f32.mxu0 0.0
      %3807 = vmatmul.mubr.f32.gmra.mrb[0].mxu0 %v3166
      %v3808 = vpop.f32.mrb[0].mxu0
      %v3809 = vadd.f32 %v2878, %v3808
      %v3810 = vpop.f32.mrb[0].mxu0
      %3811 = vmatprep.mubr.f32.mxu0 0.0
      %3812 = vmatmul.mubr.f32.gmra.mrb[0].mxu0 %v3169
      %v3813 = vpop.f32.mrb[0].mxu0
      %v3814 = vadd.f32 %v2878, %v3813
      %v3815 = vpop.f32.mrb[0].mxu0
      %3816 = vmatprep.mubr.f32.mxu0 0.0
      %3817 = vmatmul.mubr.f32.gmra.mrb[0].mxu0 %v3172
      %v3818 = vpop.f32.mrb[0].mxu0
      %v3819 = vadd.f32 %v2878, %v3818
      %v3820 = vpop.f32.mrb[0].mxu0
      %3821 = vmatprep.mubr.f32.mxu0 0.0
      %3822 = vmatmul.mubr.f32.gmra.mrb[0].mxu0 %v3175
      %v3823 = vpop.f32.mrb[0].mxu0
      %v3824 = vadd.f32 %v2878, %v3823
      %v3825 = vpop.f32.mrb[0].mxu0
      %3826 = vmatprep.mubr.f32.mxu0 0.0
      %3827 = vmatmul.mubr.f32.gmra.mrb[0].mxu0 %v3178
      %v3828 = vpop.f32.mrb[0].mxu0
      %v3829 = vadd.f32 %v2878, %v3828
      %v3830 = vpop.f32.mrb[0].mxu0
      %3831 = vmatprep.mubr.f32.mxu0 0.0
      %3832 = vmatmul.mubr.f32.gmra.mrb[0].mxu0 %v3181
      %v3833 = vpop.f32.mrb[0].mxu0
      %v3834 = vadd.f32 %v2878, %v3833
      %v3835 = vpop.f32.mrb[0].mxu0
      %3836 = vmatprep.mubr.f32.mxu0 0.0
      %3837 = vmatmul.mubr.f32.gmra.mrb[0].mxu0 %v3184
      %v3838 = vpop.f32.mrb[0].mxu0
      %v3839 = vadd.f32 %v2878, %v3838
      %v3840 = vpop.f32.mrb[0].mxu0
      %3841 = vmatprep.mubr.f32.mxu0 0.0
      %3842 = vmatmul.mubr.f32.gmra.mrb[0].mxu0 %v3187
      %v3843 = vpop.f32.mrb[0].mxu0
      %v3844 = vadd.f32 %v2878, %v3843
      %v3845 = vpop.f32.mrb[0].mxu0
      %3846 = vmatprep.mubr.f32.mxu0 0.0
      %3847 = vmatmul.mubr.f32.gmra.mrb[0].mxu0 %v3190
      %v3848 = vpop.f32.mrb[0].mxu0
      %v3849 = vadd.f32 %v2878, %v3848
      %v3850 = vpop.f32.mrb[0].mxu0
      %3851 = vmatprep.mubr.f32.mxu0 0.0
      %3852 = vmatmul.mubr.f32.gmra.mrb[0].mxu0 %v3193
      %v3853 = vpop.f32.mrb[0].mxu0
      %v3854 = vadd.f32 %v2878, %v3853
      %v3855 = vpop.f32.mrb[0].mxu0
      %3856 = vmatprep.mubr.f32.mxu0 0.0
      %3857 = vmatmul.mubr.f32.gmra.mrb[0].mxu0 %v3196
      %v3858 = vpop.f32.mrb[0].mxu0
      %v3859 = vadd.f32 %v2878, %v3858
      %v3860 = vpop.f32.mrb[0].mxu0
      %3861 = vmatprep.mubr.f32.mxu0 0.0
      %3862 = vmatmul.mubr.f32.gmra.mrb[0].mxu0 %v3199
      %v3863 = vpop.f32.mrb[0].mxu0
      %v3864 = vadd.f32 %v2878, %v3863
      %v3865 = vpop.f32.mrb[0].mxu0
      %3866 = vmatprep.mubr.f32.mxu0 0.0
      %3867 = vmatmul.mubr.f32.gmra.mrb[0].mxu0 %v3202
      %v3868 = vpop.f32.mrb[0].mxu0
      %v3869 = vadd.f32 %v2878, %v3868
      %v3870 = vpop.f32.mrb[0].mxu0
      %3871 = vmatprep.mubr.f32.mxu0 0.0
      %3872 = vmatmul.mubr.f32.gmra.mrb[0].mxu0 %v3205
      %v3873 = vpop.f32.mrb[0].mxu0
      %v3874 = vadd.f32 %v2878, %v3873
      %v3875 = vpop.f32.mrb[0].mxu0
      %3876 = vmatprep.mubr.f32.mxu0 0.0
      %3877 = vmatmul.mubr.f32.gmra.mrb[0].mxu0 %v3208
      %v3878 = vpop.f32.mrb[0].mxu0
      %v3879 = vadd.f32 %v2878, %v3878
      %v3880 = vpop.f32.mrb[0].mxu0
      %3881 = vmatprep.mubr.f32.mxu0 0.0
      %3882 = vmatmul.mubr.f32.gmra.mrb[0].mxu0 %v3211
      %v3883 = vpop.f32.mrb[0].mxu0
      %v3884 = vadd.f32 %v2878, %v3883
      %v3885 = vpop.f32.mrb[0].mxu0
      %3886 = vmatprep.mubr.f32.mxu0 0.0
      %3887 = vmatmul.mubr.f32.gmra.mrb[0].mxu0 %v3214
      %v3888 = vpop.f32.mrb[0].mxu0
      %v3889 = vadd.f32 %v2878, %v3888
      %v3890 = vpop.f32.mrb[0].mxu0
      %3891 = vmatprep.mubr.f32.mxu0 0.0
      %3892 = vmatmul.mubr.f32.gmra.mrb[0].mxu0 %v3217
      %v3893 = vpop.f32.mrb[0].mxu0
      %v3894 = vadd.f32 %v2878, %v3893
      %v3895 = vpop.f32.mrb[0].mxu0
      %3896 = vmatprep.mubr.f32.mxu0 0.0
      %3897 = vmatmul.mubr.f32.gmra.mrb[0].mxu0 %v3220
      %v3898 = vpop.f32.mrb[0].mxu0
      %v3899 = vadd.f32 %v2878, %v3898
      %v3900 = vpop.f32.mrb[0].mxu0
      %3901 = vmatprep.mubr.f32.mxu0 0.0
      %3902 = vmatmul.mubr.f32.gmra.mrb[0].mxu0 %v3223
      %v3903 = vpop.f32.mrb[0].mxu0
      %v3904 = vadd.f32 %v2878, %v3903
      %v3905 = vpop.f32.mrb[0].mxu0
      %3906 = vmatprep.mubr.f32.mxu0 0.0
      %3907 = vmatmul.mubr.f32.gmra.mrb[0].mxu0 %v3226
      %v3908 = vpop.f32.mrb[0].mxu0
      %v3909 = vadd.f32 %v2878, %v3908
      %v3910 = vpop.f32.mrb[0].mxu0
      %3911 = vmatprep.mubr.f32.mxu0 0.0
      %3912 = vmatmul.mubr.f32.gmra.mrb[0].mxu0 %v3229
      %v3913 = vpop.f32.mrb[0].mxu0
      %v3914 = vadd.f32 %v2878, %v3913
      %v3915 = vpop.f32.mrb[0].mxu0
      %3916 = vmatprep.mubr.f32.mxu0 0.0
      %3917 = vmatmul.mubr.f32.gmra.mrb[0].mxu0 %v3232
      %v3918 = vpop.f32.mrb[0].mxu0
      %v3919 = vadd.f32 %v2878, %v3918
      %v3920 = vpop.f32.mrb[0].mxu0
      %3921 = vmatprep.mubr.f32.mxu0 0.0
      %3922 = vmatmul.mubr.f32.gmra.mrb[0].mxu0 %v3235
      %v3923 = vpop.f32.mrb[0].mxu0
      %v3924 = vadd.f32 %v2878, %v3923
      %v3925 = vpop.f32.mrb[0].mxu0
      %3926 = vmatprep.mubr.f32.mxu0 0.0
      %3927 = vmatmul.mubr.f32.gmra.mrb[0].mxu0 %v3238
      %v3928 = vpop.f32.mrb[0].mxu0
      %v3929 = vadd.f32 %v2878, %v3928
      %v3930 = vpop.f32.mrb[0].mxu0
      %3931 = vmatprep.mubr.f32.mxu0 0.0
      %3932 = vmatmul.mubr.f32.gmra.mrb[0].mxu0 %v3241
      %v3933 = vpop.f32.mrb[0].mxu0
      %v3934 = vadd.f32 %v2878, %v3933
      %v3935 = vpop.f32.mrb[0].mxu0
      %3936 = vmatprep.mubr.f32.mxu0 0.0
      %3937 = vmatmul.mubr.f32.gmra.mrb[0].mxu0 %v3244
      %v3938 = vpop.f32.mrb[0].mxu0
      %v3939 = vadd.f32 %v2878, %v3938
      %v3940 = vpop.f32.mrb[0].mxu0
      %3941 = vmatprep.mubr.f32.mxu0 0.0
      %3942 = vmatmul.mubr.f32.gmra.mrb[0].mxu0 %v3247
      %v3943 = vpop.f32.mrb[0].mxu0
      %v3944 = vadd.f32 %v2878, %v3943
      %v3945 = vpop.f32.mrb[0].mxu0
      %3946 = vmatprep.mubr.f32.mxu0 0.0
      %3947 = vmatmul.mubr.f32.gmra.mrb[0].mxu0 %v3250
      %v3948 = vpop.f32.mrb[0].mxu0
      %v3949 = vadd.f32 %v2878, %v3948
      %v3950 = vpop.f32.mrb[0].mxu0
      %3951 = vmatprep.mubr.f32.mxu0 0.0
      %3952 = vmatmul.mubr.f32.gmra.mrb[0].mxu0 %v3253
      %v3953 = vpop.f32.mrb[0].mxu0
      %v3954 = vadd.f32 %v2878, %v3953
      %v3955 = vpop.f32.mrb[0].mxu0
      %3956 = vmatprep.mubr.f32.mxu0 0.0
      %3957 = vmatmul.mubr.f32.gmra.mrb[0].mxu0 %v3256
      %v3958 = vpop.f32.mrb[0].mxu0
      %v3959 = vadd.f32 %v2878, %v3958
      %v3960 = vpop.f32.mrb[0].mxu0
      %3961 = vmatprep.mubr.f32.mxu0 0.0
      %3962 = vmatmul.mubr.f32.gmra.mrb[0].mxu0 %v3259
      %v3963 = vpop.f32.mrb[0].mxu0
      %v3964 = vadd.f32 %v2878, %v3963
      %v3965 = vpop.f32.mrb[0].mxu0
      %3966 = vmatprep.mubr.f32.mxu0 0.0
      %3967 = vmatmul.mubr.f32.gmra.mrb[0].mxu0 %v3262
      %v3968 = vpop.f32.mrb[0].mxu0
      %v3969 = vadd.f32 %v2878, %v3968
      %v3970 = vpop.f32.mrb[0].mxu0
      %3971 = vdwg.mxu0
      %v3972 = vsub.f32 0.0, %v3334
      %v3973 = vsub.f32 0.0, %v3339
      %v3974 = vsub.f32 0.0, %v3344
      %v3975 = vsub.f32 0.0, %v3349
      %v3976 = vsub.f32 0.0, %v3354
      %v3977 = vsub.f32 0.0, %v3359
      %v3978 = vsub.f32 0.0, %v3364
      %v3979 = vsub.f32 0.0, %v3369
      %v3980 = vsub.f32 0.0, %v3374
      %v3981 = vsub.f32 0.0, %v3379
      %v3982 = vsub.f32 0.0, %v3384
      %v3983 = vsub.f32 0.0, %v3389
      %v3984 = vsub.f32 0.0, %v3394
      %v3985 = vsub.f32 0.0, %v3399
      %v3986 = vsub.f32 0.0, %v3404
      %v3987 = vsub.f32 0.0, %v3409
      %v3988 = vsub.f32 0.0, %v3414
      %v3989 = vsub.f32 0.0, %v3419
      %v3990 = vsub.f32 0.0, %v3424
      %v3991 = vsub.f32 0.0, %v3429
      %v3992 = vsub.f32 0.0, %v3434
      %v3993 = vsub.f32 0.0, %v3439
      %v3994 = vsub.f32 0.0, %v3444
      %v3995 = vsub.f32 0.0, %v3449
      %v3996 = vsub.f32 0.0, %v3454
      %v3997 = vsub.f32 0.0, %v3459
      %v3998 = vsub.f32 0.0, %v3464
      %v3999 = vsub.f32 0.0, %v3469
      %v4000 = vsub.f32 0.0, %v3474
      %v4001 = vsub.f32 0.0, %v3479
      %v4002 = vsub.f32 0.0, %v3484
      %v4003 = vsub.f32 0.0, %v3489
      %v4004 = vsub.f32 0.0, %v3494
      %v4005 = vsub.f32 0.0, %v3499
      %v4006 = vsub.f32 0.0, %v3504
      %v4007 = vsub.f32 0.0, %v3509
      %v4008 = vsub.f32 0.0, %v3514
      %v4009 = vsub.f32 0.0, %v3519
      %v4010 = vsub.f32 0.0, %v3524
      %v4011 = vsub.f32 0.0, %v3529
      %v4012 = vsub.f32 0.0, %v3534
      %v4013 = vsub.f32 0.0, %v3539
      %v4014 = vsub.f32 0.0, %v3544
      %v4015 = vsub.f32 0.0, %v3549
      %v4016 = vsub.f32 0.0, %v3554
      %v4017 = vsub.f32 0.0, %v3559
      %v4018 = vsub.f32 0.0, %v3564
      %v4019 = vsub.f32 0.0, %v3569
      %v4020 = vsub.f32 0.0, %v3574
      %v4021 = vsub.f32 0.0, %v3579
      %v4022 = vsub.f32 0.0, %v3584
      %v4023 = vsub.f32 0.0, %v3589
      %v4024 = vsub.f32 0.0, %v3594
      %v4025 = vsub.f32 0.0, %v3599
      %v4026 = vsub.f32 0.0, %v3604
      %v4027 = vsub.f32 0.0, %v3609
      %v4028 = vsub.f32 0.0, %v3614
      %v4029 = vsub.f32 0.0, %v3619
      %v4030 = vsub.f32 0.0, %v3624
      %v4031 = vsub.f32 0.0, %v3629
      %v4032 = vsub.f32 0.0, %v3634
      %v4033 = vsub.f32 0.0, %v3639
      %v4034 = vsub.f32 0.0, %v3644
      %v4035 = vsub.f32 0.0, %v3649
      %v4036 = vsub.f32 0.0, %v3654
      %v4037 = vsub.f32 0.0, %v3659
      %v4038 = vsub.f32 0.0, %v3664
      %v4039 = vsub.f32 0.0, %v3669
      %v4040 = vsub.f32 0.0, %v3674
      %v4041 = vsub.f32 0.0, %v3679
      %v4042 = vsub.f32 0.0, %v3684
      %v4043 = vsub.f32 0.0, %v3689
      %v4044 = vsub.f32 0.0, %v3694
      %v4045 = vsub.f32 0.0, %v3699
      %v4046 = vsub.f32 0.0, %v3704
      %v4047 = vsub.f32 0.0, %v3709
      %v4048 = vsub.f32 0.0, %v3714
      %v4049 = vsub.f32 0.0, %v3719
      %v4050 = vsub.f32 0.0, %v3724
      %v4051 = vsub.f32 0.0, %v3729
      %v4052 = vsub.f32 0.0, %v3734
      %v4053 = vsub.f32 0.0, %v3739
      %v4054 = vsub.f32 0.0, %v3744
      %v4055 = vsub.f32 0.0, %v3749
      %v4056 = vsub.f32 0.0, %v3754
      %v4057 = vsub.f32 0.0, %v3759
      %v4058 = vsub.f32 0.0, %v3764
      %v4059 = vsub.f32 0.0, %v3769
      %v4060 = vsub.f32 0.0, %v3774
      %v4061 = vsub.f32 0.0, %v3779
      %v4062 = vsub.f32 0.0, %v3784
      %v4063 = vsub.f32 0.0, %v3789
      %v4064 = vsub.f32 0.0, %v3794
      %v4065 = vsub.f32 0.0, %v3799
      %v4066 = vsub.f32 0.0, %v3804
      %v4067 = vsub.f32 0.0, %v3809
      %v4068 = vsub.f32 0.0, %v3814
      %v4069 = vsub.f32 0.0, %v3819
      %v4070 = vsub.f32 0.0, %v3824
      %v4071 = vsub.f32 0.0, %v3829
      %v4072 = vsub.f32 0.0, %v3834
      %v4073 = vsub.f32 0.0, %v3839
      %v4074 = vsub.f32 0.0, %v3844
      %v4075 = vsub.f32 0.0, %v3849
      %v4076 = vsub.f32 0.0, %v3854
      %v4077 = vsub.f32 0.0, %v3859
      %v4078 = vsub.f32 0.0, %v3864
      %v4079 = vsub.f32 0.0, %v3869
      %v4080 = vsub.f32 0.0, %v3874
      %v4081 = vsub.f32 0.0, %v3879
      %v4082 = vsub.f32 0.0, %v3884
      %v4083 = vsub.f32 0.0, %v3889
      %v4084 = vsub.f32 0.0, %v3894
      %v4085 = vsub.f32 0.0, %v3899
      %v4086 = vsub.f32 0.0, %v3904
      %v4087 = vsub.f32 0.0, %v3909
      %v4088 = vsub.f32 0.0, %v3914
      %v4089 = vsub.f32 0.0, %v3919
      %v4090 = vsub.f32 0.0, %v3924
      %v4091 = vsub.f32 0.0, %v3929
      %v4092 = vsub.f32 0.0, %v3934
      %v4093 = vsub.f32 0.0, %v3939
      %v4094 = vsub.f32 0.0, %v3944
      %v4095 = vsub.f32 0.0, %v3949
      %v4096 = vsub.f32 0.0, %v3954
      %v4097 = vsub.f32 0.0, %v3959
      %v4098 = vsub.f32 0.0, %v3964
      %v4099 = vsub.f32 0.0, %v3969
      %v4100 = vmul.f32 %v3972, 1.442695
      %v4101 = vpow.pop %v4100
      %v4102 = vmul.f32 %v3973, 1.442695
      %v4103 = vpow.pop %v4102
      %v4104 = vmul.f32 %v3974, 1.442695
      %v4105 = vpow.pop %v4104
      %v4106 = vmul.f32 %v3975, 1.442695
      %v4107 = vpow.pop %v4106
      %v4108 = vmul.f32 %v3976, 1.442695
      %v4109 = vpow.pop %v4108
      %v4110 = vmul.f32 %v3977, 1.442695
      %v4111 = vpow.pop %v4110
      %v4112 = vmul.f32 %v3978, 1.442695
      %v4113 = vpow.pop %v4112
      %v4114 = vmul.f32 %v3979, 1.442695
      %v4115 = vpow.pop %v4114
      %v4116 = vmul.f32 %v3980, 1.442695
      %v4117 = vpow.pop %v4116
      %v4118 = vmul.f32 %v3981, 1.442695
      %v4119 = vpow.pop %v4118
      %v4120 = vmul.f32 %v3982, 1.442695
      %v4121 = vpow.pop %v4120
      %v4122 = vmul.f32 %v3983, 1.442695
      %v4123 = vpow.pop %v4122
      %v4124 = vmul.f32 %v3984, 1.442695
      %v4125 = vpow.pop %v4124
      %v4126 = vmul.f32 %v3985, 1.442695
      %v4127 = vpow.pop %v4126
      %v4128 = vmul.f32 %v3986, 1.442695
      %v4129 = vpow.pop %v4128
      %v4130 = vmul.f32 %v3987, 1.442695
      %v4131 = vpow.pop %v4130
      %v4132 = vmul.f32 %v3988, 1.442695
      %v4133 = vpow.pop %v4132
      %v4134 = vmul.f32 %v3989, 1.442695
      %v4135 = vpow.pop %v4134
      %v4136 = vmul.f32 %v3990, 1.442695
      %v4137 = vpow.pop %v4136
      %v4138 = vmul.f32 %v3991, 1.442695
      %v4139 = vpow.pop %v4138
      %v4140 = vmul.f32 %v3992, 1.442695
      %v4141 = vpow.pop %v4140
      %v4142 = vmul.f32 %v3993, 1.442695
      %v4143 = vpow.pop %v4142
      %v4144 = vmul.f32 %v3994, 1.442695
      %v4145 = vpow.pop %v4144
      %v4146 = vmul.f32 %v3995, 1.442695
      %v4147 = vpow.pop %v4146
      %v4148 = vmul.f32 %v3996, 1.442695
      %v4149 = vpow.pop %v4148
      %v4150 = vmul.f32 %v3997, 1.442695
      %v4151 = vpow.pop %v4150
      %v4152 = vmul.f32 %v3998, 1.442695
      %v4153 = vpow.pop %v4152
      %v4154 = vmul.f32 %v3999, 1.442695
      %v4155 = vpow.pop %v4154
      %v4156 = vmul.f32 %v4000, 1.442695
      %v4157 = vpow.pop %v4156
      %v4158 = vmul.f32 %v4001, 1.442695
      %v4159 = vpow.pop %v4158
      %v4160 = vmul.f32 %v4002, 1.442695
      %v4161 = vpow.pop %v4160
      %v4162 = vmul.f32 %v4003, 1.442695
      %v4163 = vpow.pop %v4162
      %v4164 = vmul.f32 %v4004, 1.442695
      %v4165 = vpow.pop %v4164
      %v4166 = vmul.f32 %v4005, 1.442695
      %v4167 = vpow.pop %v4166
      %v4168 = vmul.f32 %v4006, 1.442695
      %v4169 = vpow.pop %v4168
      %v4170 = vmul.f32 %v4007, 1.442695
      %v4171 = vpow.pop %v4170
      %v4172 = vmul.f32 %v4008, 1.442695
      %v4173 = vpow.pop %v4172
      %v4174 = vmul.f32 %v4009, 1.442695
      %v4175 = vpow.pop %v4174
      %v4176 = vmul.f32 %v4010, 1.442695
      %v4177 = vpow.pop %v4176
      %v4178 = vmul.f32 %v4011, 1.442695
      %v4179 = vpow.pop %v4178
      %v4180 = vmul.f32 %v4012, 1.442695
      %v4181 = vpow.pop %v4180
      %v4182 = vmul.f32 %v4013, 1.442695
      %v4183 = vpow.pop %v4182
      %v4184 = vmul.f32 %v4014, 1.442695
      %v4185 = vpow.pop %v4184
      %v4186 = vmul.f32 %v4015, 1.442695
      %v4187 = vpow.pop %v4186
      %v4188 = vmul.f32 %v4016, 1.442695
      %v4189 = vpow.pop %v4188
      %v4190 = vmul.f32 %v4017, 1.442695
      %v4191 = vpow.pop %v4190
      %v4192 = vmul.f32 %v4018, 1.442695
      %v4193 = vpow.pop %v4192
      %v4194 = vmul.f32 %v4019, 1.442695
      %v4195 = vpow.pop %v4194
      %v4196 = vmul.f32 %v4020, 1.442695
      %v4197 = vpow.pop %v4196
      %v4198 = vmul.f32 %v4021, 1.442695
      %v4199 = vpow.pop %v4198
      %v4200 = vmul.f32 %v4022, 1.442695
      %v4201 = vpow.pop %v4200
      %v4202 = vmul.f32 %v4023, 1.442695
      %v4203 = vpow.pop %v4202
      %v4204 = vmul.f32 %v4024, 1.442695
      %v4205 = vpow.pop %v4204
      %v4206 = vmul.f32 %v4025, 1.442695
      %v4207 = vpow.pop %v4206
      %v4208 = vmul.f32 %v4026, 1.442695
      %v4209 = vpow.pop %v4208
      %v4210 = vmul.f32 %v4027, 1.442695
      %v4211 = vpow.pop %v4210
      %v4212 = vmul.f32 %v4028, 1.442695
      %v4213 = vpow.pop %v4212
      %v4214 = vmul.f32 %v4029, 1.442695
      %v4215 = vpow.pop %v4214
      %v4216 = vmul.f32 %v4030, 1.442695
      %v4217 = vpow.pop %v4216
      %v4218 = vmul.f32 %v4031, 1.442695
      %v4219 = vpow.pop %v4218
      %v4220 = vmul.f32 %v4032, 1.442695
      %v4221 = vpow.pop %v4220
      %v4222 = vmul.f32 %v4033, 1.442695
      %v4223 = vpow.pop %v4222
      %v4224 = vmul.f32 %v4034, 1.442695
      %v4225 = vpow.pop %v4224
      %v4226 = vmul.f32 %v4035, 1.442695
      %v4227 = vpow.pop %v4226
      %v4228 = vmul.f32 %v4036, 1.442695
      %v4229 = vpow.pop %v4228
      %v4230 = vmul.f32 %v4037, 1.442695
      %v4231 = vpow.pop %v4230
      %v4232 = vmul.f32 %v4038, 1.442695
      %v4233 = vpow.pop %v4232
      %v4234 = vmul.f32 %v4039, 1.442695
      %v4235 = vpow.pop %v4234
      %v4236 = vmul.f32 %v4040, 1.442695
      %v4237 = vpow.pop %v4236
      %v4238 = vmul.f32 %v4041, 1.442695
      %v4239 = vpow.pop %v4238
      %v4240 = vmul.f32 %v4042, 1.442695
      %v4241 = vpow.pop %v4240
      %v4242 = vmul.f32 %v4043, 1.442695
      %v4243 = vpow.pop %v4242
      %v4244 = vmul.f32 %v4044, 1.442695
      %v4245 = vpow.pop %v4244
      %v4246 = vmul.f32 %v4045, 1.442695
      %v4247 = vpow.pop %v4246
      %v4248 = vmul.f32 %v4046, 1.442695
      %v4249 = vpow.pop %v4248
      %v4250 = vmul.f32 %v4047, 1.442695
      %v4251 = vpow.pop %v4250
      %v4252 = vmul.f32 %v4048, 1.442695
      %v4253 = vpow.pop %v4252
      %v4254 = vmul.f32 %v4049, 1.442695
      %v4255 = vpow.pop %v4254
      %v4256 = vmul.f32 %v4050, 1.442695
      %v4257 = vpow.pop %v4256
      %v4258 = vmul.f32 %v4051, 1.442695
      %v4259 = vpow.pop %v4258
      %v4260 = vmul.f32 %v4052, 1.442695
      %v4261 = vpow.pop %v4260
      %v4262 = vmul.f32 %v4053, 1.442695
      %v4263 = vpow.pop %v4262
      %v4264 = vmul.f32 %v4054, 1.442695
      %v4265 = vpow.pop %v4264
      %v4266 = vmul.f32 %v4055, 1.442695
      %v4267 = vpow.pop %v4266
      %v4268 = vmul.f32 %v4056, 1.442695
      %v4269 = vpow.pop %v4268
      %v4270 = vmul.f32 %v4057, 1.442695
      %v4271 = vpow.pop %v4270
      %v4272 = vmul.f32 %v4058, 1.442695
      %v4273 = vpow.pop %v4272
      %v4274 = vmul.f32 %v4059, 1.442695
      %v4275 = vpow.pop %v4274
      %v4276 = vmul.f32 %v4060, 1.442695
      %v4277 = vpow.pop %v4276
      %v4278 = vmul.f32 %v4061, 1.442695
      %v4279 = vpow.pop %v4278
      %v4280 = vmul.f32 %v4062, 1.442695
      %v4281 = vpow.pop %v4280
      %v4282 = vmul.f32 %v4063, 1.442695
      %v4283 = vpow.pop %v4282
      %v4284 = vmul.f32 %v4064, 1.442695
      %v4285 = vpow.pop %v4284
      %v4286 = vmul.f32 %v4065, 1.442695
      %v4287 = vpow.pop %v4286
      %v4288 = vmul.f32 %v4066, 1.442695
      %v4289 = vpow.pop %v4288
      %v4290 = vmul.f32 %v4067, 1.442695
      %v4291 = vpow.pop %v4290
      %v4292 = vmul.f32 %v4068, 1.442695
      %v4293 = vpow.pop %v4292
      %v4294 = vmul.f32 %v4069, 1.442695
      %v4295 = vpow.pop %v4294
      %v4296 = vmul.f32 %v4070, 1.442695
      %v4297 = vpow.pop %v4296
      %v4298 = vmul.f32 %v4071, 1.442695
      %v4299 = vpow.pop %v4298
      %v4300 = vmul.f32 %v4072, 1.442695
      %v4301 = vpow.pop %v4300
      %v4302 = vmul.f32 %v4073, 1.442695
      %v4303 = vpow.pop %v4302
      %v4304 = vmul.f32 %v4074, 1.442695
      %v4305 = vpow.pop %v4304
      %v4306 = vmul.f32 %v4075, 1.442695
      %v4307 = vpow.pop %v4306
      %v4308 = vmul.f32 %v4076, 1.442695
      %v4309 = vpow.pop %v4308
      %v4310 = vmul.f32 %v4077, 1.442695
      %v4311 = vpow.pop %v4310
      %v4312 = vmul.f32 %v4078, 1.442695
      %v4313 = vpow.pop %v4312
      %v4314 = vmul.f32 %v4079, 1.442695
      %v4315 = vpow.pop %v4314
      %v4316 = vmul.f32 %v4080, 1.442695
      %v4317 = vpow.pop %v4316
      %v4318 = vmul.f32 %v4081, 1.442695
      %v4319 = vpow.pop %v4318
      %v4320 = vmul.f32 %v4082, 1.442695
      %v4321 = vpow.pop %v4320
      %v4322 = vmul.f32 %v4083, 1.442695
      %v4323 = vpow.pop %v4322
      %v4324 = vmul.f32 %v4084, 1.442695
      %v4325 = vpow.pop %v4324
      %v4326 = vmul.f32 %v4085, 1.442695
      %v4327 = vpow.pop %v4326
      %v4328 = vmul.f32 %v4086, 1.442695
      %v4329 = vpow.pop %v4328
      %v4330 = vmul.f32 %v4087, 1.442695
      %v4331 = vpow.pop %v4330
      %v4332 = vmul.f32 %v4088, 1.442695
      %v4333 = vpow.pop %v4332
      %v4334 = vmul.f32 %v4089, 1.442695
      %v4335 = vpow.pop %v4334
      %v4336 = vmul.f32 %v4090, 1.442695
      %v4337 = vpow.pop %v4336
      %v4338 = vmul.f32 %v4091, 1.442695
      %v4339 = vpow.pop %v4338
      %v4340 = vmul.f32 %v4092, 1.442695
      %v4341 = vpow.pop %v4340
      %v4342 = vmul.f32 %v4093, 1.442695
      %v4343 = vpow.pop %v4342
      %v4344 = vmul.f32 %v4094, 1.442695
      %v4345 = vpow.pop %v4344
      %v4346 = vmul.f32 %v4095, 1.442695
      %v4347 = vpow.pop %v4346
      %v4348 = vmul.f32 %v4096, 1.442695
      %v4349 = vpow.pop %v4348
      %v4350 = vmul.f32 %v4097, 1.442695
      %v4351 = vpow.pop %v4350
      %v4352 = vmul.f32 %v4098, 1.442695
      %v4353 = vpow.pop %v4352
      %v4354 = vmul.f32 %v4099, 1.442695
      %v4355 = vpow.pop %v4354
      %v4356 = vadd.f32 %v4101, 1.0
      %v4357 = vadd.f32 %v4103, 1.0
      %v4358 = vadd.f32 %v4105, 1.0
      %v4359 = vadd.f32 %v4107, 1.0
      %v4360 = vadd.f32 %v4109, 1.0
      %v4361 = vadd.f32 %v4111, 1.0
      %v4362 = vadd.f32 %v4113, 1.0
      %v4363 = vadd.f32 %v4115, 1.0
      %v4364 = vadd.f32 %v4117, 1.0
      %v4365 = vadd.f32 %v4119, 1.0
      %v4366 = vadd.f32 %v4121, 1.0
      %v4367 = vadd.f32 %v4123, 1.0
      %v4368 = vadd.f32 %v4125, 1.0
      %v4369 = vadd.f32 %v4127, 1.0
      %v4370 = vadd.f32 %v4129, 1.0
      %v4371 = vadd.f32 %v4131, 1.0
      %v4372 = vadd.f32 %v4133, 1.0
      %v4373 = vadd.f32 %v4135, 1.0
      %v4374 = vadd.f32 %v4137, 1.0
      %v4375 = vadd.f32 %v4139, 1.0
      %v4376 = vadd.f32 %v4141, 1.0
      %v4377 = vadd.f32 %v4143, 1.0
      %v4378 = vadd.f32 %v4145, 1.0
      %v4379 = vadd.f32 %v4147, 1.0
      %v4380 = vadd.f32 %v4149, 1.0
      %v4381 = vadd.f32 %v4151, 1.0
      %v4382 = vadd.f32 %v4153, 1.0
      %v4383 = vadd.f32 %v4155, 1.0
      %v4384 = vadd.f32 %v4157, 1.0
      %v4385 = vadd.f32 %v4159, 1.0
      %v4386 = vadd.f32 %v4161, 1.0
      %v4387 = vadd.f32 %v4163, 1.0
      %v4388 = vadd.f32 %v4165, 1.0
      %v4389 = vadd.f32 %v4167, 1.0
      %v4390 = vadd.f32 %v4169, 1.0
      %v4391 = vadd.f32 %v4171, 1.0
      %v4392 = vadd.f32 %v4173, 1.0
      %v4393 = vadd.f32 %v4175, 1.0
      %v4394 = vadd.f32 %v4177, 1.0
      %v4395 = vadd.f32 %v4179, 1.0
      %v4396 = vadd.f32 %v4181, 1.0
      %v4397 = vadd.f32 %v4183, 1.0
      %v4398 = vadd.f32 %v4185, 1.0
      %v4399 = vadd.f32 %v4187, 1.0
      %v4400 = vadd.f32 %v4189, 1.0
      %v4401 = vadd.f32 %v4191, 1.0
      %v4402 = vadd.f32 %v4193, 1.0
      %v4403 = vadd.f32 %v4195, 1.0
      %v4404 = vadd.f32 %v4197, 1.0
      %v4405 = vadd.f32 %v4199, 1.0
      %v4406 = vadd.f32 %v4201, 1.0
      %v4407 = vadd.f32 %v4203, 1.0
      %v4408 = vadd.f32 %v4205, 1.0
      %v4409 = vadd.f32 %v4207, 1.0
      %v4410 = vadd.f32 %v4209, 1.0
      %v4411 = vadd.f32 %v4211, 1.0
      %v4412 = vadd.f32 %v4213, 1.0
      %v4413 = vadd.f32 %v4215, 1.0
      %v4414 = vadd.f32 %v4217, 1.0
      %v4415 = vadd.f32 %v4219, 1.0
      %v4416 = vadd.f32 %v4221, 1.0
      %v4417 = vadd.f32 %v4223, 1.0
      %v4418 = vadd.f32 %v4225, 1.0
      %v4419 = vadd.f32 %v4227, 1.0
      %v4420 = vadd.f32 %v4229, 1.0
      %v4421 = vadd.f32 %v4231, 1.0
      %v4422 = vadd.f32 %v4233, 1.0
      %v4423 = vadd.f32 %v4235, 1.0
      %v4424 = vadd.f32 %v4237, 1.0
      %v4425 = vadd.f32 %v4239, 1.0
      %v4426 = vadd.f32 %v4241, 1.0
      %v4427 = vadd.f32 %v4243, 1.0
      %v4428 = vadd.f32 %v4245, 1.0
      %v4429 = vadd.f32 %v4247, 1.0
      %v4430 = vadd.f32 %v4249, 1.0
      %v4431 = vadd.f32 %v4251, 1.0
      %v4432 = vadd.f32 %v4253, 1.0
      %v4433 = vadd.f32 %v4255, 1.0
      %v4434 = vadd.f32 %v4257, 1.0
      %v4435 = vadd.f32 %v4259, 1.0
      %v4436 = vadd.f32 %v4261, 1.0
      %v4437 = vadd.f32 %v4263, 1.0
      %v4438 = vadd.f32 %v4265, 1.0
      %v4439 = vadd.f32 %v4267, 1.0
      %v4440 = vadd.f32 %v4269, 1.0
      %v4441 = vadd.f32 %v4271, 1.0
      %v4442 = vadd.f32 %v4273, 1.0
      %v4443 = vadd.f32 %v4275, 1.0
      %v4444 = vadd.f32 %v4277, 1.0
      %v4445 = vadd.f32 %v4279, 1.0
      %v4446 = vadd.f32 %v4281, 1.0
      %v4447 = vadd.f32 %v4283, 1.0
      %v4448 = vadd.f32 %v4285, 1.0
      %v4449 = vadd.f32 %v4287, 1.0
      %v4450 = vadd.f32 %v4289, 1.0
      %v4451 = vadd.f32 %v4291, 1.0
      %v4452 = vadd.f32 %v4293, 1.0
      %v4453 = vadd.f32 %v4295, 1.0
      %v4454 = vadd.f32 %v4297, 1.0
      %v4455 = vadd.f32 %v4299, 1.0
      %v4456 = vadd.f32 %v4301, 1.0
      %v4457 = vadd.f32 %v4303, 1.0
      %v4458 = vadd.f32 %v4305, 1.0
      %v4459 = vadd.f32 %v4307, 1.0
      %v4460 = vadd.f32 %v4309, 1.0
      %v4461 = vadd.f32 %v4311, 1.0
      %v4462 = vadd.f32 %v4313, 1.0
      %v4463 = vadd.f32 %v4315, 1.0
      %v4464 = vadd.f32 %v4317, 1.0
      %v4465 = vadd.f32 %v4319, 1.0
      %v4466 = vadd.f32 %v4321, 1.0
      %v4467 = vadd.f32 %v4323, 1.0
      %v4468 = vadd.f32 %v4325, 1.0
      %v4469 = vadd.f32 %v4327, 1.0
      %v4470 = vadd.f32 %v4329, 1.0
      %v4471 = vadd.f32 %v4331, 1.0
      %v4472 = vadd.f32 %v4333, 1.0
      %v4473 = vadd.f32 %v4335, 1.0
      %v4474 = vadd.f32 %v4337, 1.0
      %v4475 = vadd.f32 %v4339, 1.0
      %v4476 = vadd.f32 %v4341, 1.0
      %v4477 = vadd.f32 %v4343, 1.0
      %v4478 = vadd.f32 %v4345, 1.0
      %v4479 = vadd.f32 %v4347, 1.0
      %v4480 = vadd.f32 %v4349, 1.0
      %v4481 = vadd.f32 %v4351, 1.0
      %v4482 = vadd.f32 %v4353, 1.0
      %v4483 = vadd.f32 %v4355, 1.0
      %v4484 = vrcp.pop %v4356
      %v4485 = vmul.f32 1.0, %v4484
      %v4486 = vrcp.pop %v4357
      %v4487 = vmul.f32 1.0, %v4486
      %v4488 = vrcp.pop %v4358
      %v4489 = vmul.f32 1.0, %v4488
      %v4490 = vrcp.pop %v4359
      %v4491 = vmul.f32 1.0, %v4490
      %v4492 = vrcp.pop %v4360
      %v4493 = vmul.f32 1.0, %v4492
      %v4494 = vrcp.pop %v4361
      %v4495 = vmul.f32 1.0, %v4494
      %v4496 = vrcp.pop %v4362
      %v4497 = vmul.f32 1.0, %v4496
      %v4498 = vrcp.pop %v4363
      %v4499 = vmul.f32 1.0, %v4498
      %v4500 = vrcp.pop %v4364
      %v4501 = vmul.f32 1.0, %v4500
      %v4502 = vrcp.pop %v4365
      %v4503 = vmul.f32 1.0, %v4502
      %v4504 = vrcp.pop %v4366
      %v4505 = vmul.f32 1.0, %v4504
      %v4506 = vrcp.pop %v4367
      %v4507 = vmul.f32 1.0, %v4506
      %v4508 = vrcp.pop %v4368
      %v4509 = vmul.f32 1.0, %v4508
      %v4510 = vrcp.pop %v4369
      %v4511 = vmul.f32 1.0, %v4510
      %v4512 = vrcp.pop %v4370
      %v4513 = vmul.f32 1.0, %v4512
      %v4514 = vrcp.pop %v4371
      %v4515 = vmul.f32 1.0, %v4514
      %v4516 = vrcp.pop %v4372
      %v4517 = vmul.f32 1.0, %v4516
      %v4518 = vrcp.pop %v4373
      %v4519 = vmul.f32 1.0, %v4518
      %v4520 = vrcp.pop %v4374
      %v4521 = vmul.f32 1.0, %v4520
      %v4522 = vrcp.pop %v4375
      %v4523 = vmul.f32 1.0, %v4522
      %v4524 = vrcp.pop %v4376
      %v4525 = vmul.f32 1.0, %v4524
      %v4526 = vrcp.pop %v4377
      %v4527 = vmul.f32 1.0, %v4526
      %v4528 = vrcp.pop %v4378
      %v4529 = vmul.f32 1.0, %v4528
      %v4530 = vrcp.pop %v4379
      %v4531 = vmul.f32 1.0, %v4530
      %v4532 = vrcp.pop %v4380
      %v4533 = vmul.f32 1.0, %v4532
      %v4534 = vrcp.pop %v4381
      %v4535 = vmul.f32 1.0, %v4534
      %v4536 = vrcp.pop %v4382
      %v4537 = vmul.f32 1.0, %v4536
      %v4538 = vrcp.pop %v4383
      %v4539 = vmul.f32 1.0, %v4538
      %v4540 = vrcp.pop %v4384
      %v4541 = vmul.f32 1.0, %v4540
      %v4542 = vrcp.pop %v4385
      %v4543 = vmul.f32 1.0, %v4542
      %v4544 = vrcp.pop %v4386
      %v4545 = vmul.f32 1.0, %v4544
      %v4546 = vrcp.pop %v4387
      %v4547 = vmul.f32 1.0, %v4546
      %v4548 = vrcp.pop %v4388
      %v4549 = vmul.f32 1.0, %v4548
      %v4550 = vrcp.pop %v4389
      %v4551 = vmul.f32 1.0, %v4550
      %v4552 = vrcp.pop %v4390
      %v4553 = vmul.f32 1.0, %v4552
      %v4554 = vrcp.pop %v4391
      %v4555 = vmul.f32 1.0, %v4554
      %v4556 = vrcp.pop %v4392
      %v4557 = vmul.f32 1.0, %v4556
      %v4558 = vrcp.pop %v4393
      %v4559 = vmul.f32 1.0, %v4558
      %v4560 = vrcp.pop %v4394
      %v4561 = vmul.f32 1.0, %v4560
      %v4562 = vrcp.pop %v4395
      %v4563 = vmul.f32 1.0, %v4562
      %v4564 = vrcp.pop %v4396
      %v4565 = vmul.f32 1.0, %v4564
      %v4566 = vrcp.pop %v4397
      %v4567 = vmul.f32 1.0, %v4566
      %v4568 = vrcp.pop %v4398
      %v4569 = vmul.f32 1.0, %v4568
      %v4570 = vrcp.pop %v4399
      %v4571 = vmul.f32 1.0, %v4570
      %v4572 = vrcp.pop %v4400
      %v4573 = vmul.f32 1.0, %v4572
      %v4574 = vrcp.pop %v4401
      %v4575 = vmul.f32 1.0, %v4574
      %v4576 = vrcp.pop %v4402
      %v4577 = vmul.f32 1.0, %v4576
      %v4578 = vrcp.pop %v4403
      %v4579 = vmul.f32 1.0, %v4578
      %v4580 = vrcp.pop %v4404
      %v4581 = vmul.f32 1.0, %v4580
      %v4582 = vrcp.pop %v4405
      %v4583 = vmul.f32 1.0, %v4582
      %v4584 = vrcp.pop %v4406
      %v4585 = vmul.f32 1.0, %v4584
      %v4586 = vrcp.pop %v4407
      %v4587 = vmul.f32 1.0, %v4586
      %v4588 = vrcp.pop %v4408
      %v4589 = vmul.f32 1.0, %v4588
      %v4590 = vrcp.pop %v4409
      %v4591 = vmul.f32 1.0, %v4590
      %v4592 = vrcp.pop %v4410
      %v4593 = vmul.f32 1.0, %v4592
      %v4594 = vrcp.pop %v4411
      %v4595 = vmul.f32 1.0, %v4594
      %v4596 = vrcp.pop %v4412
      %v4597 = vmul.f32 1.0, %v4596
      %v4598 = vrcp.pop %v4413
      %v4599 = vmul.f32 1.0, %v4598
      %v4600 = vrcp.pop %v4414
      %v4601 = vmul.f32 1.0, %v4600
      %v4602 = vrcp.pop %v4415
      %v4603 = vmul.f32 1.0, %v4602
      %v4604 = vrcp.pop %v4416
      %v4605 = vmul.f32 1.0, %v4604
      %v4606 = vrcp.pop %v4417
      %v4607 = vmul.f32 1.0, %v4606
      %v4608 = vrcp.pop %v4418
      %v4609 = vmul.f32 1.0, %v4608
      %v4610 = vrcp.pop %v4419
      %v4611 = vmul.f32 1.0, %v4610
      %v4612 = vrcp.pop %v4420
      %v4613 = vmul.f32 1.0, %v4612
      %v4614 = vrcp.pop %v4421
      %v4615 = vmul.f32 1.0, %v4614
      %v4616 = vrcp.pop %v4422
      %v4617 = vmul.f32 1.0, %v4616
      %v4618 = vrcp.pop %v4423
      %v4619 = vmul.f32 1.0, %v4618
      %v4620 = vrcp.pop %v4424
      %v4621 = vmul.f32 1.0, %v4620
      %v4622 = vrcp.pop %v4425
      %v4623 = vmul.f32 1.0, %v4622
      %v4624 = vrcp.pop %v4426
      %v4625 = vmul.f32 1.0, %v4624
      %v4626 = vrcp.pop %v4427
      %v4627 = vmul.f32 1.0, %v4626
      %v4628 = vrcp.pop %v4428
      %v4629 = vmul.f32 1.0, %v4628
      %v4630 = vrcp.pop %v4429
      %v4631 = vmul.f32 1.0, %v4630
      %v4632 = vrcp.pop %v4430
      %v4633 = vmul.f32 1.0, %v4632
      %v4634 = vrcp.pop %v4431
      %v4635 = vmul.f32 1.0, %v4634
      %v4636 = vrcp.pop %v4432
      %v4637 = vmul.f32 1.0, %v4636
      %v4638 = vrcp.pop %v4433
      %v4639 = vmul.f32 1.0, %v4638
      %v4640 = vrcp.pop %v4434
      %v4641 = vmul.f32 1.0, %v4640
      %v4642 = vrcp.pop %v4435
      %v4643 = vmul.f32 1.0, %v4642
      %v4644 = vrcp.pop %v4436
      %v4645 = vmul.f32 1.0, %v4644
      %v4646 = vrcp.pop %v4437
      %v4647 = vmul.f32 1.0, %v4646
      %v4648 = vrcp.pop %v4438
      %v4649 = vmul.f32 1.0, %v4648
      %v4650 = vrcp.pop %v4439
      %v4651 = vmul.f32 1.0, %v4650
      %v4652 = vrcp.pop %v4440
      %v4653 = vmul.f32 1.0, %v4652
      %v4654 = vrcp.pop %v4441
      %v4655 = vmul.f32 1.0, %v4654
      %v4656 = vrcp.pop %v4442
      %v4657 = vmul.f32 1.0, %v4656
      %v4658 = vrcp.pop %v4443
      %v4659 = vmul.f32 1.0, %v4658
      %v4660 = vrcp.pop %v4444
      %v4661 = vmul.f32 1.0, %v4660
      %v4662 = vrcp.pop %v4445
      %v4663 = vmul.f32 1.0, %v4662
      %v4664 = vrcp.pop %v4446
      %v4665 = vmul.f32 1.0, %v4664
      %v4666 = vrcp.pop %v4447
      %v4667 = vmul.f32 1.0, %v4666
      %v4668 = vrcp.pop %v4448
      %v4669 = vmul.f32 1.0, %v4668
      %v4670 = vrcp.pop %v4449
      %v4671 = vmul.f32 1.0, %v4670
      %v4672 = vrcp.pop %v4450
      %v4673 = vmul.f32 1.0, %v4672
      %v4674 = vrcp.pop %v4451
      %v4675 = vmul.f32 1.0, %v4674
      %v4676 = vrcp.pop %v4452
      %v4677 = vmul.f32 1.0, %v4676
      %v4678 = vrcp.pop %v4453
      %v4679 = vmul.f32 1.0, %v4678
      %v4680 = vrcp.pop %v4454
      %v4681 = vmul.f32 1.0, %v4680
      %v4682 = vrcp.pop %v4455
      %v4683 = vmul.f32 1.0, %v4682
      %v4684 = vrcp.pop %v4456
      %v4685 = vmul.f32 1.0, %v4684
      %v4686 = vrcp.pop %v4457
      %v4687 = vmul.f32 1.0, %v4686
      %v4688 = vrcp.pop %v4458
      %v4689 = vmul.f32 1.0, %v4688
      %v4690 = vrcp.pop %v4459
      %v4691 = vmul.f32 1.0, %v4690
      %v4692 = vrcp.pop %v4460
      %v4693 = vmul.f32 1.0, %v4692
      %v4694 = vrcp.pop %v4461
      %v4695 = vmul.f32 1.0, %v4694
      %v4696 = vrcp.pop %v4462
      %v4697 = vmul.f32 1.0, %v4696
      %v4698 = vrcp.pop %v4463
      %v4699 = vmul.f32 1.0, %v4698
      %v4700 = vrcp.pop %v4464
      %v4701 = vmul.f32 1.0, %v4700
      %v4702 = vrcp.pop %v4465
      %v4703 = vmul.f32 1.0, %v4702
      %v4704 = vrcp.pop %v4466
      %v4705 = vmul.f32 1.0, %v4704
      %v4706 = vrcp.pop %v4467
      %v4707 = vmul.f32 1.0, %v4706
      %v4708 = vrcp.pop %v4468
      %v4709 = vmul.f32 1.0, %v4708
      %v4710 = vrcp.pop %v4469
      %v4711 = vmul.f32 1.0, %v4710
      %v4712 = vrcp.pop %v4470
      %v4713 = vmul.f32 1.0, %v4712
      %v4714 = vrcp.pop %v4471
      %v4715 = vmul.f32 1.0, %v4714
      %v4716 = vrcp.pop %v4472
      %v4717 = vmul.f32 1.0, %v4716
      %v4718 = vrcp.pop %v4473
      %v4719 = vmul.f32 1.0, %v4718
      %v4720 = vrcp.pop %v4474
      %v4721 = vmul.f32 1.0, %v4720
      %v4722 = vrcp.pop %v4475
      %v4723 = vmul.f32 1.0, %v4722
      %v4724 = vrcp.pop %v4476
      %v4725 = vmul.f32 1.0, %v4724
      %v4726 = vrcp.pop %v4477
      %v4727 = vmul.f32 1.0, %v4726
      %v4728 = vrcp.pop %v4478
      %v4729 = vmul.f32 1.0, %v4728
      %v4730 = vrcp.pop %v4479
      %v4731 = vmul.f32 1.0, %v4730
      %v4732 = vrcp.pop %v4480
      %v4733 = vmul.f32 1.0, %v4732
      %v4734 = vrcp.pop %v4481
      %v4735 = vmul.f32 1.0, %v4734
      %v4736 = vrcp.pop %v4482
      %v4737 = vmul.f32 1.0, %v4736
      %v4738 = vrcp.pop %v4483
      %v4739 = vmul.f32 1.0, %v4738
      %vm4740 = vcmask 23552
      %4741 = vst.msk [vmem:[%s280] sm:$0xff] %vm4740, %v4485
      %4742 = vst.msk [vmem:[%s280 + $0x8] sm:$0xff] %vm4740, %v4487
      %4743 = vst.msk [vmem:[%s280 + $0x10] sm:$0xff] %vm4740, %v4489
      %4744 = vst.msk [vmem:[%s280 + $0x18] sm:$0xff] %vm4740, %v4491
      %4745 = vst.msk [vmem:[%s280 + $0x20] sm:$0xff] %vm4740, %v4493
      %4746 = vst.msk [vmem:[%s280 + $0x28] sm:$0xff] %vm4740, %v4495
      %4747 = vst.msk [vmem:[%s280 + $0x30] sm:$0xff] %vm4740, %v4497
      %4748 = vst.msk [vmem:[%s280 + $0x38] sm:$0xff] %vm4740, %v4499
      %4749 = vst.msk [vmem:[%s280 + $0x40] sm:$0xff] %vm4740, %v4501
      %4750 = vst.msk [vmem:[%s280 + $0x48] sm:$0xff] %vm4740, %v4503
      %4751 = vst.msk [vmem:[%s280 + $0x50] sm:$0xff] %vm4740, %v4505
      %4752 = vst.msk [vmem:[%s280 + $0x58] sm:$0xff] %vm4740, %v4507
      %4753 = vst.msk [vmem:[%s280 + $0x60] sm:$0xff] %vm4740, %v4509
      %4754 = vst.msk [vmem:[%s280 + $0x68] sm:$0xff] %vm4740, %v4511
      %4755 = vst.msk [vmem:[%s280 + $0x70] sm:$0xff] %vm4740, %v4513
      %4756 = vst.msk [vmem:[%s280 + $0x78] sm:$0xff] %vm4740, %v4515
      %4757 = vst.msk [vmem:[%s280 + $0x80] sm:$0xff] %vm4740, %v4517
      %4758 = vst.msk [vmem:[%s280 + $0x88] sm:$0xff] %vm4740, %v4519
      %4759 = vst.msk [vmem:[%s280 + $0x90] sm:$0xff] %vm4740, %v4521
      %4760 = vst.msk [vmem:[%s280 + $0x98] sm:$0xff] %vm4740, %v4523
      %4761 = vst.msk [vmem:[%s280 + $0xa0] sm:$0xff] %vm4740, %v4525
      %4762 = vst.msk [vmem:[%s280 + $0xa8] sm:$0xff] %vm4740, %v4527
      %4763 = vst.msk [vmem:[%s280 + $0xb0] sm:$0xff] %vm4740, %v4529
      %4764 = vst.msk [vmem:[%s280 + $0xb8] sm:$0xff] %vm4740, %v4531
      %4765 = vst.msk [vmem:[%s280 + $0xc0] sm:$0xff] %vm4740, %v4533
      %4766 = vst.msk [vmem:[%s280 + $0xc8] sm:$0xff] %vm4740, %v4535
      %4767 = vst.msk [vmem:[%s280 + $0xd0] sm:$0xff] %vm4740, %v4537
      %4768 = vst.msk [vmem:[%s280 + $0xd8] sm:$0xff] %vm4740, %v4539
      %4769 = vst.msk [vmem:[%s280 + $0xe0] sm:$0xff] %vm4740, %v4541
      %4770 = vst.msk [vmem:[%s280 + $0xe8] sm:$0xff] %vm4740, %v4543
      %4771 = vst.msk [vmem:[%s280 + $0xf0] sm:$0xff] %vm4740, %v4545
      %4772 = vst.msk [vmem:[%s280 + $0xf8] sm:$0xff] %vm4740, %v4547
      %4773 = vst.msk [vmem:[%s280 + $0x100] sm:$0xff] %vm4740, %v4549
      %4774 = vst.msk [vmem:[%s280 + $0x108] sm:$0xff] %vm4740, %v4551
      %4775 = vst.msk [vmem:[%s280 + $0x110] sm:$0xff] %vm4740, %v4553
      %4776 = vst.msk [vmem:[%s280 + $0x118] sm:$0xff] %vm4740, %v4555
      %4777 = vst.msk [vmem:[%s280 + $0x120] sm:$0xff] %vm4740, %v4557
      %4778 = vst.msk [vmem:[%s280 + $0x128] sm:$0xff] %vm4740, %v4559
      %4779 = vst.msk [vmem:[%s280 + $0x130] sm:$0xff] %vm4740, %v4561
      %4780 = vst.msk [vmem:[%s280 + $0x138] sm:$0xff] %vm4740, %v4563
      %4781 = vst.msk [vmem:[%s280 + $0x140] sm:$0xff] %vm4740, %v4565
      %4782 = vst.msk [vmem:[%s280 + $0x148] sm:$0xff] %vm4740, %v4567
      %4783 = vst.msk [vmem:[%s280 + $0x150] sm:$0xff] %vm4740, %v4569
      %4784 = vst.msk [vmem:[%s280 + $0x158] sm:$0xff] %vm4740, %v4571
      %4785 = vst.msk [vmem:[%s280 + $0x160] sm:$0xff] %vm4740, %v4573
      %4786 = vst.msk [vmem:[%s280 + $0x168] sm:$0xff] %vm4740, %v4575
      %4787 = vst.msk [vmem:[%s280 + $0x170] sm:$0xff] %vm4740, %v4577
      %4788 = vst.msk [vmem:[%s280 + $0x178] sm:$0xff] %vm4740, %v4579
      %4789 = vst.msk [vmem:[%s280 + $0x180] sm:$0xff] %vm4740, %v4581
      %4790 = vst.msk [vmem:[%s280 + $0x188] sm:$0xff] %vm4740, %v4583
      %4791 = vst.msk [vmem:[%s280 + $0x190] sm:$0xff] %vm4740, %v4585
      %4792 = vst.msk [vmem:[%s280 + $0x198] sm:$0xff] %vm4740, %v4587
      %4793 = vst.msk [vmem:[%s280 + $0x1a0] sm:$0xff] %vm4740, %v4589
      %4794 = vst.msk [vmem:[%s280 + $0x1a8] sm:$0xff] %vm4740, %v4591
      %4795 = vst.msk [vmem:[%s280 + $0x1b0] sm:$0xff] %vm4740, %v4593
      %4796 = vst.msk [vmem:[%s280 + $0x1b8] sm:$0xff] %vm4740, %v4595
      %4797 = vst.msk [vmem:[%s280 + $0x1c0] sm:$0xff] %vm4740, %v4597
      %4798 = vst.msk [vmem:[%s280 + $0x1c8] sm:$0xff] %vm4740, %v4599
      %4799 = vst.msk [vmem:[%s280 + $0x1d0] sm:$0xff] %vm4740, %v4601
      %4800 = vst.msk [vmem:[%s280 + $0x1d8] sm:$0xff] %vm4740, %v4603
      %4801 = vst.msk [vmem:[%s280 + $0x1e0] sm:$0xff] %vm4740, %v4605
      %4802 = vst.msk [vmem:[%s280 + $0x1e8] sm:$0xff] %vm4740, %v4607
      %4803 = vst.msk [vmem:[%s280 + $0x1f0] sm:$0xff] %vm4740, %v4609
      %4804 = vst.msk [vmem:[%s280 + $0x1f8] sm:$0xff] %vm4740, %v4611
      %4805 = vst.msk [vmem:[%s280 + $0x200] sm:$0xff] %vm4740, %v4613
      %4806 = vst.msk [vmem:[%s280 + $0x208] sm:$0xff] %vm4740, %v4615
      %4807 = vst.msk [vmem:[%s280 + $0x210] sm:$0xff] %vm4740, %v4617
      %4808 = vst.msk [vmem:[%s280 + $0x218] sm:$0xff] %vm4740, %v4619
      %4809 = vst.msk [vmem:[%s280 + $0x220] sm:$0xff] %vm4740, %v4621
      %4810 = vst.msk [vmem:[%s280 + $0x228] sm:$0xff] %vm4740, %v4623
      %4811 = vst.msk [vmem:[%s280 + $0x230] sm:$0xff] %vm4740, %v4625
      %4812 = vst.msk [vmem:[%s280 + $0x238] sm:$0xff] %vm4740, %v4627
      %4813 = vst.msk [vmem:[%s280 + $0x240] sm:$0xff] %vm4740, %v4629
      %4814 = vst.msk [vmem:[%s280 + $0x248] sm:$0xff] %vm4740, %v4631
      %4815 = vst.msk [vmem:[%s280 + $0x250] sm:$0xff] %vm4740, %v4633
      %4816 = vst.msk [vmem:[%s280 + $0x258] sm:$0xff] %vm4740, %v4635
      %4817 = vst.msk [vmem:[%s280 + $0x260] sm:$0xff] %vm4740, %v4637
      %4818 = vst.msk [vmem:[%s280 + $0x268] sm:$0xff] %vm4740, %v4639
      %4819 = vst.msk [vmem:[%s280 + $0x270] sm:$0xff] %vm4740, %v4641
      %4820 = vst.msk [vmem:[%s280 + $0x278] sm:$0xff] %vm4740, %v4643
      %4821 = vst.msk [vmem:[%s280 + $0x280] sm:$0xff] %vm4740, %v4645
      %4822 = vst.msk [vmem:[%s280 + $0x288] sm:$0xff] %vm4740, %v4647
      %4823 = vst.msk [vmem:[%s280 + $0x290] sm:$0xff] %vm4740, %v4649
      %4824 = vst.msk [vmem:[%s280 + $0x298] sm:$0xff] %vm4740, %v4651
      %4825 = vst.msk [vmem:[%s280 + $0x2a0] sm:$0xff] %vm4740, %v4653
      %4826 = vst.msk [vmem:[%s280 + $0x2a8] sm:$0xff] %vm4740, %v4655
      %4827 = vst.msk [vmem:[%s280 + $0x2b0] sm:$0xff] %vm4740, %v4657
      %4828 = vst.msk [vmem:[%s280 + $0x2b8] sm:$0xff] %vm4740, %v4659
      %4829 = vst.msk [vmem:[%s280 + $0x2c0] sm:$0xff] %vm4740, %v4661
      %4830 = vst.msk [vmem:[%s280 + $0x2c8] sm:$0xff] %vm4740, %v4663
      %4831 = vst.msk [vmem:[%s280 + $0x2d0] sm:$0xff] %vm4740, %v4665
      %4832 = vst.msk [vmem:[%s280 + $0x2d8] sm:$0xff] %vm4740, %v4667
      %4833 = vst.msk [vmem:[%s280 + $0x2e0] sm:$0xff] %vm4740, %v4669
      %4834 = vst.msk [vmem:[%s280 + $0x2e8] sm:$0xff] %vm4740, %v4671
      %4835 = vst.msk [vmem:[%s280 + $0x2f0] sm:$0xff] %vm4740, %v4673
      %4836 = vst.msk [vmem:[%s280 + $0x2f8] sm:$0xff] %vm4740, %v4675
      %4837 = vst.msk [vmem:[%s280 + $0x300] sm:$0xff] %vm4740, %v4677
      %4838 = vst.msk [vmem:[%s280 + $0x308] sm:$0xff] %vm4740, %v4679
      %4839 = vst.msk [vmem:[%s280 + $0x310] sm:$0xff] %vm4740, %v4681
      %4840 = vst.msk [vmem:[%s280 + $0x318] sm:$0xff] %vm4740, %v4683
      %4841 = vst.msk [vmem:[%s280 + $0x320] sm:$0xff] %vm4740, %v4685
      %4842 = vst.msk [vmem:[%s280 + $0x328] sm:$0xff] %vm4740, %v4687
      %4843 = vst.msk [vmem:[%s280 + $0x330] sm:$0xff] %vm4740, %v4689
      %4844 = vst.msk [vmem:[%s280 + $0x338] sm:$0xff] %vm4740, %v4691
      %4845 = vst.msk [vmem:[%s280 + $0x340] sm:$0xff] %vm4740, %v4693
      %4846 = vst.msk [vmem:[%s280 + $0x348] sm:$0xff] %vm4740, %v4695
      %4847 = vst.msk [vmem:[%s280 + $0x350] sm:$0xff] %vm4740, %v4697
      %4848 = vst.msk [vmem:[%s280 + $0x358] sm:$0xff] %vm4740, %v4699
      %4849 = vst.msk [vmem:[%s280 + $0x360] sm:$0xff] %vm4740, %v4701
      %4850 = vst.msk [vmem:[%s280 + $0x368] sm:$0xff] %vm4740, %v4703
      %4851 = vst.msk [vmem:[%s280 + $0x370] sm:$0xff] %vm4740, %v4705
      %4852 = vst.msk [vmem:[%s280 + $0x378] sm:$0xff] %vm4740, %v4707
      %4853 = vst.msk [vmem:[%s280 + $0x380] sm:$0xff] %vm4740, %v4709
      %4854 = vst.msk [vmem:[%s280 + $0x388] sm:$0xff] %vm4740, %v4711
      %4855 = vst.msk [vmem:[%s280 + $0x390] sm:$0xff] %vm4740, %v4713
      %4856 = vst.msk [vmem:[%s280 + $0x398] sm:$0xff] %vm4740, %v4715
      %4857 = vst.msk [vmem:[%s280 + $0x3a0] sm:$0xff] %vm4740, %v4717
      %4858 = vst.msk [vmem:[%s280 + $0x3a8] sm:$0xff] %vm4740, %v4719
      %4859 = vst.msk [vmem:[%s280 + $0x3b0] sm:$0xff] %vm4740, %v4721
      %4860 = vst.msk [vmem:[%s280 + $0x3b8] sm:$0xff] %vm4740, %v4723
      %4861 = vst.msk [vmem:[%s280 + $0x3c0] sm:$0xff] %vm4740, %v4725
      %4862 = vst.msk [vmem:[%s280 + $0x3c8] sm:$0xff] %vm4740, %v4727
      %4863 = vst.msk [vmem:[%s280 + $0x3d0] sm:$0xff] %vm4740, %v4729
      %4864 = vst.msk [vmem:[%s280 + $0x3d8] sm:$0xff] %vm4740, %v4731
      %4865 = vst.msk [vmem:[%s280 + $0x3e0] sm:$0xff] %vm4740, %v4733
      %4866 = vst.msk [vmem:[%s280 + $0x3e8] sm:$0xff] %vm4740, %v4735
      %4867 = vst.msk [vmem:[%s280 + $0x3f0] sm:$0xff] %vm4740, %v4737
      %4868 = vst.msk [vmem:[%s280 + $0x3f8] sm:$0xff] %vm4740, %v4739
      %s4869 = smul.u32 128, %s18
      %p4870 = scmp.lt.s32.totalorder %s4869, 511
      %s4871 = scalar_select %p4870, %s4869, 511
      %s4872 = smul.addr %s4871, 8
      %s4873 = scalar_lea.vmem %s7, %s4872
      // Predicated region
      $region49: #{net_forward.1} parent=47 // pred_check
        %p4874 = pneg %p188
      $region50: #{net_forward.1} parent=47 // pred_check_branch
        %4876 = sbr.rel (%p4874) target = $region52
      $region51: #{net_forward.1} parent=47 // pred_region
        %s4877 = smul.u32 128, %s18
      $region52: #{net_forward.1} parent=47 // pred_fallthru
        _
    $region48: #{net_forward.1} parent=5 // pred_fallthru
      _
    %p4878 = scmp.le.s32.totalorder 2, %s13
    // Predicated region
    $region53: #{net_forward.1} parent=5 // pred_check
      %p4879 = pneg %p4878
    $region54: #{net_forward.1} parent=5 // pred_check_branch
      %4881 = sbr.rel (%p4879) target = $region56
    $region55: #{net_forward.1} parent=5 // pred_region
      %s4882 = ssub.s32 %s13, 2
      // Predicated region
      $region57: #{net_forward.1} parent=55 // pred_check
        %p4883 = pneg %p194
      $region58: #{net_forward.1} parent=55 // pred_check_branch
        %4885 = sbr.rel (%p4883) target = $region60
      $region59: #{net_forward.1} parent=55 // pred_region
        %s4886 = smul.u32 128, %s19
        %p4887 = scmp.lt.s32.totalorder %s4886, 511
        %s4888 = scalar_select %p4887, %s4886, 511
        %s4889 = smul.addr %s4888, 8
        %s4890 = scalar_lea.vmem %s7, %s4889
      $region60: #{net_forward.1} parent=55 // pred_fallthru
        _
    $region56: #{net_forward.1} parent=5 // pred_fallthru
      _
  $region6: #{net_forward.1} parent=0 // loop_footer
    %s17 = sadd.s32 1, %s13
  $region7: #{net_forward.1} parent=0 // loop_footer_branch
    %12 = sbr.rel target = $region3
  $region8: #{net_forward.1} parent=0 // loop_exit
    _

</llo_original>
